<compile_context>
chip_gen: v7x
topology: tpu7x:2x2x1
jax: 0.10.0
libtpu: 0.0.40
codegen_flags: <defaults>
</compile_context>

<pallas_src>
import functools

import jax
import jax.numpy as jnp
from jax.experimental import pallas as pl
from jax.experimental.pallas import tpu as pltpu


# ----------------------------- fixed geometry ------------------------------ #
H, W = 6, 7                      # Connect-4 board (implied by fc1 = 32*6*7)
KSZ = 5                          # conv kernel size
HP, WP = H + 4, W + 4            # board + 2-wide zero-padding ring (10 x 11)
S_CORE = HP * WP                 # 110 padded spatial positions
C1 = 32                          # conv1 / conv2 output channels
TAP_PAD = 32                     # conv1 im2col taps lane-padded 25 -> 32
N_FC = 42
N_OUT = 7
NPAD = 128                       # lane-dense padding for fc weights / output

# conv2 is evaluated only on the minimal contiguous padded-position range that
# covers the 6x7 interior: s in [S_LO, S_LO + CONV2_POS).
S_LO = 2 * WP + 2                # 24 = first interior padded position
CONV2_POS = (H - 1) * WP + W     # 62 contiguous positions
# width-im2col slab covers padded positions sw in [2, 2 + WSLAB_POS)
WSLAB_POS = S_CORE - 4           # 106

_HIGH = jax.lax.Precision.HIGHEST


# ------------------------------ fused kernel ------------------------------- #

def _dqn_kernel(xp_ref, w1_ref, b1_ref, w2_ref, b2_ref,
                wf1_ref, bf1_ref, wf2_ref, bf2_ref, wo_ref, bo_ref,
                out_ref, wslab_ref, slab_ref, *, batch):
    """Fused DQN forward.  Activation rows are ordered (spatial, batch)."""
    B = batch
    f32 = jnp.float32

    # ---- conv1 + ReLU: one MXU matmul over the pre-built im2col patches ---- #
    y1 = jnp.dot(xp_ref[...], w1_ref[...], preferred_element_type=f32)
    y1 = jnp.maximum(y1 + b1_ref[...], 0.0)                  # [H*W*B, C1] regs

    # ---- scatter conv1 output into conv2's width-im2col slab -------------- #
    # wslab[(sw-2)*B + b, kw*C1 + c] = a1[sw + kw - 2, b, c], where a1 is the
    # zero-padded 10x11 conv1 output.  Only a1's 6x7 interior is nonzero, so
    # zero the slab once and write 6 row-blocks per kw tap (30 small stores).
    wslab_ref[...] = jnp.zeros_like(wslab_ref)
    for kw in range(KSZ):
        for hh in range(H):
            r0 = ((hh + 2) * WP + 2 - kw) * B
            wslab_ref[pl.ds(r0, W * B), kw * C1:(kw + 1) * C1] = (
                y1[hh * W * B:(hh + 1) * W * B, :])

    # ---- conv2 + ReLU: kw folded into K -> 5 matmuls with K = 5*C1 = 160 -- #
    rows2 = CONV2_POS * B
    acc = jnp.zeros((rows2, C1), f32)
    for kh in range(KSZ):
        acc = acc + jnp.dot(wslab_ref[pl.ds(kh * WP * B, rows2), :],
                            w2_ref[kh].astype(f32),
                            preferred_element_type=f32)
    y2 = jnp.maximum(acc + b2_ref[...], 0.0)                 # rows = (s-S_LO, b)

    # ---- fc1 lhs: gather the 42 interior positions into a [B, 1344] slab -- #
    for hh in range(H):
        for ww in range(W):
            p = hh * W + ww
            r = (hh * WP + ww) * B        # = (interior s - S_LO) * B
            slab_ref[:, p * C1:(p + 1) * C1] = y2[r:r + B, :]

    # ---- fc1 -> fc2 -> out (lane-padded to 128; pad lanes stay exactly 0) - #
    h1 = jnp.dot(slab_ref[...], wf1_ref[...].astype(f32),
                 preferred_element_type=f32)
    h1 = jnp.maximum(h1 + bf1_ref[...], 0.0)
    h2 = jnp.dot(h1, wf2_ref[...].astype(f32), preferred_element_type=f32)
    h2 = jnp.maximum(h2 + bf2_ref[...], 0.0)
    out_ref[...] = (jnp.dot(h2, wo_ref[...].astype(f32),
                            preferred_element_type=f32) + bo_ref[...])


# --------------------------- parameter repacking ---------------------------- #

def pack_params(params):
    """One-time repack of PyTorch-layout parameters into MXU-friendly layouts.

    Runs outside the jitted forward; large weights are stored in bfloat16
    (f32 accumulation happens in-kernel).
    """
    f32, bf16 = jnp.float32, jnp.bfloat16

    # conv1 (OIHW, cin=1) -> [tap, cout], taps lane-padded 25 -> 32.
    w1 = params["conv1_w"].reshape(C1, KSZ * KSZ).T
    w1 = jnp.pad(w1, ((0, TAP_PAD - KSZ * KSZ), (0, 0))).astype(f32)

    # conv2 (OIHW) -> per-kh slabs [kw*C1 + cin, cout] (kw folded into K).
    w2 = jnp.transpose(params["conv2_w"], (2, 3, 1, 0))       # [kh, kw, cin, cout]
    w2 = w2.reshape(KSZ, KSZ * C1, C1).astype(bf16)

    # fc1: fold PyTorch's NCHW flatten (feature idx = c*42 + p) into the
    # in-kernel slab order (p*C1 + c); output lane-padded to 128.
    wf1 = params["fc1_w"].reshape(N_FC, C1, H * W)            # [n, c, p]
    wf1 = jnp.transpose(wf1, (2, 1, 0)).reshape(H * W * C1, N_FC)
    wf1 = jnp.pad(wf1, ((0, 0), (0, NPAD - N_FC))).astype(bf16)

    wf2 = jnp.pad(params["fc2_w"].T,
                  ((0, NPAD - N_FC), (0, NPAD - N_FC))).astype(bf16)
    wo = jnp.pad(params["out_w"].T,
                 ((0, NPAD - N_FC), (0, NPAD - N_OUT))).astype(bf16)

    def pad_bias(b, n):
        return jnp.pad(b, (0, n - b.shape[0])).reshape(1, n).astype(f32)

    return {
        "w1": w1, "b1": params["conv1_b"].reshape(1, C1).astype(f32),
        "w2": w2, "b2": params["conv2_b"].reshape(1, C1).astype(f32),
        "wf1": wf1, "bf1": pad_bias(params["fc1_b"], NPAD),
        "wf2": wf2, "bf2": pad_bias(params["fc2_b"], NPAD),
        "wo": wo, "bo": pad_bias(params["out_b"], NPAD),
    }


# -------------------------------- forward ----------------------------------- #

@jax.jit
def dqn_forward_pallas(x_nchw, packed):
    """x_nchw: [B, 1, 6, 7] float32 -> [B, 7] Q-values."""
    B = x_nchw.shape[0]

    # Tiny conv1 im2col built by XLA: rows ordered ((h*W + w), batch),
    # columns = the 25 conv taps, lane-padded to 32.
    xpad = jnp.pad(x_nchw[:, 0, :, :], ((0, 0), (2, 2), (2, 2)))   # [B, 10, 11]
    taps = [xpad[:, kh:kh + H, kw:kw + W]
            for kh in range(KSZ) for kw in range(KSZ)]
    xp = jnp.stack(taps, axis=-1)                                   # [B, H, W, 25]
    xp = jnp.transpose(xp, (1, 2, 0, 3)).reshape(H * W * B, KSZ * KSZ)
    xp = jnp.pad(xp, ((0, 0), (0, TAP_PAD - KSZ * KSZ)))

    vmem = pl.BlockSpec(memory_space=pltpu.MemorySpace.VMEM)
    out_pad = pl.pallas_call(
        functools.partial(_dqn_kernel, batch=B),
        out_shape=jax.ShapeDtypeStruct((B, NPAD), jnp.float32),
        in_specs=[vmem] * 11,
        out_specs=vmem,
        scratch_shapes=[
            pltpu.VMEM((WSLAB_POS * B, KSZ * C1), jnp.float32),  # width-im2col slab
            pltpu.VMEM((B, H * W * C1), jnp.float32),            # fc1 lhs slab
        ],
    )(xp,
      packed["w1"], packed["b1"], packed["w2"], packed["b2"],
      packed["wf1"], packed["bf1"], packed["wf2"], packed["bf2"],
      packed["wo"], packed["bo"])
    return out_pad[:, :N_OUT]


# ------------------------- init + pure-JAX reference ------------------------ #

def init_params(key):
    """Deterministic PyTorch-like init: U(-1/sqrt(fan_in), 1/sqrt(fan_in))."""
    def uniform(k, shape, fan_in):
        bound = 1.0 / float(fan_in) ** 0.5
        return jax.random.uniform(k, shape, jnp.float32, -bound, bound)

    ks = jax.random.split(key, 10)
    return {
        "conv1_w": uniform(ks[0], (32, 1, 5, 5), 1 * 5 * 5),
        "conv1_b": uniform(ks[1], (32,), 1 * 5 * 5),
        "conv2_w": uniform(ks[2], (32, 32, 5, 5), 32 * 5 * 5),
        "conv2_b": uniform(ks[3], (32,), 32 * 5 * 5),
        "fc1_w": uniform(ks[4], (42, 32 * 6 * 7), 32 * 6 * 7),
        "fc1_b": uniform(ks[5], (42,), 32 * 6 * 7),
        "fc2_w": uniform(ks[6], (42, 42), 42),
        "fc2_b": uniform(ks[7], (42,), 42),
        "out_w": uniform(ks[8], (7, 42), 42),
        "out_b": uniform(ks[9], (7,), 42),
    }


def dqn_forward_reference(x_nchw, params):
    """Pure-JAX NCHW reference mirroring the PyTorch forward (high precision)."""
    dn = ("NCHW", "OIHW", "NCHW")

    def conv(x, w, b):
        y = jax.lax.conv_general_dilated(
            x, w, (1, 1), ((2, 2), (2, 2)), dimension_numbers=dn, precision=_HIGH)
        return y + b.reshape(1, -1, 1, 1)

    x = jax.nn.relu(conv(x_nchw, params["conv1_w"], params["conv1_b"]))
    x = jax.nn.relu(conv(x, params["conv2_w"], params["conv2_b"]))
    x = x.reshape(x.shape[0], -1)
    x = jax.nn.relu(jnp.dot(x, params["fc1_w"].T, precision=_HIGH) + params["fc1_b"])
    x = jax.nn.relu(jnp.dot(x, params["fc2_w"].T, precision=_HIGH) + params["fc2_b"])
    return jnp.dot(x, params["out_w"].T, precision=_HIGH) + params["out_b"]


if __name__ == "__main__":
    key = jax.random.PRNGKey(0)
    pkey, xkey = jax.random.split(key)
    params = init_params(pkey)
    packed = pack_params(params)          # one-time weight repack (outside the forward)

    # fc1 expects 32*6*7 features after two same-padded convs -> input is [B, 1, 6, 7].
    x = jax.random.normal(xkey, (2, 1, H, W), dtype=jnp.float32)

    out = dqn_forward_pallas(x, packed)
    out = jax.block_until_ready(out)

    ref = dqn_forward_reference(x, params)
    assert out.shape == (2, N_OUT), out.shape
    # Tolerance covers the MXU's default f32 matmul path plus bf16 weight
    # storage (f32 accumulation); layout/permutation bugs would give O(1) errors.
    if not jnp.allclose(out, ref, atol=1e-2, rtol=1e-2):
        max_err = float(jnp.max(jnp.abs(out - ref)))
        raise AssertionError(f"Pallas DQN output mismatch vs reference (max |err|={max_err})")

    print("KERNEL_OK")
</pallas_src>

<mosaic_0001>
module attributes {stable_mosaic.version = 11 : i64} {
  func.func @_dqn_kernel(%arg0: memref<84x32xf32, #tpu.memory_space<vmem>>, %arg1: memref<32x32xf32, #tpu.memory_space<vmem>>, %arg2: memref<1x32xf32, #tpu.memory_space<vmem>>, %arg3: memref<5x160x32xbf16, #tpu.memory_space<vmem>>, %arg4: memref<1x32xf32, #tpu.memory_space<vmem>>, %arg5: memref<1344x128xbf16, #tpu.memory_space<vmem>>, %arg6: memref<1x128xf32, #tpu.memory_space<vmem>>, %arg7: memref<128x128xbf16, #tpu.memory_space<vmem>>, %arg8: memref<1x128xf32, #tpu.memory_space<vmem>>, %arg9: memref<128x128xbf16, #tpu.memory_space<vmem>>, %arg10: memref<1x128xf32, #tpu.memory_space<vmem>>, %arg11: memref<2x128xf32, #tpu.memory_space<vmem>>, %arg12: memref<212x160xf32, #tpu.memory_space<vmem>>, %arg13: memref<2x1344xf32, #tpu.memory_space<vmem>>) attributes {dimension_semantics = [], scalar_prefetch = 0 : i64, scratch_operands = 2 : i64, tpu.core_type = #tpu.core_type<tc>} {
    %c0 = arith.constant 0 : index
    %c0_0 = arith.constant 0 : index
    %0 = vector.load %arg0[%c0, %c0_0] : memref<84x32xf32, #tpu.memory_space<vmem>>, vector<84x32xf32>
    %c0_1 = arith.constant 0 : index
    %c0_2 = arith.constant 0 : index
    %1 = vector.load %arg1[%c0_1, %c0_2] : memref<32x32xf32, #tpu.memory_space<vmem>>, vector<32x32xf32>
    %cst = arith.constant dense<0.000000e+00> : vector<84x32xf32>
    %2 = tpu.matmul %0, %1, %cst {dimension_numbers = #tpu.dot_dimension_numbers<[1], [0], [0], [1], [0, 0, 1, 1], [], []>} : vector<84x32xf32>, vector<32x32xf32>, vector<84x32xf32> -> vector<84x32xf32>
    %c0_3 = arith.constant 0 : index
    %c0_4 = arith.constant 0 : index
    %3 = vector.load %arg2[%c0_3, %c0_4] : memref<1x32xf32, #tpu.memory_space<vmem>>, vector<1x32xf32>
    %4 = vector.broadcast %3 : vector<1x32xf32> to vector<84x32xf32>
    %5 = arith.addf %2, %4 : vector<84x32xf32>
    %cst_5 = arith.constant 0.000000e+00 : f32
    %6 = vector.broadcast %cst_5 : f32 to vector<84x32xf32>
    %7 = arith.maximumf %5, %6 : vector<84x32xf32>
    %cst_6 = arith.constant 0.000000e+00 : f32
    %8 = vector.broadcast %cst_6 : f32 to vector<212x160xf32>
    %c0_7 = arith.constant 0 : index
    %c0_8 = arith.constant 0 : index
    %9 = vector.load %arg12[%c0_7, %c0_8] : memref<212x160xf32, #tpu.memory_space<vmem>>, vector<212x160xf32>
    tpu.vector_store %arg12[%c0_7, %c0_8], %8 {strides = array<i32>} : memref<212x160xf32, #tpu.memory_space<vmem>>, vector<212x160xf32>,
    %10 = vector.extract_strided_slice %7 {offsets = [0, 0], sizes = [14, 32], strides = [1, 1]} : vector<84x32xf32> to vector<14x32xf32>
    %c48 = arith.constant 48 : index
    %c0_9 = arith.constant 0 : index
    %11 = vector.load %arg12[%c48, %c0_9] : memref<212x160xf32, #tpu.memory_space<vmem>>, vector<14x32xf32>
    tpu.vector_store %arg12[%c48, %c0_9], %10 {strides = array<i32>} : memref<212x160xf32, #tpu.memory_space<vmem>>, vector<14x32xf32>,
    %12 = vector.extract_strided_slice %7 {offsets = [14, 0], sizes = [14, 32], strides = [1, 1]} : vector<84x32xf32> to vector<14x32xf32>
    %c70 = arith.constant 70 : index
    %c0_10 = arith.constant 0 : index
    %13 = vector.load %arg12[%c70, %c0_10] : memref<212x160xf32, #tpu.memory_space<vmem>>, vector<14x32xf32>
    tpu.vector_store %arg12[%c70, %c0_10], %12 {strides = array<i32>} : memref<212x160xf32, #tpu.memory_space<vmem>>, vector<14x32xf32>,
    %14 = vector.extract_strided_slice %7 {offsets = [28, 0], sizes = [14, 32], strides = [1, 1]} : vector<84x32xf32> to vector<14x32xf32>
    %c92 = arith.constant 92 : index
    %c0_11 = arith.constant 0 : index
    %15 = vector.load %arg12[%c92, %c0_11] : memref<212x160xf32, #tpu.memory_space<vmem>>, vector<14x32xf32>
    tpu.vector_store %arg12[%c92, %c0_11], %14 {strides = array<i32>} : memref<212x160xf32, #tpu.memory_space<vmem>>, vector<14x32xf32>,
    %16 = vector.extract_strided_slice %7 {offsets = [42, 0], sizes = [14, 32], strides = [1, 1]} : vector<84x32xf32> to vector<14x32xf32>
    %c114 = arith.constant 114 : index
    %c0_12 = arith.constant 0 : index
    %17 = vector.load %arg12[%c114, %c0_12] : memref<212x160xf32, #tpu.memory_space<vmem>>, vector<14x32xf32>
    tpu.vector_store %arg12[%c114, %c0_12], %16 {strides = array<i32>} : memref<212x160xf32, #tpu.memory_space<vmem>>, vector<14x32xf32>,
    %18 = vector.extract_strided_slice %7 {offsets = [56, 0], sizes = [14, 32], strides = [1, 1]} : vector<84x32xf32> to vector<14x32xf32>
    %c136 = arith.constant 136 : index
    %c0_13 = arith.constant 0 : index
    %19 = vector.load %arg12[%c136, %c0_13] : memref<212x160xf32, #tpu.memory_space<vmem>>, vector<14x32xf32>
    tpu.vector_store %arg12[%c136, %c0_13], %18 {strides = array<i32>} : memref<212x160xf32, #tpu.memory_space<vmem>>, vector<14x32xf32>,
    %20 = vector.extract_strided_slice %7 {offsets = [70, 0], sizes = [14, 32], strides = [1, 1]} : vector<84x32xf32> to vector<14x32xf32>
    %c158 = arith.constant 158 : index
    %c0_14 = arith.constant 0 : index
    %21 = vector.load %arg12[%c158, %c0_14] : memref<212x160xf32, #tpu.memory_space<vmem>>, vector<14x32xf32>
    tpu.vector_store %arg12[%c158, %c0_14], %20 {strides = array<i32>} : memref<212x160xf32, #tpu.memory_space<vmem>>, vector<14x32xf32>,
    %22 = vector.extract_strided_slice %7 {offsets = [0, 0], sizes = [14, 32], strides = [1, 1]} : vector<84x32xf32> to vector<14x32xf32>
    %c46 = arith.constant 46 : index
    %c32 = arith.constant 32 : index
    %23 = vector.load %arg12[%c46, %c32] : memref<212x160xf32, #tpu.memory_space<vmem>>, vector<14x32xf32>
    tpu.vector_store %arg12[%c46, %c32], %22 {strides = array<i32>} : memref<212x160xf32, #tpu.memory_space<vmem>>, vector<14x32xf32>,
    %24 = vector.extract_strided_slice %7 {offsets = [14, 0], sizes = [14, 32], strides = [1, 1]} : vector<84x32xf32> to vector<14x32xf32>
    %c68 = arith.constant 68 : index
    %c32_15 = arith.constant 32 : index
    %25 = vector.load %arg12[%c68, %c32_15] : memref<212x160xf32, #tpu.memory_space<vmem>>, vector<14x32xf32>
    tpu.vector_store %arg12[%c68, %c32_15], %24 {strides = array<i32>} : memref<212x160xf32, #tpu.memory_space<vmem>>, vector<14x32xf32>,
    %26 = vector.extract_strided_slice %7 {offsets = [28, 0], sizes = [14, 32], strides = [1, 1]} : vector<84x32xf32> to vector<14x32xf32>
    %c90 = arith.constant 90 : index
    %c32_16 = arith.constant 32 : index
    %27 = vector.load %arg12[%c90, %c32_16] : memref<212x160xf32, #tpu.memory_space<vmem>>, vector<14x32xf32>
    tpu.vector_store %arg12[%c90, %c32_16], %26 {strides = array<i32>} : memref<212x160xf32, #tpu.memory_space<vmem>>, vector<14x32xf32>,
    %28 = vector.extract_strided_slice %7 {offsets = [42, 0], sizes = [14, 32], strides = [1, 1]} : vector<84x32xf32> to vector<14x32xf32>
    %c112 = arith.constant 112 : index
    %c32_17 = arith.constant 32 : index
    %29 = vector.load %arg12[%c112, %c32_17] : memref<212x160xf32, #tpu.memory_space<vmem>>, vector<14x32xf32>
    tpu.vector_store %arg12[%c112, %c32_17], %28 {strides = array<i32>} : memref<212x160xf32, #tpu.memory_space<vmem>>, vector<14x32xf32>,
    %30 = vector.extract_strided_slice %7 {offsets = [56, 0], sizes = [14, 32], strides = [1, 1]} : vector<84x32xf32> to vector<14x32xf32>
    %c134 = arith.constant 134 : index
    %c32_18 = arith.constant 32 : index
    %31 = vector.load %arg12[%c134, %c32_18] : memref<212x160xf32, #tpu.memory_space<vmem>>, vector<14x32xf32>
    tpu.vector_store %arg12[%c134, %c32_18], %30 {strides = array<i32>} : memref<212x160xf32, #tpu.memory_space<vmem>>, vector<14x32xf32>,
    %32 = vector.extract_strided_slice %7 {offsets = [70, 0], sizes = [14, 32], strides = [1, 1]} : vector<84x32xf32> to vector<14x32xf32>
    %c156 = arith.constant 156 : index
    %c32_19 = arith.constant 32 : index
    %33 = vector.load %arg12[%c156, %c32_19] : memref<212x160xf32, #tpu.memory_space<vmem>>, vector<14x32xf32>
    tpu.vector_store %arg12[%c156, %c32_19], %32 {strides = array<i32>} : memref<212x160xf32, #tpu.memory_space<vmem>>, vector<14x32xf32>,
    %34 = vector.extract_strided_slice %7 {offsets = [0, 0], sizes = [14, 32], strides = [1, 1]} : vector<84x32xf32> to vector<14x32xf32>
    %c44 = arith.constant 44 : index
    %c64 = arith.constant 64 : index
    %35 = vector.load %arg12[%c44, %c64] : memref<212x160xf32, #tpu.memory_space<vmem>>, vector<14x32xf32>
    tpu.vector_store %arg12[%c44, %c64], %34 {strides = array<i32>} : memref<212x160xf32, #tpu.memory_space<vmem>>, vector<14x32xf32>,
    %36 = vector.extract_strided_slice %7 {offsets = [14, 0], sizes = [14, 32], strides = [1, 1]} : vector<84x32xf32> to vector<14x32xf32>
    %c66 = arith.constant 66 : index
    %c64_20 = arith.constant 64 : index
    %37 = vector.load %arg12[%c66, %c64_20] : memref<212x160xf32, #tpu.memory_space<vmem>>, vector<14x32xf32>
    tpu.vector_store %arg12[%c66, %c64_20], %36 {strides = array<i32>} : memref<212x160xf32, #tpu.memory_space<vmem>>, vector<14x32xf32>,
    %38 = vector.extract_strided_slice %7 {offsets = [28, 0], sizes = [14, 32], strides = [1, 1]} : vector<84x32xf32> to vector<14x32xf32>
    %c88 = arith.constant 88 : index
    %c64_21 = arith.constant 64 : index
    %39 = vector.load %arg12[%c88, %c64_21] : memref<212x160xf32, #tpu.memory_space<vmem>>, vector<14x32xf32>
    tpu.vector_store %arg12[%c88, %c64_21], %38 {strides = array<i32>} : memref<212x160xf32, #tpu.memory_space<vmem>>, vector<14x32xf32>,
    %40 = vector.extract_strided_slice %7 {offsets = [42, 0], sizes = [14, 32], strides = [1, 1]} : vector<84x32xf32> to vector<14x32xf32>
    %c110 = arith.constant 110 : index
    %c64_22 = arith.constant 64 : index
    %41 = vector.load %arg12[%c110, %c64_22] : memref<212x160xf32, #tpu.memory_space<vmem>>, vector<14x32xf32>
    tpu.vector_store %arg12[%c110, %c64_22], %40 {strides = array<i32>} : memref<212x160xf32, #tpu.memory_space<vmem>>, vector<14x32xf32>,
    %42 = vector.extract_strided_slice %7 {offsets = [56, 0], sizes = [14, 32], strides = [1, 1]} : vector<84x32xf32> to vector<14x32xf32>
    %c132 = arith.constant 132 : index
    %c64_23 = arith.constant 64 : index
    %43 = vector.load %arg12[%c132, %c64_23] : memref<212x160xf32, #tpu.memory_space<vmem>>, vector<14x32xf32>
    tpu.vector_store %arg12[%c132, %c64_23], %42 {strides = array<i32>} : memref<212x160xf32, #tpu.memory_space<vmem>>, vector<14x32xf32>,
    %44 = vector.extract_strided_slice %7 {offsets = [70, 0], sizes = [14, 32], strides = [1, 1]} : vector<84x32xf32> to vector<14x32xf32>
    %c154 = arith.constant 154 : index
    %c64_24 = arith.constant 64 : index
    %45 = vector.load %arg12[%c154, %c64_24] : memref<212x160xf32, #tpu.memory_space<vmem>>, vector<14x32xf32>
    tpu.vector_store %arg12[%c154, %c64_24], %44 {strides = array<i32>} : memref<212x160xf32, #tpu.memory_space<vmem>>, vector<14x32xf32>,
    %46 = vector.extract_strided_slice %7 {offsets = [0, 0], sizes = [14, 32], strides = [1, 1]} : vector<84x32xf32> to vector<14x32xf32>
    %c42 = arith.constant 42 : index
    %c96 = arith.constant 96 : index
    %47 = vector.load %arg12[%c42, %c96] : memref<212x160xf32, #tpu.memory_space<vmem>>, vector<14x32xf32>
    tpu.vector_store %arg12[%c42, %c96], %46 {strides = array<i32>} : memref<212x160xf32, #tpu.memory_space<vmem>>, vector<14x32xf32>,
    %48 = vector.extract_strided_slice %7 {offsets = [14, 0], sizes = [14, 32], strides = [1, 1]} : vector<84x32xf32> to vector<14x32xf32>
    %c64_25 = arith.constant 64 : index
    %c96_26 = arith.constant 96 : index
    %49 = vector.load %arg12[%c64_25, %c96_26] : memref<212x160xf32, #tpu.memory_space<vmem>>, vector<14x32xf32>
    tpu.vector_store %arg12[%c64_25, %c96_26], %48 {strides = array<i32>} : memref<212x160xf32, #tpu.memory_space<vmem>>, vector<14x32xf32>,
    %50 = vector.extract_strided_slice %7 {offsets = [28, 0], sizes = [14, 32], strides = [1, 1]} : vector<84x32xf32> to vector<14x32xf32>
    %c86 = arith.constant 86 : index
    %c96_27 = arith.constant 96 : index
    %51 = vector.load %arg12[%c86, %c96_27] : memref<212x160xf32, #tpu.memory_space<vmem>>, vector<14x32xf32>
    tpu.vector_store %arg12[%c86, %c96_27], %50 {strides = array<i32>} : memref<212x160xf32, #tpu.memory_space<vmem>>, vector<14x32xf32>,
    %52 = vector.extract_strided_slice %7 {offsets = [42, 0], sizes = [14, 32], strides = [1, 1]} : vector<84x32xf32> to vector<14x32xf32>
    %c108 = arith.constant 108 : index
    %c96_28 = arith.constant 96 : index
    %53 = vector.load %arg12[%c108, %c96_28] : memref<212x160xf32, #tpu.memory_space<vmem>>, vector<14x32xf32>
    tpu.vector_store %arg12[%c108, %c96_28], %52 {strides = array<i32>} : memref<212x160xf32, #tpu.memory_space<vmem>>, vector<14x32xf32>,
    %54 = vector.extract_strided_slice %7 {offsets = [56, 0], sizes = [14, 32], strides = [1, 1]} : vector<84x32xf32> to vector<14x32xf32>
    %c130 = arith.constant 130 : index
    %c96_29 = arith.constant 96 : index
    %55 = vector.load %arg12[%c130, %c96_29] : memref<212x160xf32, #tpu.memory_space<vmem>>, vector<14x32xf32>
    tpu.vector_store %arg12[%c130, %c96_29], %54 {strides = array<i32>} : memref<212x160xf32, #tpu.memory_space<vmem>>, vector<14x32xf32>,
    %56 = vector.extract_strided_slice %7 {offsets = [70, 0], sizes = [14, 32], strides = [1, 1]} : vector<84x32xf32> to vector<14x32xf32>
    %c152 = arith.constant 152 : index
    %c96_30 = arith.constant 96 : index
    %57 = vector.load %arg12[%c152, %c96_30] : memref<212x160xf32, #tpu.memory_space<vmem>>, vector<14x32xf32>
    tpu.vector_store %arg12[%c152, %c96_30], %56 {strides = array<i32>} : memref<212x160xf32, #tpu.memory_space<vmem>>, vector<14x32xf32>,
    %58 = vector.extract_strided_slice %7 {offsets = [0, 0], sizes = [14, 32], strides = [1, 1]} : vector<84x32xf32> to vector<14x32xf32>
    %c40 = arith.constant 40 : index
    %c128 = arith.constant 128 : index
    %59 = vector.load %arg12[%c40, %c128] : memref<212x160xf32, #tpu.memory_space<vmem>>, vector<14x32xf32>
    tpu.vector_store %arg12[%c40, %c128], %58 {strides = array<i32>} : memref<212x160xf32, #tpu.memory_space<vmem>>, vector<14x32xf32>,
    %60 = vector.extract_strided_slice %7 {offsets = [14, 0], sizes = [14, 32], strides = [1, 1]} : vector<84x32xf32> to vector<14x32xf32>
    %c62 = arith.constant 62 : index
    %c128_31 = arith.constant 128 : index
    %61 = vector.load %arg12[%c62, %c128_31] : memref<212x160xf32, #tpu.memory_space<vmem>>, vector<14x32xf32>
    tpu.vector_store %arg12[%c62, %c128_31], %60 {strides = array<i32>} : memref<212x160xf32, #tpu.memory_space<vmem>>, vector<14x32xf32>,
    %62 = vector.extract_strided_slice %7 {offsets = [28, 0], sizes = [14, 32], strides = [1, 1]} : vector<84x32xf32> to vector<14x32xf32>
    %c84 = arith.constant 84 : index
    %c128_32 = arith.constant 128 : index
    %63 = vector.load %arg12[%c84, %c128_32] : memref<212x160xf32, #tpu.memory_space<vmem>>, vector<14x32xf32>
    tpu.vector_store %arg12[%c84, %c128_32], %62 {strides = array<i32>} : memref<212x160xf32, #tpu.memory_space<vmem>>, vector<14x32xf32>,
    %64 = vector.extract_strided_slice %7 {offsets = [42, 0], sizes = [14, 32], strides = [1, 1]} : vector<84x32xf32> to vector<14x32xf32>
    %c106 = arith.constant 106 : index
    %c128_33 = arith.constant 128 : index
    %65 = vector.load %arg12[%c106, %c128_33] : memref<212x160xf32, #tpu.memory_space<vmem>>, vector<14x32xf32>
    tpu.vector_store %arg12[%c106, %c128_33], %64 {strides = array<i32>} : memref<212x160xf32, #tpu.memory_space<vmem>>, vector<14x32xf32>,
    %66 = vector.extract_strided_slice %7 {offsets = [56, 0], sizes = [14, 32], strides = [1, 1]} : vector<84x32xf32> to vector<14x32xf32>
    %c128_34 = arith.constant 128 : index
    %c128_35 = arith.constant 128 : index
    %67 = vector.load %arg12[%c128_34, %c128_35] : memref<212x160xf32, #tpu.memory_space<vmem>>, vector<14x32xf32>
    tpu.vector_store %arg12[%c128_34, %c128_35], %66 {strides = array<i32>} : memref<212x160xf32, #tpu.memory_space<vmem>>, vector<14x32xf32>,
    %68 = vector.extract_strided_slice %7 {offsets = [70, 0], sizes = [14, 32], strides = [1, 1]} : vector<84x32xf32> to vector<14x32xf32>
    %c150 = arith.constant 150 : index
    %c128_36 = arith.constant 128 : index
    %69 = vector.load %arg12[%c150, %c128_36] : memref<212x160xf32, #tpu.memory_space<vmem>>, vector<14x32xf32>
    tpu.vector_store %arg12[%c150, %c128_36], %68 {strides = array<i32>} : memref<212x160xf32, #tpu.memory_space<vmem>>, vector<14x32xf32>,
    %cst_37 = arith.constant 0.000000e+00 : f32
    %70 = vector.broadcast %cst_37 : f32 to vector<124x32xf32>
    %c0_38 = arith.constant 0 : index
    %c0_39 = arith.constant 0 : index
    %71 = vector.load %arg12[%c0_38, %c0_39] : memref<212x160xf32, #tpu.memory_space<vmem>>, vector<124x160xf32>
    %c0_40 = arith.constant 0 : index
    %c0_41 = arith.constant 0 : index
    %c0_42 = arith.constant 0 : index
    %72 = vector.load %arg3[%c0_40, %c0_41, %c0_42] : memref<5x160x32xbf16, #tpu.memory_space<vmem>>, vector<1x160x32xbf16>
    %73 = vector.shape_cast %72 : vector<1x160x32xbf16> to vector<160x32xbf16>
    %74 = arith.extf %73 : vector<160x32xbf16> to vector<160x32xf32>
    %cst_43 = arith.constant dense<0.000000e+00> : vector<124x32xf32>
    %75 = tpu.matmul %71, %74, %cst_43 {dimension_numbers = #tpu.dot_dimension_numbers<[1], [0], [0], [1], [0, 0, 1, 1], [], []>} : vector<124x160xf32>, vector<160x32xf32>, vector<124x32xf32> -> vector<124x32xf32>
    %76 = arith.addf %70, %75 : vector<124x32xf32>
    %c22 = arith.constant 22 : index
    %c0_44 = arith.constant 0 : index
    %77 = vector.load %arg12[%c22, %c0_44] : memref<212x160xf32, #tpu.memory_space<vmem>>, vector<124x160xf32>
    %c1 = arith.constant 1 : index
    %c0_45 = arith.constant 0 : index
    %c0_46 = arith.constant 0 : index
    %78 = vector.load %arg3[%c1, %c0_45, %c0_46] : memref<5x160x32xbf16, #tpu.memory_space<vmem>>, vector<1x160x32xbf16>
    %79 = vector.shape_cast %78 : vector<1x160x32xbf16> to vector<160x32xbf16>
    %80 = arith.extf %79 : vector<160x32xbf16> to vector<160x32xf32>
    %cst_47 = arith.constant dense<0.000000e+00> : vector<124x32xf32>
    %81 = tpu.matmul %77, %80, %cst_47 {dimension_numbers = #tpu.dot_dimension_numbers<[1], [0], [0], [1], [0, 0, 1, 1], [], []>} : vector<124x160xf32>, vector<160x32xf32>, vector<124x32xf32> -> vector<124x32xf32>
    %82 = arith.addf %76, %81 : vector<124x32xf32>
    %c44_48 = arith.constant 44 : index
    %c0_49 = arith.constant 0 : index
    %83 = vector.load %arg12[%c44_48, %c0_49] : memref<212x160xf32, #tpu.memory_space<vmem>>, vector<124x160xf32>
    %c2 = arith.constant 2 : index
    %c0_50 = arith.constant 0 : index
    %c0_51 = arith.constant 0 : index
    %84 = vector.load %arg3[%c2, %c0_50, %c0_51] : memref<5x160x32xbf16, #tpu.memory_space<vmem>>, vector<1x160x32xbf16>
    %85 = vector.shape_cast %84 : vector<1x160x32xbf16> to vector<160x32xbf16>
    %86 = arith.extf %85 : vector<160x32xbf16> to vector<160x32xf32>
    %cst_52 = arith.constant dense<0.000000e+00> : vector<124x32xf32>
    %87 = tpu.matmul %83, %86, %cst_52 {dimension_numbers = #tpu.dot_dimension_numbers<[1], [0], [0], [1], [0, 0, 1, 1], [], []>} : vector<124x160xf32>, vector<160x32xf32>, vector<124x32xf32> -> vector<124x32xf32>
    %88 = arith.addf %82, %87 : vector<124x32xf32>
    %c66_53 = arith.constant 66 : index
    %c0_54 = arith.constant 0 : index
    %89 = vector.load %arg12[%c66_53, %c0_54] : memref<212x160xf32, #tpu.memory_space<vmem>>, vector<124x160xf32>
    %c3 = arith.constant 3 : index
    %c0_55 = arith.constant 0 : index
    %c0_56 = arith.constant 0 : index
    %90 = vector.load %arg3[%c3, %c0_55, %c0_56] : memref<5x160x32xbf16, #tpu.memory_space<vmem>>, vector<1x160x32xbf16>
    %91 = vector.shape_cast %90 : vector<1x160x32xbf16> to vector<160x32xbf16>
    %92 = arith.extf %91 : vector<160x32xbf16> to vector<160x32xf32>
    %cst_57 = arith.constant dense<0.000000e+00> : vector<124x32xf32>
    %93 = tpu.matmul %89, %92, %cst_57 {dimension_numbers = #tpu.dot_dimension_numbers<[1], [0], [0], [1], [0, 0, 1, 1], [], []>} : vector<124x160xf32>, vector<160x32xf32>, vector<124x32xf32> -> vector<124x32xf32>
    %94 = arith.addf %88, %93 : vector<124x32xf32>
    %c88_58 = arith.constant 88 : index
    %c0_59 = arith.constant 0 : index
    %95 = vector.load %arg12[%c88_58, %c0_59] : memref<212x160xf32, #tpu.memory_space<vmem>>, vector<124x160xf32>
    %c4 = arith.constant 4 : index
    %c0_60 = arith.constant 0 : index
    %c0_61 = arith.constant 0 : index
    %96 = vector.load %arg3[%c4, %c0_60, %c0_61] : memref<5x160x32xbf16, #tpu.memory_space<vmem>>, vector<1x160x32xbf16>
    %97 = vector.shape_cast %96 : vector<1x160x32xbf16> to vector<160x32xbf16>
    %98 = arith.extf %97 : vector<160x32xbf16> to vector<160x32xf32>
    %cst_62 = arith.constant dense<0.000000e+00> : vector<124x32xf32>
    %99 = tpu.matmul %95, %98, %cst_62 {dimension_numbers = #tpu.dot_dimension_numbers<[1], [0], [0], [1], [0, 0, 1, 1], [], []>} : vector<124x160xf32>, vector<160x32xf32>, vector<124x32xf32> -> vector<124x32xf32>
    %100 = arith.addf %94, %99 : vector<124x32xf32>
    %c0_63 = arith.constant 0 : index
    %c0_64 = arith.constant 0 : index
    %101 = vector.load %arg4[%c0_63, %c0_64] : memref<1x32xf32, #tpu.memory_space<vmem>>, vector<1x32xf32>
    %102 = vector.broadcast %101 : vector<1x32xf32> to vector<124x32xf32>
    %103 = arith.addf %100, %102 : vector<124x32xf32>
    %cst_65 = arith.constant 0.000000e+00 : f32
    %104 = vector.broadcast %cst_65 : f32 to vector<124x32xf32>
    %105 = arith.maximumf %103, %104 : vector<124x32xf32>
    %106 = vector.extract_strided_slice %105 {offsets = [0, 0], sizes = [2, 32], strides = [1, 1]} : vector<124x32xf32> to vector<2x32xf32>
    %c0_66 = arith.constant 0 : index
    %c0_67 = arith.constant 0 : index
    %107 = vector.load %arg13[%c0_66, %c0_67] : memref<2x1344xf32, #tpu.memory_space<vmem>>, vector<2x32xf32>
    tpu.vector_store %arg13[%c0_66, %c0_67], %106 {strides = array<i32>} : memref<2x1344xf32, #tpu.memory_space<vmem>>, vector<2x32xf32>,
    %108 = vector.extract_strided_slice %105 {offsets = [2, 0], sizes = [2, 32], strides = [1, 1]} : vector<124x32xf32> to vector<2x32xf32>
    %c0_68 = arith.constant 0 : index
    %c32_69 = arith.constant 32 : index
    %109 = vector.load %arg13[%c0_68, %c32_69] : memref<2x1344xf32, #tpu.memory_space<vmem>>, vector<2x32xf32>
    tpu.vector_store %arg13[%c0_68, %c32_69], %108 {strides = array<i32>} : memref<2x1344xf32, #tpu.memory_space<vmem>>, vector<2x32xf32>,
    %110 = vector.extract_strided_slice %105 {offsets = [4, 0], sizes = [2, 32], strides = [1, 1]} : vector<124x32xf32> to vector<2x32xf32>
    %c0_70 = arith.constant 0 : index
    %c64_71 = arith.constant 64 : index
    %111 = vector.load %arg13[%c0_70, %c64_71] : memref<2x1344xf32, #tpu.memory_space<vmem>>, vector<2x32xf32>
    tpu.vector_store %arg13[%c0_70, %c64_71], %110 {strides = array<i32>} : memref<2x1344xf32, #tpu.memory_space<vmem>>, vector<2x32xf32>,
    %112 = vector.extract_strided_slice %105 {offsets = [6, 0], sizes = [2, 32], strides = [1, 1]} : vector<124x32xf32> to vector<2x32xf32>
    %c0_72 = arith.constant 0 : index
    %c96_73 = arith.constant 96 : index
    %113 = vector.load %arg13[%c0_72, %c96_73] : memref<2x1344xf32, #tpu.memory_space<vmem>>, vector<2x32xf32>
    tpu.vector_store %arg13[%c0_72, %c96_73], %112 {strides = array<i32>} : memref<2x1344xf32, #tpu.memory_space<vmem>>, vector<2x32xf32>,
    %114 = vector.extract_strided_slice %105 {offsets = [8, 0], sizes = [2, 32], strides = [1, 1]} : vector<124x32xf32> to vector<2x32xf32>
    %c0_74 = arith.constant 0 : index
    %c128_75 = arith.constant 128 : index
    %115 = vector.load %arg13[%c0_74, %c128_75] : memref<2x1344xf32, #tpu.memory_space<vmem>>, vector<2x32xf32>
    tpu.vector_store %arg13[%c0_74, %c128_75], %114 {strides = array<i32>} : memref<2x1344xf32, #tpu.memory_space<vmem>>, vector<2x32xf32>,
    %116 = vector.extract_strided_slice %105 {offsets = [10, 0], sizes = [2, 32], strides = [1, 1]} : vector<124x32xf32> to vector<2x32xf32>
    %c0_76 = arith.constant 0 : index
    %c160 = arith.constant 160 : index
    %117 = vector.load %arg13[%c0_76, %c160] : memref<2x1344xf32, #tpu.memory_space<vmem>>, vector<2x32xf32>
    tpu.vector_store %arg13[%c0_76, %c160], %116 {strides = array<i32>} : memref<2x1344xf32, #tpu.memory_space<vmem>>, vector<2x32xf32>,
    %118 = vector.extract_strided_slice %105 {offsets = [12, 0], sizes = [2, 32], strides = [1, 1]} : vector<124x32xf32> to vector<2x32xf32>
    %c0_77 = arith.constant 0 : index
    %c192 = arith.constant 192 : index
    %119 = vector.load %arg13[%c0_77, %c192] : memref<2x1344xf32, #tpu.memory_space<vmem>>, vector<2x32xf32>
    tpu.vector_store %arg13[%c0_77, %c192], %118 {strides = array<i32>} : memref<2x1344xf32, #tpu.memory_space<vmem>>, vector<2x32xf32>,
    %120 = vector.extract_strided_slice %105 {offsets = [22, 0], sizes = [2, 32], strides = [1, 1]} : vector<124x32xf32> to vector<2x32xf32>
    %c0_78 = arith.constant 0 : index
    %c224 = arith.constant 224 : index
    %121 = vector.load %arg13[%c0_78, %c224] : memref<2x1344xf32, #tpu.memory_space<vmem>>, vector<2x32xf32>
    tpu.vector_store %arg13[%c0_78, %c224], %120 {strides = array<i32>} : memref<2x1344xf32, #tpu.memory_space<vmem>>, vector<2x32xf32>,
    %122 = vector.extract_strided_slice %105 {offsets = [24, 0], sizes = [2, 32], strides = [1, 1]} : vector<124x32xf32> to vector<2x32xf32>
    %c0_79 = arith.constant 0 : index
    %c256 = arith.constant 256 : index
    %123 = vector.load %arg13[%c0_79, %c256] : memref<2x1344xf32, #tpu.memory_space<vmem>>, vector<2x32xf32>
    tpu.vector_store %arg13[%c0_79, %c256], %122 {strides = array<i32>} : memref<2x1344xf32, #tpu.memory_space<vmem>>, vector<2x32xf32>,
    %124 = vector.extract_strided_slice %105 {offsets = [26, 0], sizes = [2, 32], strides = [1, 1]} : vector<124x32xf32> to vector<2x32xf32>
    %c0_80 = arith.constant 0 : index
    %c288 = arith.constant 288 : index
    %125 = vector.load %arg13[%c0_80, %c288] : memref<2x1344xf32, #tpu.memory_space<vmem>>, vector<2x32xf32>
    tpu.vector_store %arg13[%c0_80, %c288], %124 {strides = array<i32>} : memref<2x1344xf32, #tpu.memory_space<vmem>>, vector<2x32xf32>,
    %126 = vector.extract_strided_slice %105 {offsets = [28, 0], sizes = [2, 32], strides = [1, 1]} : vector<124x32xf32> to vector<2x32xf32>
    %c0_81 = arith.constant 0 : index
    %c320 = arith.constant 320 : index
    %127 = vector.load %arg13[%c0_81, %c320] : memref<2x1344xf32, #tpu.memory_space<vmem>>, vector<2x32xf32>
    tpu.vector_store %arg13[%c0_81, %c320], %126 {strides = array<i32>} : memref<2x1344xf32, #tpu.memory_space<vmem>>, vector<2x32xf32>,
    %128 = vector.extract_strided_slice %105 {offsets = [30, 0], sizes = [2, 32], strides = [1, 1]} : vector<124x32xf32> to vector<2x32xf32>
    %c0_82 = arith.constant 0 : index
    %c352 = arith.constant 352 : index
    %129 = vector.load %arg13[%c0_82, %c352] : memref<2x1344xf32, #tpu.memory_space<vmem>>, vector<2x32xf32>
    tpu.vector_store %arg13[%c0_82, %c352], %128 {strides = array<i32>} : memref<2x1344xf32, #tpu.memory_space<vmem>>, vector<2x32xf32>,
    %130 = vector.extract_strided_slice %105 {offsets = [32, 0], sizes = [2, 32], strides = [1, 1]} : vector<124x32xf32> to vector<2x32xf32>
    %c0_83 = arith.constant 0 : index
    %c384 = arith.constant 384 : index
    %131 = vector.load %arg13[%c0_83, %c384] : memref<2x1344xf32, #tpu.memory_space<vmem>>, vector<2x32xf32>
    tpu.vector_store %arg13[%c0_83, %c384], %130 {strides = array<i32>} : memref<2x1344xf32, #tpu.memory_space<vmem>>, vector<2x32xf32>,
    %132 = vector.extract_strided_slice %105 {offsets = [34, 0], sizes = [2, 32], strides = [1, 1]} : vector<124x32xf32> to vector<2x32xf32>
    %c0_84 = arith.constant 0 : index
    %c416 = arith.constant 416 : index
    %133 = vector.load %arg13[%c0_84, %c416] : memref<2x1344xf32, #tpu.memory_space<vmem>>, vector<2x32xf32>
    tpu.vector_store %arg13[%c0_84, %c416], %132 {strides = array<i32>} : memref<2x1344xf32, #tpu.memory_space<vmem>>, vector<2x32xf32>,
    %134 = vector.extract_strided_slice %105 {offsets = [44, 0], sizes = [2, 32], strides = [1, 1]} : vector<124x32xf32> to vector<2x32xf32>
    %c0_85 = arith.constant 0 : index
    %c448 = arith.constant 448 : index
    %135 = vector.load %arg13[%c0_85, %c448] : memref<2x1344xf32, #tpu.memory_space<vmem>>, vector<2x32xf32>
    tpu.vector_store %arg13[%c0_85, %c448], %134 {strides = array<i32>} : memref<2x1344xf32, #tpu.memory_space<vmem>>, vector<2x32xf32>,
    %136 = vector.extract_strided_slice %105 {offsets = [46, 0], sizes = [2, 32], strides = [1, 1]} : vector<124x32xf32> to vector<2x32xf32>
    %c0_86 = arith.constant 0 : index
    %c480 = arith.constant 480 : index
    %137 = vector.load %arg13[%c0_86, %c480] : memref<2x1344xf32, #tpu.memory_space<vmem>>, vector<2x32xf32>
    tpu.vector_store %arg13[%c0_86, %c480], %136 {strides = array<i32>} : memref<2x1344xf32, #tpu.memory_space<vmem>>, vector<2x32xf32>,
    %138 = vector.extract_strided_slice %105 {offsets = [48, 0], sizes = [2, 32], strides = [1, 1]} : vector<124x32xf32> to vector<2x32xf32>
    %c0_87 = arith.constant 0 : index
    %c512 = arith.constant 512 : index
    %139 = vector.load %arg13[%c0_87, %c512] : memref<2x1344xf32, #tpu.memory_space<vmem>>, vector<2x32xf32>
    tpu.vector_store %arg13[%c0_87, %c512], %138 {strides = array<i32>} : memref<2x1344xf32, #tpu.memory_space<vmem>>, vector<2x32xf32>,
    %140 = vector.extract_strided_slice %105 {offsets = [50, 0], sizes = [2, 32], strides = [1, 1]} : vector<124x32xf32> to vector<2x32xf32>
    %c0_88 = arith.constant 0 : index
    %c544 = arith.constant 544 : index
    %141 = vector.load %arg13[%c0_88, %c544] : memref<2x1344xf32, #tpu.memory_space<vmem>>, vector<2x32xf32>
    tpu.vector_store %arg13[%c0_88, %c544], %140 {strides = array<i32>} : memref<2x1344xf32, #tpu.memory_space<vmem>>, vector<2x32xf32>,
    %142 = vector.extract_strided_slice %105 {offsets = [52, 0], sizes = [2, 32], strides = [1, 1]} : vector<124x32xf32> to vector<2x32xf32>
    %c0_89 = arith.constant 0 : index
    %c576 = arith.constant 576 : index
    %143 = vector.load %arg13[%c0_89, %c576] : memref<2x1344xf32, #tpu.memory_space<vmem>>, vector<2x32xf32>
    tpu.vector_store %arg13[%c0_89, %c576], %142 {strides = array<i32>} : memref<2x1344xf32, #tpu.memory_space<vmem>>, vector<2x32xf32>,
    %144 = vector.extract_strided_slice %105 {offsets = [54, 0], sizes = [2, 32], strides = [1, 1]} : vector<124x32xf32> to vector<2x32xf32>
    %c0_90 = arith.constant 0 : index
    %c608 = arith.constant 608 : index
    %145 = vector.load %arg13[%c0_90, %c608] : memref<2x1344xf32, #tpu.memory_space<vmem>>, vector<2x32xf32>
    tpu.vector_store %arg13[%c0_90, %c608], %144 {strides = array<i32>} : memref<2x1344xf32, #tpu.memory_space<vmem>>, vector<2x32xf32>,
    %146 = vector.extract_strided_slice %105 {offsets = [56, 0], sizes = [2, 32], strides = [1, 1]} : vector<124x32xf32> to vector<2x32xf32>
    %c0_91 = arith.constant 0 : index
    %c640 = arith.constant 640 : index
    %147 = vector.load %arg13[%c0_91, %c640] : memref<2x1344xf32, #tpu.memory_space<vmem>>, vector<2x32xf32>
    tpu.vector_store %arg13[%c0_91, %c640], %146 {strides = array<i32>} : memref<2x1344xf32, #tpu.memory_space<vmem>>, vector<2x32xf32>,
    %148 = vector.extract_strided_slice %105 {offsets = [66, 0], sizes = [2, 32], strides = [1, 1]} : vector<124x32xf32> to vector<2x32xf32>
    %c0_92 = arith.constant 0 : index
    %c672 = arith.constant 672 : index
    %149 = vector.load %arg13[%c0_92, %c672] : memref<2x1344xf32, #tpu.memory_space<vmem>>, vector<2x32xf32>
    tpu.vector_store %arg13[%c0_92, %c672], %148 {strides = array<i32>} : memref<2x1344xf32, #tpu.memory_space<vmem>>, vector<2x32xf32>,
    %150 = vector.extract_strided_slice %105 {offsets = [68, 0], sizes = [2, 32], strides = [1, 1]} : vector<124x32xf32> to vector<2x32xf32>
    %c0_93 = arith.constant 0 : index
    %c704 = arith.constant 704 : index
    %151 = vector.load %arg13[%c0_93, %c704] : memref<2x1344xf32, #tpu.memory_space<vmem>>, vector<2x32xf32>
    tpu.vector_store %arg13[%c0_93, %c704], %150 {strides = array<i32>} : memref<2x1344xf32, #tpu.memory_space<vmem>>, vector<2x32xf32>,
    %152 = vector.extract_strided_slice %105 {offsets = [70, 0], sizes = [2, 32], strides = [1, 1]} : vector<124x32xf32> to vector<2x32xf32>
    %c0_94 = arith.constant 0 : index
    %c736 = arith.constant 736 : index
    %153 = vector.load %arg13[%c0_94, %c736] : memref<2x1344xf32, #tpu.memory_space<vmem>>, vector<2x32xf32>
    tpu.vector_store %arg13[%c0_94, %c736], %152 {strides = array<i32>} : memref<2x1344xf32, #tpu.memory_space<vmem>>, vector<2x32xf32>,
    %154 = vector.extract_strided_slice %105 {offsets = [72, 0], sizes = [2, 32], strides = [1, 1]} : vector<124x32xf32> to vector<2x32xf32>
    %c0_95 = arith.constant 0 : index
    %c768 = arith.constant 768 : index
    %155 = vector.load %arg13[%c0_95, %c768] : memref<2x1344xf32, #tpu.memory_space<vmem>>, vector<2x32xf32>
    tpu.vector_store %arg13[%c0_95, %c768], %154 {strides = array<i32>} : memref<2x1344xf32, #tpu.memory_space<vmem>>, vector<2x32xf32>,
    %156 = vector.extract_strided_slice %105 {offsets = [74, 0], sizes = [2, 32], strides = [1, 1]} : vector<124x32xf32> to vector<2x32xf32>
    %c0_96 = arith.constant 0 : index
    %c800 = arith.constant 800 : index
    %157 = vector.load %arg13[%c0_96, %c800] : memref<2x1344xf32, #tpu.memory_space<vmem>>, vector<2x32xf32>
    tpu.vector_store %arg13[%c0_96, %c800], %156 {strides = array<i32>} : memref<2x1344xf32, #tpu.memory_space<vmem>>, vector<2x32xf32>,
    %158 = vector.extract_strided_slice %105 {offsets = [76, 0], sizes = [2, 32], strides = [1, 1]} : vector<124x32xf32> to vector<2x32xf32>
    %c0_97 = arith.constant 0 : index
    %c832 = arith.constant 832 : index
    %159 = vector.load %arg13[%c0_97, %c832] : memref<2x1344xf32, #tpu.memory_space<vmem>>, vector<2x32xf32>
    tpu.vector_store %arg13[%c0_97, %c832], %158 {strides = array<i32>} : memref<2x1344xf32, #tpu.memory_space<vmem>>, vector<2x32xf32>,
    %160 = vector.extract_strided_slice %105 {offsets = [78, 0], sizes = [2, 32], strides = [1, 1]} : vector<124x32xf32> to vector<2x32xf32>
    %c0_98 = arith.constant 0 : index
    %c864 = arith.constant 864 : index
    %161 = vector.load %arg13[%c0_98, %c864] : memref<2x1344xf32, #tpu.memory_space<vmem>>, vector<2x32xf32>
    tpu.vector_store %arg13[%c0_98, %c864], %160 {strides = array<i32>} : memref<2x1344xf32, #tpu.memory_space<vmem>>, vector<2x32xf32>,
    %162 = vector.extract_strided_slice %105 {offsets = [88, 0], sizes = [2, 32], strides = [1, 1]} : vector<124x32xf32> to vector<2x32xf32>
    %c0_99 = arith.constant 0 : index
    %c896 = arith.constant 896 : index
    %163 = vector.load %arg13[%c0_99, %c896] : memref<2x1344xf32, #tpu.memory_space<vmem>>, vector<2x32xf32>
    tpu.vector_store %arg13[%c0_99, %c896], %162 {strides = array<i32>} : memref<2x1344xf32, #tpu.memory_space<vmem>>, vector<2x32xf32>,
    %164 = vector.extract_strided_slice %105 {offsets = [90, 0], sizes = [2, 32], strides = [1, 1]} : vector<124x32xf32> to vector<2x32xf32>
    %c0_100 = arith.constant 0 : index
    %c928 = arith.constant 928 : index
    %165 = vector.load %arg13[%c0_100, %c928] : memref<2x1344xf32, #tpu.memory_space<vmem>>, vector<2x32xf32>
    tpu.vector_store %arg13[%c0_100, %c928], %164 {strides = array<i32>} : memref<2x1344xf32, #tpu.memory_space<vmem>>, vector<2x32xf32>,
    %166 = vector.extract_strided_slice %105 {offsets = [92, 0], sizes = [2, 32], strides = [1, 1]} : vector<124x32xf32> to vector<2x32xf32>
    %c0_101 = arith.constant 0 : index
    %c960 = arith.constant 960 : index
    %167 = vector.load %arg13[%c0_101, %c960] : memref<2x1344xf32, #tpu.memory_space<vmem>>, vector<2x32xf32>
    tpu.vector_store %arg13[%c0_101, %c960], %166 {strides = array<i32>} : memref<2x1344xf32, #tpu.memory_space<vmem>>, vector<2x32xf32>,
    %168 = vector.extract_strided_slice %105 {offsets = [94, 0], sizes = [2, 32], strides = [1, 1]} : vector<124x32xf32> to vector<2x32xf32>
    %c0_102 = arith.constant 0 : index
    %c992 = arith.constant 992 : index
    %169 = vector.load %arg13[%c0_102, %c992] : memref<2x1344xf32, #tpu.memory_space<vmem>>, vector<2x32xf32>
    tpu.vector_store %arg13[%c0_102, %c992], %168 {strides = array<i32>} : memref<2x1344xf32, #tpu.memory_space<vmem>>, vector<2x32xf32>,
    %170 = vector.extract_strided_slice %105 {offsets = [96, 0], sizes = [2, 32], strides = [1, 1]} : vector<124x32xf32> to vector<2x32xf32>
    %c0_103 = arith.constant 0 : index
    %c1024 = arith.constant 1024 : index
    %171 = vector.load %arg13[%c0_103, %c1024] : memref<2x1344xf32, #tpu.memory_space<vmem>>, vector<2x32xf32>
    tpu.vector_store %arg13[%c0_103, %c1024], %170 {strides = array<i32>} : memref<2x1344xf32, #tpu.memory_space<vmem>>, vector<2x32xf32>,
    %172 = vector.extract_strided_slice %105 {offsets = [98, 0], sizes = [2, 32], strides = [1, 1]} : vector<124x32xf32> to vector<2x32xf32>
    %c0_104 = arith.constant 0 : index
    %c1056 = arith.constant 1056 : index
    %173 = vector.load %arg13[%c0_104, %c1056] : memref<2x1344xf32, #tpu.memory_space<vmem>>, vector<2x32xf32>
    tpu.vector_store %arg13[%c0_104, %c1056], %172 {strides = array<i32>} : memref<2x1344xf32, #tpu.memory_space<vmem>>, vector<2x32xf32>,
    %174 = vector.extract_strided_slice %105 {offsets = [100, 0], sizes = [2, 32], strides = [1, 1]} : vector<124x32xf32> to vector<2x32xf32>
    %c0_105 = arith.constant 0 : index
    %c1088 = arith.constant 1088 : index
    %175 = vector.load %arg13[%c0_105, %c1088] : memref<2x1344xf32, #tpu.memory_space<vmem>>, vector<2x32xf32>
    tpu.vector_store %arg13[%c0_105, %c1088], %174 {strides = array<i32>} : memref<2x1344xf32, #tpu.memory_space<vmem>>, vector<2x32xf32>,
    %176 = vector.extract_strided_slice %105 {offsets = [110, 0], sizes = [2, 32], strides = [1, 1]} : vector<124x32xf32> to vector<2x32xf32>
    %c0_106 = arith.constant 0 : index
    %c1120 = arith.constant 1120 : index
    %177 = vector.load %arg13[%c0_106, %c1120] : memref<2x1344xf32, #tpu.memory_space<vmem>>, vector<2x32xf32>
    tpu.vector_store %arg13[%c0_106, %c1120], %176 {strides = array<i32>} : memref<2x1344xf32, #tpu.memory_space<vmem>>, vector<2x32xf32>,
    %178 = vector.extract_strided_slice %105 {offsets = [112, 0], sizes = [2, 32], strides = [1, 1]} : vector<124x32xf32> to vector<2x32xf32>
    %c0_107 = arith.constant 0 : index
    %c1152 = arith.constant 1152 : index
    %179 = vector.load %arg13[%c0_107, %c1152] : memref<2x1344xf32, #tpu.memory_space<vmem>>, vector<2x32xf32>
    tpu.vector_store %arg13[%c0_107, %c1152], %178 {strides = array<i32>} : memref<2x1344xf32, #tpu.memory_space<vmem>>, vector<2x32xf32>,
    %180 = vector.extract_strided_slice %105 {offsets = [114, 0], sizes = [2, 32], strides = [1, 1]} : vector<124x32xf32> to vector<2x32xf32>
    %c0_108 = arith.constant 0 : index
    %c1184 = arith.constant 1184 : index
    %181 = vector.load %arg13[%c0_108, %c1184] : memref<2x1344xf32, #tpu.memory_space<vmem>>, vector<2x32xf32>
    tpu.vector_store %arg13[%c0_108, %c1184], %180 {strides = array<i32>} : memref<2x1344xf32, #tpu.memory_space<vmem>>, vector<2x32xf32>,
    %182 = vector.extract_strided_slice %105 {offsets = [116, 0], sizes = [2, 32], strides = [1, 1]} : vector<124x32xf32> to vector<2x32xf32>
    %c0_109 = arith.constant 0 : index
    %c1216 = arith.constant 1216 : index
    %183 = vector.load %arg13[%c0_109, %c1216] : memref<2x1344xf32, #tpu.memory_space<vmem>>, vector<2x32xf32>
    tpu.vector_store %arg13[%c0_109, %c1216], %182 {strides = array<i32>} : memref<2x1344xf32, #tpu.memory_space<vmem>>, vector<2x32xf32>,
    %184 = vector.extract_strided_slice %105 {offsets = [118, 0], sizes = [2, 32], strides = [1, 1]} : vector<124x32xf32> to vector<2x32xf32>
    %c0_110 = arith.constant 0 : index
    %c1248 = arith.constant 1248 : index
    %185 = vector.load %arg13[%c0_110, %c1248] : memref<2x1344xf32, #tpu.memory_space<vmem>>, vector<2x32xf32>
    tpu.vector_store %arg13[%c0_110, %c1248], %184 {strides = array<i32>} : memref<2x1344xf32, #tpu.memory_space<vmem>>, vector<2x32xf32>,
    %186 = vector.extract_strided_slice %105 {offsets = [120, 0], sizes = [2, 32], strides = [1, 1]} : vector<124x32xf32> to vector<2x32xf32>
    %c0_111 = arith.constant 0 : index
    %c1280 = arith.constant 1280 : index
    %187 = vector.load %arg13[%c0_111, %c1280] : memref<2x1344xf32, #tpu.memory_space<vmem>>, vector<2x32xf32>
    tpu.vector_store %arg13[%c0_111, %c1280], %186 {strides = array<i32>} : memref<2x1344xf32, #tpu.memory_space<vmem>>, vector<2x32xf32>,
    %188 = vector.extract_strided_slice %105 {offsets = [122, 0], sizes = [2, 32], strides = [1, 1]} : vector<124x32xf32> to vector<2x32xf32>
    %c0_112 = arith.constant 0 : index
    %c1312 = arith.constant 1312 : index
    %189 = vector.load %arg13[%c0_112, %c1312] : memref<2x1344xf32, #tpu.memory_space<vmem>>, vector<2x32xf32>
    tpu.vector_store %arg13[%c0_112, %c1312], %188 {strides = array<i32>} : memref<2x1344xf32, #tpu.memory_space<vmem>>, vector<2x32xf32>,
    %c0_113 = arith.constant 0 : index
    %c0_114 = arith.constant 0 : index
    %190 = vector.load %arg13[%c0_113, %c0_114] : memref<2x1344xf32, #tpu.memory_space<vmem>>, vector<2x1344xf32>
    %c0_115 = arith.constant 0 : index
    %c0_116 = arith.constant 0 : index
    %191 = vector.load %arg5[%c0_115, %c0_116] : memref<1344x128xbf16, #tpu.memory_space<vmem>>, vector<1344x128xbf16>
    %192 = arith.extf %191 : vector<1344x128xbf16> to vector<1344x128xf32>
    %cst_117 = arith.constant dense<0.000000e+00> : vector<2x128xf32>
    %193 = tpu.matmul %190, %192, %cst_117 {dimension_numbers = #tpu.dot_dimension_numbers<[1], [0], [0], [1], [0, 0, 1, 1], [], []>} : vector<2x1344xf32>, vector<1344x128xf32>, vector<2x128xf32> -> vector<2x128xf32>
    %c0_118 = arith.constant 0 : index
    %c0_119 = arith.constant 0 : index
    %194 = vector.load %arg6[%c0_118, %c0_119] : memref<1x128xf32, #tpu.memory_space<vmem>>, vector<1x128xf32>
    %195 = vector.broadcast %194 : vector<1x128xf32> to vector<2x128xf32>
    %196 = arith.addf %193, %195 : vector<2x128xf32>
    %cst_120 = arith.constant 0.000000e+00 : f32
    %197 = vector.broadcast %cst_120 : f32 to vector<2x128xf32>
    %198 = arith.maximumf %196, %197 : vector<2x128xf32>
    %c0_121 = arith.constant 0 : index
    %c0_122 = arith.constant 0 : index
    %199 = vector.load %arg7[%c0_121, %c0_122] : memref<128x128xbf16, #tpu.memory_space<vmem>>, vector<128x128xbf16>
    %200 = arith.extf %199 : vector<128x128xbf16> to vector<128x128xf32>
    %cst_123 = arith.constant dense<0.000000e+00> : vector<2x128xf32>
    %201 = tpu.matmul %198, %200, %cst_123 {dimension_numbers = #tpu.dot_dimension_numbers<[1], [0], [0], [1], [0, 0, 1, 1], [], []>} : vector<2x128xf32>, vector<128x128xf32>, vector<2x128xf32> -> vector<2x128xf32>
    %c0_124 = arith.constant 0 : index
    %c0_125 = arith.constant 0 : index
    %202 = vector.load %arg8[%c0_124, %c0_125] : memref<1x128xf32, #tpu.memory_space<vmem>>, vector<1x128xf32>
    %203 = vector.broadcast %202 : vector<1x128xf32> to vector<2x128xf32>
    %204 = arith.addf %201, %203 : vector<2x128xf32>
    %cst_126 = arith.constant 0.000000e+00 : f32
    %205 = vector.broadcast %cst_126 : f32 to vector<2x128xf32>
    %206 = arith.maximumf %204, %205 : vector<2x128xf32>
    %c0_127 = arith.constant 0 : index
    %c0_128 = arith.constant 0 : index
    %207 = vector.load %arg9[%c0_127, %c0_128] : memref<128x128xbf16, #tpu.memory_space<vmem>>, vector<128x128xbf16>
    %208 = arith.extf %207 : vector<128x128xbf16> to vector<128x128xf32>
    %cst_129 = arith.constant dense<0.000000e+00> : vector<2x128xf32>
    %209 = tpu.matmul %206, %208, %cst_129 {dimension_numbers = #tpu.dot_dimension_numbers<[1], [0], [0], [1], [0, 0, 1, 1], [], []>} : vector<2x128xf32>, vector<128x128xf32>, vector<2x128xf32> -> vector<2x128xf32>
    %c0_130 = arith.constant 0 : index
    %c0_131 = arith.constant 0 : index
    %210 = vector.load %arg10[%c0_130, %c0_131] : memref<1x128xf32, #tpu.memory_space<vmem>>, vector<1x128xf32>
    %211 = vector.broadcast %210 : vector<1x128xf32> to vector<2x128xf32>
    %212 = arith.addf %209, %211 : vector<2x128xf32>
    %c0_132 = arith.constant 0 : index
    %c0_133 = arith.constant 0 : index
    %213 = vector.load %arg11[%c0_132, %c0_133] : memref<2x128xf32, #tpu.memory_space<vmem>>, vector<2x128xf32>
    tpu.vector_store %arg11[%c0_132, %c0_133], %212 {strides = array<i32>} : memref<2x128xf32, #tpu.memory_space<vmem>>, vector<2x128xf32>,
    return
  }
}

</mosaic_0001>

<llo_original>
// kernel: dqn_forward_pallas.1
$region0: #{dqn_forward_pallas.1}
  #allocation0 [shape = 'u32[]', space=smem, size = 0x4, offset = 0x4, fixed_abs, tag = 'smem constant byte address 0x4 - core index']
  #allocation1 [shape = 'u32[144,128]{1,0:T(1,128)}', space=vmem, size = 0x12000, scoped, tag = 'internal scratch']
  #allocation2 [shape = 'f32[212,160]{1,0:T(8,128)}', space=vmem, size = 0x36000, scoped, tag = 'scratch operand']
  #allocation3 [shape = 'f32[2,1344]{1,0:T(2,128)}', space=vmem, size = 0x2c00, scoped, tag = 'scratch operand']
  %s0 = inlined_call_operand.vmem [shape: f32[84,32], index: 0, kind: input, shape index: {}]
  %s1 = inlined_call_operand.vmem [shape: f32[32,32], index: 1, kind: input, shape index: {}]
  %s2 = inlined_call_operand.vmem [shape: f32[1,32], index: 2, kind: input, shape index: {}]
  %s3 = inlined_call_operand.vmem [shape: bf16[5,160,32], index: 3, kind: input, shape index: {}]
  %s4 = inlined_call_operand.vmem [shape: f32[1,32], index: 4, kind: input, shape index: {}]
  %s5 = inlined_call_operand.vmem [shape: bf16[1344,128], index: 5, kind: input, shape index: {}]
  %s6 = inlined_call_operand.vmem [shape: f32[1,128], index: 6, kind: input, shape index: {}]
  %s7 = inlined_call_operand.vmem [shape: bf16[128,128], index: 7, kind: input, shape index: {}]
  %s8 = inlined_call_operand.vmem [shape: f32[1,128], index: 8, kind: input, shape index: {}]
  %s9 = inlined_call_operand.vmem [shape: bf16[128,128], index: 9, kind: input, shape index: {}]
  %s10 = inlined_call_operand.vmem [shape: f32[1,128], index: 10, kind: input, shape index: {}]
  %s11 = inlined_call_operand.hbm [shape: f32[2,128], index: 11, kind: output, shape index: {}]
  %s12 = sld [smem:[#allocation0]]
  $region54: #{dqn_forward_pallas.1} parent=0
    _
  %s14 = ssub.s32 1, %s12
  %s15 = scalar_select 0, %s14, %s12
  $region1: #{dqn_forward_pallas.1} parent=0
    #allocation4 [shape = 'u8[1024]{0}', space=vmem, size = 0x400, scoped, tag = 'output window, operand 0, single buffered']
    #allocation5 [shape = 's32[1]{0}', space=sflag, size = 0x4, scoped, tag = 'scoped memory for dqn_forward_pallas.1']
    %16 = vsyncpa [#allocation5], 0
    // Predicated region
    $region2: #{dqn_forward_pallas.1} parent=1 // pred_check
      _
    $region3: #{dqn_forward_pallas.1} parent=1 // pred_check_branch
      %18 = sbr.rel (0) target = $region5
    $region4: #{dqn_forward_pallas.1} parent=1 // pred_region
      _
    $region5: #{dqn_forward_pallas.1} parent=1 // pred_fallthru
      _
    // Predicated region
    $region6: #{dqn_forward_pallas.1} parent=1 // pred_check
      _
    $region7: #{dqn_forward_pallas.1} parent=1 // pred_check_branch
      %20 = sbr.rel (0) target = $region9
    $region8: #{dqn_forward_pallas.1} parent=1 // pred_region
      _
    $region9: #{dqn_forward_pallas.1} parent=1 // pred_fallthru
      _
    // Predicated region
    $region10: #{dqn_forward_pallas.1} parent=1 // pred_check
      _
    $region11: #{dqn_forward_pallas.1} parent=1 // pred_check_branch
      %22 = sbr.rel (0) target = $region13
    $region12: #{dqn_forward_pallas.1} parent=1 // pred_region
      _
    $region13: #{dqn_forward_pallas.1} parent=1 // pred_fallthru
      _
    // Predicated region
    $region14: #{dqn_forward_pallas.1} parent=1 // pred_check
      _
    $region15: #{dqn_forward_pallas.1} parent=1 // pred_check_branch
      %24 = sbr.rel (0) target = $region17
    $region16: #{dqn_forward_pallas.1} parent=1 // pred_region
      _
    $region17: #{dqn_forward_pallas.1} parent=1 // pred_fallthru
      _
    // Predicated region
    $region18: #{dqn_forward_pallas.1} parent=1 // pred_check
      _
    $region19: #{dqn_forward_pallas.1} parent=1 // pred_check_branch
      %26 = sbr.rel (0) target = $region21
    $region20: #{dqn_forward_pallas.1} parent=1 // pred_region
      _
    $region21: #{dqn_forward_pallas.1} parent=1 // pred_fallthru
      _
    // Predicated region
    $region22: #{dqn_forward_pallas.1} parent=1 // pred_check
      _
    $region23: #{dqn_forward_pallas.1} parent=1 // pred_check_branch
      %28 = sbr.rel (0) target = $region25
    $region24: #{dqn_forward_pallas.1} parent=1 // pred_region
      _
    $region25: #{dqn_forward_pallas.1} parent=1 // pred_fallthru
      _
    // Predicated region
    $region26: #{dqn_forward_pallas.1} parent=1 // pred_check
      _
    $region27: #{dqn_forward_pallas.1} parent=1 // pred_check_branch
      %30 = sbr.rel (0) target = $region29
    $region28: #{dqn_forward_pallas.1} parent=1 // pred_region
      _
    $region29: #{dqn_forward_pallas.1} parent=1 // pred_fallthru
      _
    // Predicated region
    $region30: #{dqn_forward_pallas.1} parent=1 // pred_check
      _
    $region31: #{dqn_forward_pallas.1} parent=1 // pred_check_branch
      %32 = sbr.rel (0) target = $region33
    $region32: #{dqn_forward_pallas.1} parent=1 // pred_region
      _
    $region33: #{dqn_forward_pallas.1} parent=1 // pred_fallthru
      _
    // Predicated region
    $region34: #{dqn_forward_pallas.1} parent=1 // pred_check
      _
    $region35: #{dqn_forward_pallas.1} parent=1 // pred_check_branch
      %34 = sbr.rel (0) target = $region37
    $region36: #{dqn_forward_pallas.1} parent=1 // pred_region
      _
    $region37: #{dqn_forward_pallas.1} parent=1 // pred_fallthru
      _
    // Predicated region
    $region38: #{dqn_forward_pallas.1} parent=1 // pred_check
      _
    $region39: #{dqn_forward_pallas.1} parent=1 // pred_check_branch
      %36 = sbr.rel (0) target = $region41
    $region40: #{dqn_forward_pallas.1} parent=1 // pred_region
      _
    $region41: #{dqn_forward_pallas.1} parent=1 // pred_fallthru
      _
    // Predicated region
    $region42: #{dqn_forward_pallas.1} parent=1 // pred_check
      _
    $region43: #{dqn_forward_pallas.1} parent=1 // pred_check_branch
      %38 = sbr.rel (0) target = $region45
    $region44: #{dqn_forward_pallas.1} parent=1 // pred_region
      _
    $region45: #{dqn_forward_pallas.1} parent=1 // pred_fallthru
      _
    %v39 = vld [vmem:[%s0] sm:$0xff]
    %v40 = vld [vmem:[%s0 + $0x8] sm:$0xff]
    %v41 = vld [vmem:[%s0 + $0x10] sm:$0xff]
    %v42 = vld [vmem:[%s0 + $0x18] sm:$0xff]
    %v43 = vld [vmem:[%s0 + $0x20] sm:$0xff]
    %v44 = vld [vmem:[%s0 + $0x28] sm:$0xff]
    %v45 = vld [vmem:[%s0 + $0x30] sm:$0xff]
    %v46 = vld [vmem:[%s0 + $0x38] sm:$0xff]
    %v47 = vld [vmem:[%s0 + $0x40] sm:$0xff]
    %v48 = vld [vmem:[%s0 + $0x48] sm:$0xff]
    %v49 = vld [vmem:[%s0 + $0x50] sm:$0xf]
    %v50 = vld [vmem:[%s1] sm:$0xff]
    %v51 = vld [vmem:[%s1 + $0x8] sm:$0xff]
    %v52 = vld [vmem:[%s1 + $0x10] sm:$0xff]
    %v53 = vld [vmem:[%s1 + $0x18] sm:$0xff]
    %v54 = vld [vmem:[%s2] sm:$0x1]
    %v56 = vlaneseq
    %v57 = vshrl.u32 %v56, 7
    %v58 = vsub.s32 0, %v57
    %v59 = vrot.slane %v54, %v58
    %vm61 = vcmask 261120
    %v63 = vsel %vm61, %v39, 0
    %v66 = vsel %vm61, %v40, 0
    %v69 = vsel %vm61, %v41, 0
    %v72 = vsel %vm61, %v42, 0
    %v75 = vsel %vm61, %v43, 0
    %v78 = vsel %vm61, %v44, 0
    %v81 = vsel %vm61, %v45, 0
    %v84 = vsel %vm61, %v46, 0
    %v87 = vsel %vm61, %v47, 0
    %v90 = vsel %vm61, %v48, 0
    %v93 = vsel %vm61, %v49, 0
    %95 = vmatprep.subr.mxu0 0.0
    %96 = vmatpush1.msra.mxu0 %v50
    %97 = vmatprep.subr.mxu0 0.0
    %98 = vmatpush1.msra.mxu0 %v51
    %99 = vmatprep.subr.mxu0 0.0
    %100 = vmatpush1.msra.mxu0 %v52
    %101 = vmatprep.subr.mxu0 0.0
    %102 = vmatpush1.msra.mxu0 %v53
    %103 = vmatprep.subr.mxu0 0.0
    %104 = vmatpush1.msra.mxu0 0.0
    %105 = vmatprep.subr.mxu0 0.0
    %106 = vmatpush1.msra.mxu0 0.0
    %107 = vmatprep.subr.mxu0 0.0
    %108 = vmatpush1.msra.mxu0 0.0
    %109 = vmatprep.subr.mxu0 0.0
    %110 = vmatpush1.msra.mxu0 0.0
    %111 = vmatprep.subr.mxu0 0.0
    %112 = vmatpush1.msra.mxu0 0.0
    %113 = vmatprep.subr.mxu0 0.0
    %114 = vmatpush1.msra.mxu0 0.0
    %115 = vmatprep.subr.mxu0 0.0
    %116 = vmatpush1.msra.mxu0 0.0
    %117 = vmatprep.subr.mxu0 0.0
    %118 = vmatpush1.msra.mxu0 0.0
    %119 = vmatprep.subr.mxu0 0.0
    %120 = vmatpush1.msra.mxu0 0.0
    %121 = vmatprep.subr.mxu0 0.0
    %122 = vmatpush1.msra.mxu0 0.0
    %123 = vmatprep.subr.mxu0 0.0
    %124 = vmatpush1.msra.mxu0 0.0
    %125 = vmatprep.subr.mxu0 0.0
    %126 = vmatpush1.msra.mxu0 0.0
    %127 = vmatprep.subr.mxu0 0.0
    %128 = vmatpush1.msra.mxu0 0.0
    %129 = vmatprep.subr.mxu0 0.0
    %130 = vmatpush1.msra.mxu0 0.0
    %131 = vmatprep.subr.mxu0 0.0
    %132 = vmatpush1.msra.mxu0 0.0
    %133 = vmatprep.subr.mxu0 0.0
    %134 = vmatpush1.msra.mxu0 0.0
    %135 = vmatprep.subr.mxu0 0.0
    %136 = vmatpush1.msra.mxu0 0.0
    %137 = vmatprep.subr.mxu0 0.0
    %138 = vmatpush1.msra.mxu0 0.0
    %139 = vmatprep.subr.mxu0 0.0
    %140 = vmatpush1.msra.mxu0 0.0
    %141 = vmatprep.subr.mxu0 0.0
    %142 = vmatpush1.msra.mxu0 0.0
    %143 = vmatprep.subr.mxu0 0.0
    %144 = vmatpush1.msra.mxu0 0.0
    %145 = vmatprep.subr.mxu0 0.0
    %146 = vmatpush1.msra.mxu0 0.0
    %147 = vmatprep.subr.mxu0 0.0
    %148 = vmatpush1.msra.mxu0 0.0
    %149 = vmatprep.subr.mxu0 0.0
    %150 = vmatpush1.msra.mxu0 0.0
    %151 = vmatprep.subr.mxu0 0.0
    %152 = vmatpush1.msra.mxu0 0.0
    %153 = vmatprep.subr.mxu0 0.0
    %154 = vmatpush1.msra.mxu0 0.0
    %155 = vmatprep.subr.mxu0 0.0
    %156 = vmatpush1.msra.mxu0 0.0
    %157 = vmatprep.subr.mxu0 0.0
    %158 = vmatpush1.msra.mxu0 0.0
    %159 = vmatprep.mubr.f32.mxu0 0.0
    %160 = vmatmul.mubr.f32.gmra.mrb[0].mxu0 %v63
    %v161 = vpop.f32.mrb[0].mxu0
    %v162 = vadd.f32 %v59, %v161
    %v163 = vpop.f32.mrb[0].mxu0
    %164 = vmatprep.mubr.f32.mxu0 0.0
    %165 = vmatmul.mubr.f32.gmra.mrb[0].mxu0 %v66
    %v166 = vpop.f32.mrb[0].mxu0
    %v167 = vadd.f32 %v59, %v166
    %v168 = vpop.f32.mrb[0].mxu0
    %169 = vmatprep.mubr.f32.mxu0 0.0
    %170 = vmatmul.mubr.f32.gmra.mrb[0].mxu0 %v69
    %v171 = vpop.f32.mrb[0].mxu0
    %v172 = vadd.f32 %v59, %v171
    %v173 = vpop.f32.mrb[0].mxu0
    %174 = vmatprep.mubr.f32.mxu0 0.0
    %175 = vmatmul.mubr.f32.gmra.mrb[0].mxu0 %v72
    %v176 = vpop.f32.mrb[0].mxu0
    %v177 = vadd.f32 %v59, %v176
    %v178 = vpop.f32.mrb[0].mxu0
    %179 = vmatprep.mubr.f32.mxu0 0.0
    %180 = vmatmul.mubr.f32.gmra.mrb[0].mxu0 %v75
    %v181 = vpop.f32.mrb[0].mxu0
    %v182 = vadd.f32 %v59, %v181
    %v183 = vpop.f32.mrb[0].mxu0
    %184 = vmatprep.mubr.f32.mxu0 0.0
    %185 = vmatmul.mubr.f32.gmra.mrb[0].mxu0 %v78
    %v186 = vpop.f32.mrb[0].mxu0
    %v187 = vadd.f32 %v59, %v186
    %v188 = vpop.f32.mrb[0].mxu0
    %189 = vmatprep.mubr.f32.mxu0 0.0
    %190 = vmatmul.mubr.f32.gmra.mrb[0].mxu0 %v81
    %v191 = vpop.f32.mrb[0].mxu0
    %v192 = vadd.f32 %v59, %v191
    %v193 = vpop.f32.mrb[0].mxu0
    %194 = vmatprep.mubr.f32.mxu0 0.0
    %195 = vmatmul.mubr.f32.gmra.mrb[0].mxu0 %v84
    %v196 = vpop.f32.mrb[0].mxu0
    %v197 = vadd.f32 %v59, %v196
    %v198 = vpop.f32.mrb[0].mxu0
    %199 = vmatprep.mubr.f32.mxu0 0.0
    %200 = vmatmul.mubr.f32.gmra.mrb[0].mxu0 %v87
    %v201 = vpop.f32.mrb[0].mxu0
    %v202 = vadd.f32 %v59, %v201
    %v203 = vpop.f32.mrb[0].mxu0
    %204 = vmatprep.mubr.f32.mxu0 0.0
    %205 = vmatmul.mubr.f32.gmra.mrb[0].mxu0 %v90
    %v206 = vpop.f32.mrb[0].mxu0
    %v207 = vadd.f32 %v59, %v206
    %v208 = vpop.f32.mrb[0].mxu0
    %209 = vmatprep.mubr.f32.mxu0 0.0
    %210 = vmatmul.mubr.f32.gmra.mrb[0].mxu0 %v93
    %v211 = vpop.f32.mrb[0].mxu0
    %v212 = vadd.f32 %v59, %v211
    %v213 = vpop.f32.mrb[0].mxu0
    %214 = vdwg.mxu0
    %v215 = vmax.f32 %v162, 0.0
    %v216 = vmax.f32 %v167, 0.0
    %v217 = vmax.f32 %v172, 0.0
    %v218 = vmax.f32 %v177, 0.0
    %v219 = vmax.f32 %v182, 0.0
    %v220 = vmax.f32 %v187, 0.0
    %v221 = vmax.f32 %v192, 0.0
    %v222 = vmax.f32 %v197, 0.0
    %v223 = vmax.f32 %v202, 0.0
    %v224 = vmax.f32 %v207, 0.0
    %v225 = vmax.f32 %v212, 0.0
    %226 = vst [vmem:[#allocation2] sm:$0xff] 0.0
    %227 = vst.msk [vmem:[#allocation2 + $0x8] sm:$0xff] %vm61, 0.0
    %228 = vst [vmem:[#allocation2 + $0x10] sm:$0xff] 0.0
    %229 = vst.msk [vmem:[#allocation2 + $0x18] sm:$0xff] %vm61, 0.0
    %230 = vst [vmem:[#allocation2 + $0x20] sm:$0xff] 0.0
    %231 = vst.msk [vmem:[#allocation2 + $0x28] sm:$0xff] %vm61, 0.0
    %232 = vst [vmem:[#allocation2 + $0x30] sm:$0xff] 0.0
    %233 = vst.msk [vmem:[#allocation2 + $0x38] sm:$0xff] %vm61, 0.0
    %234 = vst [vmem:[#allocation2 + $0x40] sm:$0xff] 0.0
    %235 = vst.msk [vmem:[#allocation2 + $0x48] sm:$0xff] %vm61, 0.0
    %236 = vst [vmem:[#allocation2 + $0x50] sm:$0xff] 0.0
    %237 = vst.msk [vmem:[#allocation2 + $0x58] sm:$0xff] %vm61, 0.0
    %238 = vst [vmem:[#allocation2 + $0x60] sm:$0xff] 0.0
    %239 = vst.msk [vmem:[#allocation2 + $0x68] sm:$0xff] %vm61, 0.0
    %240 = vst [vmem:[#allocation2 + $0x70] sm:$0xff] 0.0
    %241 = vst.msk [vmem:[#allocation2 + $0x78] sm:$0xff] %vm61, 0.0
    %242 = vst [vmem:[#allocation2 + $0x80] sm:$0xff] 0.0
    %243 = vst.msk [vmem:[#allocation2 + $0x88] sm:$0xff] %vm61, 0.0
    %244 = vst [vmem:[#allocation2 + $0x90] sm:$0xff] 0.0
    %245 = vst.msk [vmem:[#allocation2 + $0x98] sm:$0xff] %vm61, 0.0
    %246 = vst [vmem:[#allocation2 + $0xa0] sm:$0xff] 0.0
    %247 = vst.msk [vmem:[#allocation2 + $0xa8] sm:$0xff] %vm61, 0.0
    %248 = vst [vmem:[#allocation2 + $0xb0] sm:$0xff] 0.0
    %249 = vst.msk [vmem:[#allocation2 + $0xb8] sm:$0xff] %vm61, 0.0
    %250 = vst [vmem:[#allocation2 + $0xc0] sm:$0xff] 0.0
    %251 = vst.msk [vmem:[#allocation2 + $0xc8] sm:$0xff] %vm61, 0.0
    %252 = vst [vmem:[#allocation2 + $0xd0] sm:$0xff] 0.0
    %253 = vst.msk [vmem:[#allocation2 + $0xd8] sm:$0xff] %vm61, 0.0
    %254 = vst [vmem:[#allocation2 + $0xe0] sm:$0xff] 0.0
    %255 = vst.msk [vmem:[#allocation2 + $0xe8] sm:$0xff] %vm61, 0.0
    %256 = vst [vmem:[#allocation2 + $0xf0] sm:$0xff] 0.0
    %257 = vst.msk [vmem:[#allocation2 + $0xf8] sm:$0xff] %vm61, 0.0
    %258 = vst [vmem:[#allocation2 + $0x100] sm:$0xff] 0.0
    %259 = vst.msk [vmem:[#allocation2 + $0x108] sm:$0xff] %vm61, 0.0
    %260 = vst [vmem:[#allocation2 + $0x110] sm:$0xff] 0.0
    %261 = vst.msk [vmem:[#allocation2 + $0x118] sm:$0xff] %vm61, 0.0
    %262 = vst [vmem:[#allocation2 + $0x120] sm:$0xff] 0.0
    %263 = vst.msk [vmem:[#allocation2 + $0x128] sm:$0xff] %vm61, 0.0
    %264 = vst [vmem:[#allocation2 + $0x130] sm:$0xff] 0.0
    %265 = vst.msk [vmem:[#allocation2 + $0x138] sm:$0xff] %vm61, 0.0
    %266 = vst [vmem:[#allocation2 + $0x140] sm:$0xff] 0.0
    %267 = vst.msk [vmem:[#allocation2 + $0x148] sm:$0xff] %vm61, 0.0
    %268 = vst [vmem:[#allocation2 + $0x150] sm:$0xff] 0.0
    %269 = vst.msk [vmem:[#allocation2 + $0x158] sm:$0xff] %vm61, 0.0
    %270 = vst [vmem:[#allocation2 + $0x160] sm:$0xff] 0.0
    %271 = vst.msk [vmem:[#allocation2 + $0x168] sm:$0xff] %vm61, 0.0
    %272 = vst [vmem:[#allocation2 + $0x170] sm:$0xff] 0.0
    %273 = vst.msk [vmem:[#allocation2 + $0x178] sm:$0xff] %vm61, 0.0
    %274 = vst [vmem:[#allocation2 + $0x180] sm:$0xff] 0.0
    %275 = vst.msk [vmem:[#allocation2 + $0x188] sm:$0xff] %vm61, 0.0
    %276 = vst [vmem:[#allocation2 + $0x190] sm:$0xff] 0.0
    %277 = vst.msk [vmem:[#allocation2 + $0x198] sm:$0xff] %vm61, 0.0
    %278 = vst [vmem:[#allocation2 + $0x1a0] sm:$0xf] 0.0
    %vm279 = vcmask 257024
    %280 = vst.msk [vmem:[#allocation2 + $0x1a8] sm:$0xf] %vm279, 0.0
    %281 = vst.msk [vmem:[#allocation2 + $0x60] sm:$0xff] %vm61, %v215
    %vm282 = vcmask 259072
    %283 = vst.msk [vmem:[#allocation2 + $0x70] sm:$0x3f] %vm282, %v216
    %vm284 = vcmask 261126
    %285 = vst.msk [vmem:[#allocation2 + $0x80] sm:$0xc0] %vm284, %v216
    %286 = vst.msk [vmem:[#allocation2 + $0x90] sm:$0xff] %vm61, %v217
    %287 = vst.msk [vmem:[#allocation2 + $0xa0] sm:$0xf] %vm279, %v218
    %vm288 = vcmask 261124
    %289 = vst.msk [vmem:[#allocation2 + $0xb0] sm:$0xf0] %vm288, %v218
    %290 = vst.msk [vmem:[#allocation2 + $0xc0] sm:$0xff] %vm61, %v219
    %vm291 = vcmask 254976
    %292 = vst.msk [vmem:[#allocation2 + $0xd0] sm:$0x3] %vm291, %v220
    %vm293 = vcmask 261122
    %294 = vst.msk [vmem:[#allocation2 + $0xe0] sm:$0xfc] %vm293, %v220
    %295 = vst.msk [vmem:[#allocation2 + $0xf0] sm:$0xff] %vm61, %v221
    %296 = vst.msk [vmem:[#allocation2 + $0x110] sm:$0xff] %vm61, %v222
    %297 = vst.msk [vmem:[#allocation2 + $0x120] sm:$0x3f] %vm282, %v223
    %298 = vst.msk [vmem:[#allocation2 + $0x130] sm:$0xc0] %vm284, %v223
    %299 = vst.msk [vmem:[#allocation2 + $0x140] sm:$0xff] %vm61, %v224
    %300 = vst.msk [vmem:[#allocation2 + $0x150] sm:$0xf] %vm279, %v225
    %vm303 = vcmask 1045504
    %v304 = vrot.slane %v215, 2
    %v305 = vrot.slane %v216, 2
    %v306 = vsel %vm303, %v304, %v305
    %307 = vrot.lane.b32.xlu0 %v304, 32
    %v308 = vpop.permute.xlu0 %307
    %309 = vrot.lane.b32.xlu0 %v306, 32
    %v310 = vpop.permute.xlu0 %309
    %311 = vrot.lane.b32.xlu0 %v305, 32
    %v312 = vpop.permute.xlu0 %311
    %vm316 = vcmask 523526
    %317 = vst.msk [vmem:[#allocation2 + $0x50] sm:$0xc0] %vm316, %v308
    %vm318 = vcmask 523520
    %319 = vst.msk [vmem:[#allocation2 + $0x60] sm:$0xff] %vm318, %v310
    %vm320 = vcmask 519424
    %321 = vst.msk [vmem:[#allocation2 + $0x70] sm:$0xf] %vm320, %v312
    %v324 = vrot.slane %v217, 2
    %v325 = vsel %vm303, %v305, %v324
    %v326 = vrot.slane %v218, 2
    %v327 = vsel %vm303, %v324, %v326
    %328 = vrot.lane.b32.xlu0 %v325, 32
    %v329 = vpop.permute.xlu0 %328
    %330 = vrot.lane.b32.xlu0 %v327, 32
    %v331 = vpop.permute.xlu0 %330
    %332 = vrot.lane.b32.xlu0 %v326, 32
    %v333 = vpop.permute.xlu0 %332
    %vm337 = vcmask 523524
    %338 = vst.msk [vmem:[#allocation2 + $0x80] sm:$0xf0] %vm337, %v329
    %339 = vst.msk [vmem:[#allocation2 + $0x90] sm:$0xff] %vm318, %v331
    %vm340 = vcmask 517376
    %341 = vst.msk [vmem:[#allocation2 + $0xa0] sm:$0x3] %vm340, %v333
    %v344 = vrot.slane %v219, 2
    %v345 = vsel %vm303, %v326, %v344
    %v346 = vrot.slane %v220, 2
    %v347 = vsel %vm303, %v344, %v346
    %348 = vrot.lane.b32.xlu0 %v345, 32
    %v349 = vpop.permute.xlu0 %348
    %350 = vrot.lane.b32.xlu0 %v347, 32
    %v351 = vpop.permute.xlu0 %350
    %vm354 = vcmask 523522
    %355 = vst.msk [vmem:[#allocation2 + $0xb0] sm:$0xfc] %vm354, %v349
    %356 = vst.msk [vmem:[#allocation2 + $0xc0] sm:$0xff] %vm318, %v351
    %v358 = vrot.slane %v221, 2
    %v359 = vsel %vm303, %v346, %v358
    %360 = vrot.lane.b32.xlu0 %v359, 32
    %v361 = vpop.permute.xlu0 %360
    %362 = vrot.lane.b32.xlu0 %v358, 32
    %v363 = vpop.permute.xlu0 %362
    %366 = vst.msk [vmem:[#allocation2 + $0xe0] sm:$0xff] %vm318, %v361
    %vm367 = vcmask 521472
    %368 = vst.msk [vmem:[#allocation2 + $0xf0] sm:$0x3f] %vm367, %v363
    %v371 = vrot.slane %v222, 2
    %v372 = vrot.slane %v223, 2
    %v373 = vsel %vm303, %v371, %v372
    %374 = vrot.lane.b32.xlu0 %v371, 32
    %v375 = vpop.permute.xlu0 %374
    %376 = vrot.lane.b32.xlu0 %v373, 32
    %v377 = vpop.permute.xlu0 %376
    %378 = vrot.lane.b32.xlu0 %v372, 32
    %v379 = vpop.permute.xlu0 %378
    %383 = vst.msk [vmem:[#allocation2 + $0x100] sm:$0xc0] %vm316, %v375
    %384 = vst.msk [vmem:[#allocation2 + $0x110] sm:$0xff] %vm318, %v377
    %385 = vst.msk [vmem:[#allocation2 + $0x120] sm:$0xf] %vm320, %v379
    %v388 = vrot.slane %v224, 2
    %v389 = vsel %vm303, %v372, %v388
    %v390 = vrot.slane %v225, 2
    %v391 = vsel %vm303, %v388, %v390
    %392 = vrot.lane.b32.xlu0 %v389, 32
    %v393 = vpop.permute.xlu0 %392
    %394 = vrot.lane.b32.xlu0 %v391, 32
    %v395 = vpop.permute.xlu0 %394
    %396 = vrot.lane.b32.xlu0 %v390, 32
    %v397 = vpop.permute.xlu0 %396
    %401 = vst.msk [vmem:[#allocation2 + $0x130] sm:$0xf0] %vm337, %v393
    %402 = vst.msk [vmem:[#allocation2 + $0x140] sm:$0xff] %vm318, %v395
    %403 = vst.msk [vmem:[#allocation2 + $0x150] sm:$0x3] %vm340, %v397
    %vm404 = vcmask 1043456
    %v405 = vrot.slane %v215, 4
    %v406 = vrot.slane %v216, 4
    %v407 = vsel %vm404, %v405, %v406
    %408 = vrot.lane.b32.xlu0 %v405, 64
    %v409 = vpop.permute.xlu0 %408
    %410 = vrot.lane.b32.xlu0 %v407, 64
    %v411 = vpop.permute.xlu0 %410
    %412 = vrot.lane.b32.xlu0 %v406, 64
    %v413 = vpop.permute.xlu0 %412
    %vm417 = vcmask 785924
    %418 = vst.msk [vmem:[#allocation2 + $0x50] sm:$0xf0] %vm417, %v409
    %vm419 = vcmask 785920
    %420 = vst.msk [vmem:[#allocation2 + $0x60] sm:$0xff] %vm419, %v411
    %vm421 = vcmask 779776
    %422 = vst.msk [vmem:[#allocation2 + $0x70] sm:$0x3] %vm421, %v413
    %v423 = vrot.slane %v217, 4
    %v424 = vsel %vm404, %v406, %v423
    %v425 = vrot.slane %v218, 4
    %v426 = vsel %vm404, %v423, %v425
    %427 = vrot.lane.b32.xlu0 %v424, 64
    %v428 = vpop.permute.xlu0 %427
    %429 = vrot.lane.b32.xlu0 %v426, 64
    %v430 = vpop.permute.xlu0 %429
    %vm433 = vcmask 785922
    %434 = vst.msk [vmem:[#allocation2 + $0x80] sm:$0xfc] %vm433, %v428
    %435 = vst.msk [vmem:[#allocation2 + $0x90] sm:$0xff] %vm419, %v430
    %v436 = vrot.slane %v219, 4
    %v437 = vsel %vm404, %v425, %v436
    %v438 = vrot.slane %v220, 4
    %v439 = vsel %vm404, %v436, %v438
    %440 = vrot.lane.b32.xlu0 %v437, 64
    %v441 = vpop.permute.xlu0 %440
    %442 = vrot.lane.b32.xlu0 %v439, 64
    %v443 = vpop.permute.xlu0 %442
    %446 = vst.msk [vmem:[#allocation2 + $0xb0] sm:$0xff] %vm419, %v441
    %vm447 = vcmask 783872
    %448 = vst.msk [vmem:[#allocation2 + $0xc0] sm:$0x3f] %vm447, %v443
    %v449 = vrot.slane %v221, 4
    %v450 = vsel %vm404, %v438, %v449
    %451 = vrot.lane.b32.xlu0 %v438, 64
    %v452 = vpop.permute.xlu0 %451
    %453 = vrot.lane.b32.xlu0 %v450, 64
    %v454 = vpop.permute.xlu0 %453
    %455 = vrot.lane.b32.xlu0 %v449, 64
    %v456 = vpop.permute.xlu0 %455
    %vm460 = vcmask 785926
    %461 = vst.msk [vmem:[#allocation2 + $0xd0] sm:$0xc0] %vm460, %v452
    %462 = vst.msk [vmem:[#allocation2 + $0xe0] sm:$0xff] %vm419, %v454
    %vm463 = vcmask 781824
    %464 = vst.msk [vmem:[#allocation2 + $0xf0] sm:$0xf] %vm463, %v456
    %v465 = vrot.slane %v222, 4
    %v466 = vrot.slane %v223, 4
    %v467 = vsel %vm404, %v465, %v466
    %468 = vrot.lane.b32.xlu0 %v465, 64
    %v469 = vpop.permute.xlu0 %468
    %470 = vrot.lane.b32.xlu0 %v467, 64
    %v471 = vpop.permute.xlu0 %470
    %472 = vrot.lane.b32.xlu0 %v466, 64
    %v473 = vpop.permute.xlu0 %472
    %477 = vst.msk [vmem:[#allocation2 + $0x100] sm:$0xf0] %vm417, %v469
    %478 = vst.msk [vmem:[#allocation2 + $0x110] sm:$0xff] %vm419, %v471
    %479 = vst.msk [vmem:[#allocation2 + $0x120] sm:$0x3] %vm421, %v473
    %v480 = vrot.slane %v224, 4
    %v481 = vsel %vm404, %v466, %v480
    %v482 = vrot.slane %v225, 4
    %v483 = vsel %vm404, %v480, %v482
    %484 = vrot.lane.b32.xlu0 %v481, 64
    %v485 = vpop.permute.xlu0 %484
    %486 = vrot.lane.b32.xlu0 %v483, 64
    %v487 = vpop.permute.xlu0 %486
    %490 = vst.msk [vmem:[#allocation2 + $0x130] sm:$0xfc] %vm433, %v485
    %491 = vst.msk [vmem:[#allocation2 + $0x140] sm:$0xff] %vm419, %v487
    %vm492 = vcmask 1041408
    %v493 = vrot.slane %v215, 6
    %v494 = vrot.slane %v216, 6
    %v495 = vsel %vm492, %v493, %v494
    %496 = vrot.lane.b32.xlu0 %v493, 96
    %v497 = vpop.permute.xlu0 %496
    %498 = vrot.lane.b32.xlu0 %v495, 96
    %v499 = vpop.permute.xlu0 %498
    %vm502 = vcmask 1048322
    %503 = vst.msk [vmem:[#allocation2 + $0x50] sm:$0xfc] %vm502, %v497
    %vm504 = vcmask 1048320
    %505 = vst.msk [vmem:[#allocation2 + $0x60] sm:$0xff] %vm504, %v499
    %v506 = vrot.slane %v217, 6
    %v507 = vsel %vm492, %v494, %v506
    %v508 = vrot.slane %v218, 6
    %v509 = vsel %vm492, %v506, %v508
    %510 = vrot.lane.b32.xlu0 %v507, 96
    %v511 = vpop.permute.xlu0 %510
    %512 = vrot.lane.b32.xlu0 %v509, 96
    %v513 = vpop.permute.xlu0 %512
    %516 = vst.msk [vmem:[#allocation2 + $0x80] sm:$0xff] %vm504, %v511
    %vm517 = vcmask 1046272
    %518 = vst.msk [vmem:[#allocation2 + $0x90] sm:$0x3f] %vm517, %v513
    %v519 = vrot.slane %v219, 6
    %v520 = vsel %vm492, %v508, %v519
    %v521 = vrot.slane %v220, 6
    %v522 = vsel %vm492, %v519, %v521
    %523 = vrot.lane.b32.xlu0 %v508, 96
    %v524 = vpop.permute.xlu0 %523
    %525 = vrot.lane.b32.xlu0 %v520, 96
    %v526 = vpop.permute.xlu0 %525
    %527 = vrot.lane.b32.xlu0 %v522, 96
    %v528 = vpop.permute.xlu0 %527
    %vm532 = vcmask 1048326
    %533 = vst.msk [vmem:[#allocation2 + $0xa0] sm:$0xc0] %vm532, %v524
    %534 = vst.msk [vmem:[#allocation2 + $0xb0] sm:$0xff] %vm504, %v526
    %vm535 = vcmask 1044224
    %536 = vst.msk [vmem:[#allocation2 + $0xc0] sm:$0xf] %vm535, %v528
    %v537 = vrot.slane %v221, 6
    %v538 = vsel %vm492, %v521, %v537
    %539 = vrot.lane.b32.xlu0 %v521, 96
    %v540 = vpop.permute.xlu0 %539
    %541 = vrot.lane.b32.xlu0 %v538, 96
    %v542 = vpop.permute.xlu0 %541
    %543 = vrot.lane.b32.xlu0 %v537, 96
    %v544 = vpop.permute.xlu0 %543
    %vm548 = vcmask 1048324
    %549 = vst.msk [vmem:[#allocation2 + $0xd0] sm:$0xf0] %vm548, %v540
    %550 = vst.msk [vmem:[#allocation2 + $0xe0] sm:$0xff] %vm504, %v542
    %vm551 = vcmask 1042176
    %552 = vst.msk [vmem:[#allocation2 + $0xf0] sm:$0x3] %vm551, %v544
    %v553 = vrot.slane %v222, 6
    %v554 = vrot.slane %v223, 6
    %v555 = vsel %vm492, %v553, %v554
    %556 = vrot.lane.b32.xlu0 %v553, 96
    %v557 = vpop.permute.xlu0 %556
    %558 = vrot.lane.b32.xlu0 %v555, 96
    %v559 = vpop.permute.xlu0 %558
    %562 = vst.msk [vmem:[#allocation2 + $0x100] sm:$0xfc] %vm502, %v557
    %563 = vst.msk [vmem:[#allocation2 + $0x110] sm:$0xff] %vm504, %v559
    %v564 = vrot.slane %v224, 6
    %v565 = vsel %vm492, %v554, %v564
    %v566 = vrot.slane %v225, 6
    %v567 = vsel %vm492, %v564, %v566
    %568 = vrot.lane.b32.xlu0 %v565, 96
    %v569 = vpop.permute.xlu0 %568
    %570 = vrot.lane.b32.xlu0 %v567, 96
    %v571 = vpop.permute.xlu0 %570
    %574 = vst.msk [vmem:[#allocation2 + $0x130] sm:$0xff] %vm504, %v569
    %575 = vst.msk [vmem:[#allocation2 + $0x140] sm:$0x3f] %vm517, %v571
    %576 = vst.msk [vmem:[#allocation2 + $0x58] sm:$0xff] %vm61, %v215
    %577 = vst.msk [vmem:[#allocation2 + $0x68] sm:$0x3f] %vm282, %v216
    %578 = vst.msk [vmem:[#allocation2 + $0x78] sm:$0xc0] %vm284, %v216
    %579 = vst.msk [vmem:[#allocation2 + $0x88] sm:$0xff] %vm61, %v217
    %580 = vst.msk [vmem:[#allocation2 + $0x98] sm:$0xf] %vm279, %v218
    %581 = vst.msk [vmem:[#allocation2 + $0xa8] sm:$0xf0] %vm288, %v218
    %582 = vst.msk [vmem:[#allocation2 + $0xb8] sm:$0xff] %vm61, %v219
    %583 = vst.msk [vmem:[#allocation2 + $0xc8] sm:$0x3] %vm291, %v220
    %584 = vst.msk [vmem:[#allocation2 + $0xd8] sm:$0xfc] %vm293, %v220
    %585 = vst.msk [vmem:[#allocation2 + $0xe8] sm:$0xff] %vm61, %v221
    %586 = vst.msk [vmem:[#allocation2 + $0x108] sm:$0xff] %vm61, %v222
    %587 = vst.msk [vmem:[#allocation2 + $0x118] sm:$0x3f] %vm282, %v223
    %588 = vst.msk [vmem:[#allocation2 + $0x128] sm:$0xc0] %vm284, %v223
    %589 = vst.msk [vmem:[#allocation2 + $0x138] sm:$0xff] %vm61, %v224
    %590 = vst.msk [vmem:[#allocation2 + $0x148] sm:$0xf] %vm279, %v225
    %v591 = vld [vmem:[#allocation2] sm:$0xff]
    %v592 = vld [vmem:[#allocation2 + $0x8] sm:$0xff]
    %v593 = vld [vmem:[#allocation2 + $0x10] sm:$0xff]
    %v594 = vld [vmem:[#allocation2 + $0x18] sm:$0xff]
    %v595 = vld [vmem:[#allocation2 + $0x20] sm:$0xff]
    %v596 = vld [vmem:[#allocation2 + $0x28] sm:$0xff]
    %v597 = vld [vmem:[#allocation2 + $0x30] sm:$0xff]
    %v598 = vld [vmem:[#allocation2 + $0x38] sm:$0xff]
    %v599 = vld [vmem:[#allocation2 + $0x40] sm:$0xff]
    %v600 = vld [vmem:[#allocation2 + $0x48] sm:$0xff]
    %v601 = vld [vmem:[#allocation2 + $0x50] sm:$0xff]
    %v602 = vld [vmem:[#allocation2 + $0x58] sm:$0xff]
    %v603 = vld [vmem:[#allocation2 + $0x60] sm:$0xff]
    %v604 = vld [vmem:[#allocation2 + $0x68] sm:$0xff]
    %v605 = vld [vmem:[#allocation2 + $0x70] sm:$0xff]
    %v606 = vld [vmem:[#allocation2 + $0x78] sm:$0xff]
    %v607 = vld [vmem:[#allocation2 + $0x80] sm:$0xff]
    %v608 = vld [vmem:[#allocation2 + $0x88] sm:$0xff]
    %v609 = vld [vmem:[#allocation2 + $0x90] sm:$0xff]
    %v610 = vld [vmem:[#allocation2 + $0x98] sm:$0xff]
    %v611 = vld [vmem:[#allocation2 + $0xa0] sm:$0xff]
    %v612 = vld [vmem:[#allocation2 + $0xa8] sm:$0xff]
    %v613 = vld [vmem:[#allocation2 + $0xb0] sm:$0xff]
    %v614 = vld [vmem:[#allocation2 + $0xb8] sm:$0xff]
    %v615 = vld [vmem:[#allocation2 + $0xc0] sm:$0xff]
    %v616 = vld [vmem:[#allocation2 + $0xc8] sm:$0xff]
    %v617 = vld [vmem:[#allocation2 + $0xd0] sm:$0xff]
    %v618 = vld [vmem:[#allocation2 + $0xd8] sm:$0xff]
    %v619 = vld [vmem:[#allocation2 + $0xe0] sm:$0xff]
    %v620 = vld [vmem:[#allocation2 + $0xe8] sm:$0xff]
    %v621 = vld [vmem:[#allocation2 + $0xf0] sm:$0xf]
    %v622 = vld [vmem:[#allocation2 + $0xf8] sm:$0xf]
    %v623 = vld [vmem:[%s3] sm:$0xf]
    %v624 = vld [vmem:[%s3 + $0x4] sm:$0xf]
    %v625 = vld [vmem:[%s3 + $0x8] sm:$0xf]
    %v626 = vld [vmem:[%s3 + $0xc] sm:$0xf]
    %v627 = vld [vmem:[%s3 + $0x10] sm:$0xf]
    %v628 = vld [vmem:[%s3 + $0x14] sm:$0xf]
    %v629 = vld [vmem:[%s3 + $0x18] sm:$0xf]
    %v630 = vld [vmem:[%s3 + $0x1c] sm:$0xf]
    %v631 = vld [vmem:[%s3 + $0x20] sm:$0xf]
    %v632 = vld [vmem:[%s3 + $0x24] sm:$0xf]
    %v633 = vld [vmem:[%s3 + $0x28] sm:$0xf]
    %v634 = vld [vmem:[%s3 + $0x2c] sm:$0xf]
    %v635 = vld [vmem:[%s3 + $0x30] sm:$0xf]
    %v636 = vld [vmem:[%s3 + $0x34] sm:$0xf]
    %v637 = vld [vmem:[%s3 + $0x38] sm:$0xf]
    %v638 = vld [vmem:[%s3 + $0x3c] sm:$0xf]
    %v639 = vld [vmem:[%s3 + $0x40] sm:$0xf]
    %v640 = vld [vmem:[%s3 + $0x44] sm:$0xf]
    %v641 = vld [vmem:[%s3 + $0x48] sm:$0xf]
    %v642 = vld [vmem:[%s3 + $0x4c] sm:$0xf]
    %v643 = vunpack.c.l.bf16 %v623
    %v644 = vunpack.c.l.bf16 %v624
    %v645 = vunpack.c.l.bf16 %v625
    %v646 = vunpack.c.l.bf16 %v626
    %v647 = vunpack.c.l.bf16 %v627
    %v648 = vunpack.c.l.bf16 %v628
    %v649 = vunpack.c.l.bf16 %v629
    %v650 = vunpack.c.l.bf16 %v630
    %v651 = vunpack.c.l.bf16 %v631
    %v652 = vunpack.c.l.bf16 %v632
    %v653 = vunpack.c.l.bf16 %v633
    %v654 = vunpack.c.l.bf16 %v634
    %v655 = vunpack.c.l.bf16 %v635
    %v656 = vunpack.c.l.bf16 %v636
    %v657 = vunpack.c.l.bf16 %v637
    %v658 = vunpack.c.l.bf16 %v638
    %v659 = vunpack.c.l.bf16 %v639
    %v660 = vunpack.c.l.bf16 %v640
    %v661 = vunpack.c.l.bf16 %v641
    %v662 = vunpack.c.l.bf16 %v642
    %v663 = vld [vmem:[#allocation2 + $0x20] sm:$0xc0]
    %v664 = vld [vmem:[#allocation2 + $0x28] sm:$0xc0]
    %v665 = vld [vmem:[#allocation2 + $0xf0] sm:$0xff]
    %v666 = vld [vmem:[#allocation2 + $0xf8] sm:$0xff]
    %v667 = vld [vmem:[#allocation2 + $0x100] sm:$0xff]
    %v668 = vld [vmem:[#allocation2 + $0x108] sm:$0xff]
    %v669 = vld [vmem:[#allocation2 + $0x110] sm:$0xff]
    %v670 = vld [vmem:[#allocation2 + $0x118] sm:$0xff]
    %v671 = vld [vmem:[#allocation2 + $0x120] sm:$0x3]
    %v672 = vld [vmem:[#allocation2 + $0x128] sm:$0x3]
    %s673 = scalar_lea.vmem %s3, 80
    %v674 = vld [vmem:[%s673] sm:$0xf]
    %v675 = vld [vmem:[%s673 + $0x4] sm:$0xf]
    %v676 = vld [vmem:[%s673 + $0x8] sm:$0xf]
    %v677 = vld [vmem:[%s673 + $0xc] sm:$0xf]
    %v678 = vld [vmem:[%s673 + $0x10] sm:$0xf]
    %v679 = vld [vmem:[%s673 + $0x14] sm:$0xf]
    %v680 = vld [vmem:[%s673 + $0x18] sm:$0xf]
    %v681 = vld [vmem:[%s673 + $0x1c] sm:$0xf]
    %v682 = vld [vmem:[%s673 + $0x20] sm:$0xf]
    %v683 = vld [vmem:[%s673 + $0x24] sm:$0xf]
    %v684 = vld [vmem:[%s673 + $0x28] sm:$0xf]
    %v685 = vld [vmem:[%s673 + $0x2c] sm:$0xf]
    %v686 = vld [vmem:[%s673 + $0x30] sm:$0xf]
    %v687 = vld [vmem:[%s673 + $0x34] sm:$0xf]
    %v688 = vld [vmem:[%s673 + $0x38] sm:$0xf]
    %v689 = vld [vmem:[%s673 + $0x3c] sm:$0xf]
    %v690 = vld [vmem:[%s673 + $0x40] sm:$0xf]
    %v691 = vld [vmem:[%s673 + $0x44] sm:$0xf]
    %v692 = vld [vmem:[%s673 + $0x48] sm:$0xf]
    %v693 = vld [vmem:[%s673 + $0x4c] sm:$0xf]
    %v694 = vunpack.c.l.bf16 %v674
    %v695 = vunpack.c.l.bf16 %v675
    %v696 = vunpack.c.l.bf16 %v676
    %v697 = vunpack.c.l.bf16 %v677
    %v698 = vunpack.c.l.bf16 %v678
    %v699 = vunpack.c.l.bf16 %v679
    %v700 = vunpack.c.l.bf16 %v680
    %v701 = vunpack.c.l.bf16 %v681
    %v702 = vunpack.c.l.bf16 %v682
    %v703 = vunpack.c.l.bf16 %v683
    %v704 = vunpack.c.l.bf16 %v684
    %v705 = vunpack.c.l.bf16 %v685
    %v706 = vunpack.c.l.bf16 %v686
    %v707 = vunpack.c.l.bf16 %v687
    %v708 = vunpack.c.l.bf16 %v688
    %v709 = vunpack.c.l.bf16 %v689
    %v710 = vunpack.c.l.bf16 %v690
    %v711 = vunpack.c.l.bf16 %v691
    %v712 = vunpack.c.l.bf16 %v692
    %v713 = vunpack.c.l.bf16 %v693
    %v748 = vrot.slane %v663, 6
    %v749 = vrot.slane %v597, 6
    %v750 = vsel %vm492, %v748, %v749
    %v751 = vrot.slane %v664, 6
    %v752 = vrot.slane %v598, 6
    %v753 = vsel %vm492, %v751, %v752
    %v754 = vrot.slane %v599, 6
    %v755 = vsel %vm492, %v749, %v754
    %v756 = vrot.slane %v600, 6
    %v757 = vsel %vm492, %v752, %v756
    %v758 = vrot.slane %v601, 6
    %v759 = vsel %vm492, %v754, %v758
    %v760 = vrot.slane %v602, 6
    %v761 = vsel %vm492, %v756, %v760
    %v762 = vrot.slane %v603, 6
    %v763 = vsel %vm492, %v758, %v762
    %v764 = vrot.slane %v604, 6
    %v765 = vsel %vm492, %v760, %v764
    %v766 = vrot.slane %v605, 6
    %v767 = vsel %vm492, %v762, %v766
    %v768 = vrot.slane %v606, 6
    %v769 = vsel %vm492, %v764, %v768
    %v770 = vrot.slane %v607, 6
    %v771 = vsel %vm492, %v766, %v770
    %v772 = vrot.slane %v608, 6
    %v773 = vsel %vm492, %v768, %v772
    %v774 = vrot.slane %v609, 6
    %v775 = vsel %vm492, %v770, %v774
    %v776 = vrot.slane %v610, 6
    %v777 = vsel %vm492, %v772, %v776
    %v778 = vrot.slane %v611, 6
    %v779 = vsel %vm492, %v774, %v778
    %v780 = vrot.slane %v612, 6
    %v781 = vsel %vm492, %v776, %v780
    %v782 = vrot.slane %v613, 6
    %v783 = vsel %vm492, %v778, %v782
    %v784 = vrot.slane %v614, 6
    %v785 = vsel %vm492, %v780, %v784
    %v786 = vrot.slane %v615, 6
    %v787 = vsel %vm492, %v782, %v786
    %v788 = vrot.slane %v616, 6
    %v789 = vsel %vm492, %v784, %v788
    %v790 = vrot.slane %v617, 6
    %v791 = vsel %vm492, %v786, %v790
    %v792 = vrot.slane %v618, 6
    %v793 = vsel %vm492, %v788, %v792
    %v794 = vrot.slane %v619, 6
    %v795 = vsel %vm492, %v790, %v794
    %v796 = vrot.slane %v620, 6
    %v797 = vsel %vm492, %v792, %v796
    %v798 = vrot.slane %v665, 6
    %v799 = vsel %vm492, %v794, %v798
    %v800 = vrot.slane %v666, 6
    %v801 = vsel %vm492, %v796, %v800
    %v802 = vrot.slane %v667, 6
    %v803 = vsel %vm492, %v798, %v802
    %v804 = vrot.slane %v668, 6
    %v805 = vsel %vm492, %v800, %v804
    %v806 = vrot.slane %v669, 6
    %v807 = vsel %vm492, %v802, %v806
    %v808 = vrot.slane %v670, 6
    %v809 = vsel %vm492, %v804, %v808
    %v810 = vrot.slane %v671, 6
    %v811 = vsel %vm492, %v806, %v810
    %v812 = vrot.slane %v672, 6
    %v813 = vsel %vm492, %v808, %v812
    %v830 = vsel %vm61, %v753, 0
    %v832 = vsel %vm61, %v757, 0
    %v834 = vsel %vm61, %v761, 0
    %v836 = vsel %vm61, %v765, 0
    %v838 = vsel %vm61, %v769, 0
    %v840 = vsel %vm61, %v773, 0
    %v842 = vsel %vm61, %v777, 0
    %v844 = vsel %vm61, %v781, 0
    %v846 = vsel %vm61, %v785, 0
    %v848 = vsel %vm61, %v789, 0
    %v850 = vsel %vm61, %v793, 0
    %v852 = vsel %vm61, %v797, 0
    %v854 = vsel %vm61, %v801, 0
    %v856 = vsel %vm61, %v805, 0
    %v858 = vsel %vm61, %v809, 0
    %v860 = vsel %vm61, %v813, 0
    %862 = vmatprep.subr.mxu0 0.0
    %863 = vmatpush1.msra.mxu0 %v694
    %864 = vmatprep.subr.mxu0 0.0
    %865 = vmatpush1.msra.mxu0 %v695
    %866 = vmatprep.subr.mxu0 0.0
    %867 = vmatpush1.msra.mxu0 %v696
    %868 = vmatprep.subr.mxu0 0.0
    %869 = vmatpush1.msra.mxu0 %v697
    %870 = vmatprep.subr.mxu0 0.0
    %871 = vmatpush1.msra.mxu0 %v698
    %872 = vmatprep.subr.mxu0 0.0
    %873 = vmatpush1.msra.mxu0 %v699
    %874 = vmatprep.subr.mxu0 0.0
    %875 = vmatpush1.msra.mxu0 %v700
    %876 = vmatprep.subr.mxu0 0.0
    %877 = vmatpush1.msra.mxu0 %v701
    %878 = vmatprep.subr.mxu0 0.0
    %879 = vmatpush1.msra.mxu0 %v702
    %880 = vmatprep.subr.mxu0 0.0
    %881 = vmatpush1.msra.mxu0 %v703
    %882 = vmatprep.subr.mxu0 0.0
    %883 = vmatpush1.msra.mxu0 %v704
    %884 = vmatprep.subr.mxu0 0.0
    %885 = vmatpush1.msra.mxu0 %v705
    %886 = vmatprep.subr.mxu0 0.0
    %887 = vmatpush1.msra.mxu0 %v706
    %888 = vmatprep.subr.mxu0 0.0
    %889 = vmatpush1.msra.mxu0 %v707
    %890 = vmatprep.subr.mxu0 0.0
    %891 = vmatpush1.msra.mxu0 %v708
    %892 = vmatprep.subr.mxu0 0.0
    %893 = vmatpush1.msra.mxu0 %v709
    %894 = vmatprep.subr.mxu0 0.0
    %895 = vmatpush1.msra.mxu0 %v710
    %896 = vmatprep.subr.mxu0 0.0
    %897 = vmatpush1.msra.mxu0 %v711
    %898 = vmatprep.subr.mxu0 0.0
    %899 = vmatpush1.msra.mxu0 %v712
    %900 = vmatprep.subr.mxu0 0.0
    %901 = vmatpush1.msra.mxu0 %v713
    %902 = vmatprep.subr.mxu0 0.0
    %903 = vmatpush1.msra.mxu0 0.0
    %904 = vmatprep.subr.mxu0 0.0
    %905 = vmatpush1.msra.mxu0 0.0
    %906 = vmatprep.subr.mxu0 0.0
    %907 = vmatpush1.msra.mxu0 0.0
    %908 = vmatprep.subr.mxu0 0.0
    %909 = vmatpush1.msra.mxu0 0.0
    %910 = vmatprep.subr.mxu0 0.0
    %911 = vmatpush1.msra.mxu0 0.0
    %912 = vmatprep.subr.mxu0 0.0
    %913 = vmatpush1.msra.mxu0 0.0
    %914 = vmatprep.subr.mxu0 0.0
    %915 = vmatpush1.msra.mxu0 0.0
    %916 = vmatprep.subr.mxu0 0.0
    %917 = vmatpush1.msra.mxu0 0.0
    %918 = vmatprep.subr.mxu0 0.0
    %919 = vmatpush1.msra.mxu0 0.0
    %920 = vmatprep.subr.mxu0 0.0
    %921 = vmatpush1.msra.mxu0 0.0
    %922 = vmatprep.subr.mxu0 0.0
    %923 = vmatpush1.msra.mxu0 0.0
    %924 = vmatprep.subr.mxu0 0.0
    %925 = vmatpush1.msra.mxu0 0.0
    %926 = vmatprep.mubr.f32.mxu0 %v830
    %927 = vmatmul.mubr.f32.gmra.mrb[0].mxu0 %v750
    %v928 = vpop.f32.mrb[0].mxu0
    %v929 = vadd.f32 0.0, %v928
    %v930 = vpop.f32.mrb[0].mxu0
    %931 = vmatprep.mubr.f32.mxu0 %v832
    %932 = vmatmul.mubr.f32.gmra.mrb[0].mxu0 %v755
    %v933 = vpop.f32.mrb[0].mxu0
    %v934 = vadd.f32 0.0, %v933
    %v935 = vpop.f32.mrb[0].mxu0
    %936 = vmatprep.mubr.f32.mxu0 %v834
    %937 = vmatmul.mubr.f32.gmra.mrb[0].mxu0 %v759
    %v938 = vpop.f32.mrb[0].mxu0
    %v939 = vadd.f32 0.0, %v938
    %v940 = vpop.f32.mrb[0].mxu0
    %941 = vmatprep.mubr.f32.mxu0 %v836
    %942 = vmatmul.mubr.f32.gmra.mrb[0].mxu0 %v763
    %v943 = vpop.f32.mrb[0].mxu0
    %v944 = vadd.f32 0.0, %v943
    %v945 = vpop.f32.mrb[0].mxu0
    %946 = vmatprep.mubr.f32.mxu0 %v838
    %947 = vmatmul.mubr.f32.gmra.mrb[0].mxu0 %v767
    %v948 = vpop.f32.mrb[0].mxu0
    %v949 = vadd.f32 0.0, %v948
    %v950 = vpop.f32.mrb[0].mxu0
    %951 = vmatprep.mubr.f32.mxu0 %v840
    %952 = vmatmul.mubr.f32.gmra.mrb[0].mxu0 %v771
    %v953 = vpop.f32.mrb[0].mxu0
    %v954 = vadd.f32 0.0, %v953
    %v955 = vpop.f32.mrb[0].mxu0
    %956 = vmatprep.mubr.f32.mxu0 %v842
    %957 = vmatmul.mubr.f32.gmra.mrb[0].mxu0 %v775
    %v958 = vpop.f32.mrb[0].mxu0
    %v959 = vadd.f32 0.0, %v958
    %v960 = vpop.f32.mrb[0].mxu0
    %961 = vmatprep.mubr.f32.mxu0 %v844
    %962 = vmatmul.mubr.f32.gmra.mrb[0].mxu0 %v779
    %v963 = vpop.f32.mrb[0].mxu0
    %v964 = vadd.f32 0.0, %v963
    %v965 = vpop.f32.mrb[0].mxu0
    %966 = vmatprep.mubr.f32.mxu0 %v846
    %967 = vmatmul.mubr.f32.gmra.mrb[0].mxu0 %v783
    %v968 = vpop.f32.mrb[0].mxu0
    %v969 = vadd.f32 0.0, %v968
    %v970 = vpop.f32.mrb[0].mxu0
    %971 = vmatprep.mubr.f32.mxu0 %v848
    %972 = vmatmul.mubr.f32.gmra.mrb[0].mxu0 %v787
    %v973 = vpop.f32.mrb[0].mxu0
    %v974 = vadd.f32 0.0, %v973
    %v975 = vpop.f32.mrb[0].mxu0
    %976 = vmatprep.mubr.f32.mxu0 %v850
    %977 = vmatmul.mubr.f32.gmra.mrb[0].mxu0 %v791
    %v978 = vpop.f32.mrb[0].mxu0
    %v979 = vpop.f32.mrb[0].mxu0
    %980 = vmatprep.mubr.f32.mxu0 %v852
    %981 = vmatmul.mubr.f32.gmra.mrb[0].mxu0 %v795
    %v982 = vpop.f32.mrb[0].mxu0
    %v983 = vadd.f32 0.0, %v982
    %v984 = vpop.f32.mrb[0].mxu0
    %985 = vmatprep.mubr.f32.mxu0 %v854
    %986 = vmatmul.mubr.f32.gmra.mrb[0].mxu0 %v799
    %v987 = vpop.f32.mrb[0].mxu0
    %v988 = vadd.f32 0.0, %v987
    %v989 = vpop.f32.mrb[0].mxu0
    %990 = vmatprep.mubr.f32.mxu0 %v856
    %991 = vmatmul.mubr.f32.gmra.mrb[0].mxu0 %v803
    %v992 = vpop.f32.mrb[0].mxu0
    %v993 = vadd.f32 0.0, %v992
    %v994 = vpop.f32.mrb[0].mxu0
    %995 = vmatprep.mubr.f32.mxu0 %v858
    %996 = vmatmul.mubr.f32.gmra.mrb[0].mxu0 %v807
    %v997 = vpop.f32.mrb[0].mxu0
    %v998 = vadd.f32 0.0, %v997
    %v999 = vpop.f32.mrb[0].mxu0
    %1000 = vmatprep.mubr.f32.mxu0 %v860
    %1001 = vmatmul.mubr.f32.gmra.mrb[0].mxu0 %v811
    %v1002 = vpop.f32.mrb[0].mxu0
    %v1003 = vadd.f32 0.0, %v1002
    %v1004 = vpop.f32.mrb[0].mxu0
    %1005 = vdwg.mxu0
    %v1007 = vsel %vm61, %v592, 0
    %v1010 = vsel %vm61, %v594, 0
    %v1013 = vsel %vm61, %v596, 0
    %v1015 = vsel %vm61, %v598, 0
    %v1017 = vsel %vm61, %v600, 0
    %v1019 = vsel %vm61, %v602, 0
    %v1021 = vsel %vm61, %v604, 0
    %v1023 = vsel %vm61, %v606, 0
    %v1025 = vsel %vm61, %v608, 0
    %v1027 = vsel %vm61, %v610, 0
    %v1029 = vsel %vm61, %v612, 0
    %v1031 = vsel %vm61, %v614, 0
    %v1033 = vsel %vm61, %v616, 0
    %v1035 = vsel %vm61, %v618, 0
    %v1037 = vsel %vm61, %v620, 0
    %v1040 = vsel %vm61, %v622, 0
    %1042 = vmatprep.subr.mxu0 0.0
    %1043 = vmatpush1.msra.mxu0 %v643
    %1044 = vmatprep.subr.mxu0 0.0
    %1045 = vmatpush1.msra.mxu0 %v644
    %1046 = vmatprep.subr.mxu0 0.0
    %1047 = vmatpush1.msra.mxu0 %v645
    %1048 = vmatprep.subr.mxu0 0.0
    %1049 = vmatpush1.msra.mxu0 %v646
    %1050 = vmatprep.subr.mxu0 0.0
    %1051 = vmatpush1.msra.mxu0 %v647
    %1052 = vmatprep.subr.mxu0 0.0
    %1053 = vmatpush1.msra.mxu0 %v648
    %1054 = vmatprep.subr.mxu0 0.0
    %1055 = vmatpush1.msra.mxu0 %v649
    %1056 = vmatprep.subr.mxu0 0.0
    %1057 = vmatpush1.msra.mxu0 %v650
    %1058 = vmatprep.subr.mxu0 0.0
    %1059 = vmatpush1.msra.mxu0 %v651
    %1060 = vmatprep.subr.mxu0 0.0
    %1061 = vmatpush1.msra.mxu0 %v652
    %1062 = vmatprep.subr.mxu0 0.0
    %1063 = vmatpush1.msra.mxu0 %v653
    %1064 = vmatprep.subr.mxu0 0.0
    %1065 = vmatpush1.msra.mxu0 %v654
    %1066 = vmatprep.subr.mxu0 0.0
    %1067 = vmatpush1.msra.mxu0 %v655
    %1068 = vmatprep.subr.mxu0 0.0
    %1069 = vmatpush1.msra.mxu0 %v656
    %1070 = vmatprep.subr.mxu0 0.0
    %1071 = vmatpush1.msra.mxu0 %v657
    %1072 = vmatprep.subr.mxu0 0.0
    %1073 = vmatpush1.msra.mxu0 %v658
    %1074 = vmatprep.subr.mxu0 0.0
    %1075 = vmatpush1.msra.mxu0 %v659
    %1076 = vmatprep.subr.mxu0 0.0
    %1077 = vmatpush1.msra.mxu0 %v660
    %1078 = vmatprep.subr.mxu0 0.0
    %1079 = vmatpush1.msra.mxu0 %v661
    %1080 = vmatprep.subr.mxu0 0.0
    %1081 = vmatpush1.msra.mxu0 %v662
    %1082 = vmatprep.subr.mxu0 0.0
    %1083 = vmatpush1.msra.mxu0 0.0
    %1084 = vmatprep.subr.mxu0 0.0
    %1085 = vmatpush1.msra.mxu0 0.0
    %1086 = vmatprep.subr.mxu0 0.0
    %1087 = vmatpush1.msra.mxu0 0.0
    %1088 = vmatprep.subr.mxu0 0.0
    %1089 = vmatpush1.msra.mxu0 0.0
    %1090 = vmatprep.subr.mxu0 0.0
    %1091 = vmatpush1.msra.mxu0 0.0
    %1092 = vmatprep.subr.mxu0 0.0
    %1093 = vmatpush1.msra.mxu0 0.0
    %1094 = vmatprep.subr.mxu0 0.0
    %1095 = vmatpush1.msra.mxu0 0.0
    %1096 = vmatprep.subr.mxu0 0.0
    %1097 = vmatpush1.msra.mxu0 0.0
    %1098 = vmatprep.subr.mxu0 0.0
    %1099 = vmatpush1.msra.mxu0 0.0
    %1100 = vmatprep.subr.mxu0 0.0
    %1101 = vmatpush1.msra.mxu0 0.0
    %1102 = vmatprep.subr.mxu0 0.0
    %1103 = vmatpush1.msra.mxu0 0.0
    %1104 = vmatprep.subr.mxu0 0.0
    %1105 = vmatpush1.msra.mxu0 0.0
    %1106 = vmatprep.mubr.f32.mxu0 %v1007
    %1107 = vmatmul.mubr.f32.gmra.mrb[0].mxu0 %v591
    %v1108 = vpop.f32.mrb[0].mxu0
    %v1109 = vadd.f32 %v929, %v1108
    %v1110 = vpop.f32.mrb[0].mxu0
    %1111 = vmatprep.mubr.f32.mxu0 %v1010
    %1112 = vmatmul.mubr.f32.gmra.mrb[0].mxu0 %v593
    %v1113 = vpop.f32.mrb[0].mxu0
    %v1114 = vadd.f32 %v934, %v1113
    %v1115 = vpop.f32.mrb[0].mxu0
    %1116 = vmatprep.mubr.f32.mxu0 %v1013
    %1117 = vmatmul.mubr.f32.gmra.mrb[0].mxu0 %v595
    %v1118 = vpop.f32.mrb[0].mxu0
    %v1119 = vadd.f32 %v939, %v1118
    %v1120 = vpop.f32.mrb[0].mxu0
    %1121 = vmatprep.mubr.f32.mxu0 %v1015
    %1122 = vmatmul.mubr.f32.gmra.mrb[0].mxu0 %v597
    %v1123 = vpop.f32.mrb[0].mxu0
    %v1124 = vadd.f32 %v944, %v1123
    %v1125 = vpop.f32.mrb[0].mxu0
    %1126 = vmatprep.mubr.f32.mxu0 %v1017
    %1127 = vmatmul.mubr.f32.gmra.mrb[0].mxu0 %v599
    %v1128 = vpop.f32.mrb[0].mxu0
    %v1129 = vadd.f32 %v949, %v1128
    %v1130 = vpop.f32.mrb[0].mxu0
    %1131 = vmatprep.mubr.f32.mxu0 %v1019
    %1132 = vmatmul.mubr.f32.gmra.mrb[0].mxu0 %v601
    %v1133 = vpop.f32.mrb[0].mxu0
    %v1134 = vadd.f32 %v954, %v1133
    %v1135 = vpop.f32.mrb[0].mxu0
    %1136 = vmatprep.mubr.f32.mxu0 %v1021
    %1137 = vmatmul.mubr.f32.gmra.mrb[0].mxu0 %v603
    %v1138 = vpop.f32.mrb[0].mxu0
    %v1139 = vadd.f32 %v959, %v1138
    %v1140 = vpop.f32.mrb[0].mxu0
    %1141 = vmatprep.mubr.f32.mxu0 %v1023
    %1142 = vmatmul.mubr.f32.gmra.mrb[0].mxu0 %v605
    %v1143 = vpop.f32.mrb[0].mxu0
    %v1144 = vadd.f32 %v964, %v1143
    %v1145 = vpop.f32.mrb[0].mxu0
    %1146 = vmatprep.mubr.f32.mxu0 %v1025
    %1147 = vmatmul.mubr.f32.gmra.mrb[0].mxu0 %v607
    %v1148 = vpop.f32.mrb[0].mxu0
    %v1149 = vadd.f32 %v969, %v1148
    %v1150 = vpop.f32.mrb[0].mxu0
    %1151 = vmatprep.mubr.f32.mxu0 %v1027
    %1152 = vmatmul.mubr.f32.gmra.mrb[0].mxu0 %v609
    %v1153 = vpop.f32.mrb[0].mxu0
    %v1154 = vadd.f32 %v974, %v1153
    %v1155 = vpop.f32.mrb[0].mxu0
    %1156 = vmatprep.mubr.f32.mxu0 %v1029
    %1157 = vmatmul.mubr.f32.gmra.mrb[0].mxu0 %v611
    %v1158 = vpop.f32.mrb[0].mxu0
    %v1159 = vpop.f32.mrb[0].mxu0
    %1160 = vmatprep.mubr.f32.mxu0 %v1031
    %1161 = vmatmul.mubr.f32.gmra.mrb[0].mxu0 %v613
    %v1162 = vpop.f32.mrb[0].mxu0
    %v1163 = vadd.f32 %v983, %v1162
    %v1164 = vpop.f32.mrb[0].mxu0
    %1165 = vmatprep.mubr.f32.mxu0 %v1033
    %1166 = vmatmul.mubr.f32.gmra.mrb[0].mxu0 %v615
    %v1167 = vpop.f32.mrb[0].mxu0
    %v1168 = vadd.f32 %v988, %v1167
    %v1169 = vpop.f32.mrb[0].mxu0
    %1170 = vmatprep.mubr.f32.mxu0 %v1035
    %1171 = vmatmul.mubr.f32.gmra.mrb[0].mxu0 %v617
    %v1172 = vpop.f32.mrb[0].mxu0
    %v1173 = vadd.f32 %v993, %v1172
    %v1174 = vpop.f32.mrb[0].mxu0
    %1175 = vmatprep.mubr.f32.mxu0 %v1037
    %1176 = vmatmul.mubr.f32.gmra.mrb[0].mxu0 %v619
    %v1177 = vpop.f32.mrb[0].mxu0
    %v1178 = vadd.f32 %v998, %v1177
    %v1179 = vpop.f32.mrb[0].mxu0
    %1180 = vmatprep.mubr.f32.mxu0 %v1040
    %1181 = vmatmul.mubr.f32.gmra.mrb[0].mxu0 %v621
    %v1182 = vpop.f32.mrb[0].mxu0
    %v1183 = vadd.f32 %v1003, %v1182
    %v1184 = vpop.f32.mrb[0].mxu0
    %1185 = vdwg.mxu0
    %v1186 = vld [vmem:[#allocation2 + $0x50] sm:$0xf0]
    %v1187 = vld [vmem:[#allocation2 + $0x58] sm:$0xf0]
    %v1188 = vld [vmem:[#allocation2 + $0x60] sm:$0xff]
    %v1189 = vld [vmem:[#allocation2 + $0x68] sm:$0xff]
    %v1190 = vld [vmem:[#allocation2 + $0x70] sm:$0xff]
    %v1191 = vld [vmem:[#allocation2 + $0x78] sm:$0xff]
    %v1192 = vld [vmem:[#allocation2 + $0x80] sm:$0xff]
    %v1193 = vld [vmem:[#allocation2 + $0x88] sm:$0xff]
    %v1194 = vld [vmem:[#allocation2 + $0x90] sm:$0xff]
    %v1195 = vld [vmem:[#allocation2 + $0x98] sm:$0xff]
    %v1196 = vld [vmem:[#allocation2 + $0xa0] sm:$0xff]
    %v1197 = vld [vmem:[#allocation2 + $0xa8] sm:$0xff]
    %v1198 = vld [vmem:[#allocation2 + $0xb0] sm:$0xff]
    %v1199 = vld [vmem:[#allocation2 + $0xb8] sm:$0xff]
    %v1200 = vld [vmem:[#allocation2 + $0xc0] sm:$0xff]
    %v1201 = vld [vmem:[#allocation2 + $0xc8] sm:$0xff]
    %v1202 = vld [vmem:[#allocation2 + $0xd0] sm:$0xff]
    %v1203 = vld [vmem:[#allocation2 + $0xd8] sm:$0xff]
    %v1204 = vld [vmem:[#allocation2 + $0xe0] sm:$0xff]
    %v1205 = vld [vmem:[#allocation2 + $0xe8] sm:$0xff]
    %v1206 = vld [vmem:[#allocation2 + $0xf0] sm:$0xff]
    %v1207 = vld [vmem:[#allocation2 + $0xf8] sm:$0xff]
    %v1208 = vld [vmem:[#allocation2 + $0x100] sm:$0xff]
    %v1209 = vld [vmem:[#allocation2 + $0x108] sm:$0xff]
    %v1210 = vld [vmem:[#allocation2 + $0x110] sm:$0xff]
    %v1211 = vld [vmem:[#allocation2 + $0x118] sm:$0xff]
    %v1212 = vld [vmem:[#allocation2 + $0x120] sm:$0xff]
    %v1213 = vld [vmem:[#allocation2 + $0x128] sm:$0xff]
    %v1214 = vld [vmem:[#allocation2 + $0x130] sm:$0xff]
    %v1215 = vld [vmem:[#allocation2 + $0x138] sm:$0xff]
    %v1216 = vld [vmem:[#allocation2 + $0x140] sm:$0xff]
    %v1217 = vld [vmem:[#allocation2 + $0x148] sm:$0xff]
    %s1218 = scalar_lea.vmem %s3, 160
    %v1219 = vld [vmem:[%s1218] sm:$0xf]
    %v1220 = vld [vmem:[%s1218 + $0x4] sm:$0xf]
    %v1221 = vld [vmem:[%s1218 + $0x8] sm:$0xf]
    %v1222 = vld [vmem:[%s1218 + $0xc] sm:$0xf]
    %v1223 = vld [vmem:[%s1218 + $0x10] sm:$0xf]
    %v1224 = vld [vmem:[%s1218 + $0x14] sm:$0xf]
    %v1225 = vld [vmem:[%s1218 + $0x18] sm:$0xf]
    %v1226 = vld [vmem:[%s1218 + $0x1c] sm:$0xf]
    %v1227 = vld [vmem:[%s1218 + $0x20] sm:$0xf]
    %v1228 = vld [vmem:[%s1218 + $0x24] sm:$0xf]
    %v1229 = vld [vmem:[%s1218 + $0x28] sm:$0xf]
    %v1230 = vld [vmem:[%s1218 + $0x2c] sm:$0xf]
    %v1231 = vld [vmem:[%s1218 + $0x30] sm:$0xf]
    %v1232 = vld [vmem:[%s1218 + $0x34] sm:$0xf]
    %v1233 = vld [vmem:[%s1218 + $0x38] sm:$0xf]
    %v1234 = vld [vmem:[%s1218 + $0x3c] sm:$0xf]
    %v1235 = vld [vmem:[%s1218 + $0x40] sm:$0xf]
    %v1236 = vld [vmem:[%s1218 + $0x44] sm:$0xf]
    %v1237 = vld [vmem:[%s1218 + $0x48] sm:$0xf]
    %v1238 = vld [vmem:[%s1218 + $0x4c] sm:$0xf]
    %v1239 = vunpack.c.l.bf16 %v1219
    %v1240 = vunpack.c.l.bf16 %v1220
    %v1241 = vunpack.c.l.bf16 %v1221
    %v1242 = vunpack.c.l.bf16 %v1222
    %v1243 = vunpack.c.l.bf16 %v1223
    %v1244 = vunpack.c.l.bf16 %v1224
    %v1245 = vunpack.c.l.bf16 %v1225
    %v1246 = vunpack.c.l.bf16 %v1226
    %v1247 = vunpack.c.l.bf16 %v1227
    %v1248 = vunpack.c.l.bf16 %v1228
    %v1249 = vunpack.c.l.bf16 %v1229
    %v1250 = vunpack.c.l.bf16 %v1230
    %v1251 = vunpack.c.l.bf16 %v1231
    %v1252 = vunpack.c.l.bf16 %v1232
    %v1253 = vunpack.c.l.bf16 %v1233
    %v1254 = vunpack.c.l.bf16 %v1234
    %v1255 = vunpack.c.l.bf16 %v1235
    %v1256 = vunpack.c.l.bf16 %v1236
    %v1257 = vunpack.c.l.bf16 %v1237
    %v1258 = vunpack.c.l.bf16 %v1238
    %v1291 = vrot.slane %v1186, 4
    %v1292 = vrot.slane %v1188, 4
    %v1293 = vsel %vm404, %v1291, %v1292
    %v1294 = vrot.slane %v1187, 4
    %v1295 = vrot.slane %v1189, 4
    %v1296 = vsel %vm404, %v1294, %v1295
    %v1297 = vrot.slane %v1190, 4
    %v1298 = vsel %vm404, %v1292, %v1297
    %v1299 = vrot.slane %v1191, 4
    %v1300 = vsel %vm404, %v1295, %v1299
    %v1301 = vrot.slane %v1192, 4
    %v1302 = vsel %vm404, %v1297, %v1301
    %v1303 = vrot.slane %v1193, 4
    %v1304 = vsel %vm404, %v1299, %v1303
    %v1305 = vrot.slane %v1194, 4
    %v1306 = vsel %vm404, %v1301, %v1305
    %v1307 = vrot.slane %v1195, 4
    %v1308 = vsel %vm404, %v1303, %v1307
    %v1309 = vrot.slane %v1196, 4
    %v1310 = vsel %vm404, %v1305, %v1309
    %v1311 = vrot.slane %v1197, 4
    %v1312 = vsel %vm404, %v1307, %v1311
    %v1313 = vrot.slane %v1198, 4
    %v1314 = vsel %vm404, %v1309, %v1313
    %v1315 = vrot.slane %v1199, 4
    %v1316 = vsel %vm404, %v1311, %v1315
    %v1317 = vrot.slane %v1200, 4
    %v1318 = vsel %vm404, %v1313, %v1317
    %v1319 = vrot.slane %v1201, 4
    %v1320 = vsel %vm404, %v1315, %v1319
    %v1321 = vrot.slane %v1202, 4
    %v1322 = vsel %vm404, %v1317, %v1321
    %v1323 = vrot.slane %v1203, 4
    %v1324 = vsel %vm404, %v1319, %v1323
    %v1325 = vrot.slane %v1204, 4
    %v1326 = vsel %vm404, %v1321, %v1325
    %v1327 = vrot.slane %v1205, 4
    %v1328 = vsel %vm404, %v1323, %v1327
    %v1329 = vrot.slane %v1206, 4
    %v1330 = vsel %vm404, %v1325, %v1329
    %v1331 = vrot.slane %v1207, 4
    %v1332 = vsel %vm404, %v1327, %v1331
    %v1333 = vrot.slane %v1208, 4
    %v1334 = vsel %vm404, %v1329, %v1333
    %v1335 = vrot.slane %v1209, 4
    %v1336 = vsel %vm404, %v1331, %v1335
    %v1337 = vrot.slane %v1210, 4
    %v1338 = vsel %vm404, %v1333, %v1337
    %v1339 = vrot.slane %v1211, 4
    %v1340 = vsel %vm404, %v1335, %v1339
    %v1341 = vrot.slane %v1212, 4
    %v1342 = vsel %vm404, %v1337, %v1341
    %v1343 = vrot.slane %v1213, 4
    %v1344 = vsel %vm404, %v1339, %v1343
    %v1345 = vrot.slane %v1214, 4
    %v1346 = vsel %vm404, %v1341, %v1345
    %v1347 = vrot.slane %v1215, 4
    %v1348 = vsel %vm404, %v1343, %v1347
    %v1349 = vrot.slane %v1216, 4
    %v1350 = vsel %vm404, %v1345, %v1349
    %v1351 = vrot.slane %v1217, 4
    %v1352 = vsel %vm404, %v1347, %v1351
    %v1369 = vsel %vm61, %v1296, 0
    %v1371 = vsel %vm61, %v1300, 0
    %v1373 = vsel %vm61, %v1304, 0
    %v1375 = vsel %vm61, %v1308, 0
    %v1377 = vsel %vm61, %v1312, 0
    %v1379 = vsel %vm61, %v1316, 0
    %v1381 = vsel %vm61, %v1320, 0
    %v1383 = vsel %vm61, %v1324, 0
    %v1385 = vsel %vm61, %v1328, 0
    %v1387 = vsel %vm61, %v1332, 0
    %v1389 = vsel %vm61, %v1336, 0
    %v1391 = vsel %vm61, %v1340, 0
    %v1393 = vsel %vm61, %v1344, 0
    %v1395 = vsel %vm61, %v1348, 0
    %v1397 = vsel %vm61, %v1352, 0
    %v1399 = vsel %vm61, %v1351, 0
    %1401 = vmatprep.subr.mxu0 0.0
    %1402 = vmatpush1.msra.mxu0 %v1239
    %1403 = vmatprep.subr.mxu0 0.0
    %1404 = vmatpush1.msra.mxu0 %v1240
    %1405 = vmatprep.subr.mxu0 0.0
    %1406 = vmatpush1.msra.mxu0 %v1241
    %1407 = vmatprep.subr.mxu0 0.0
    %1408 = vmatpush1.msra.mxu0 %v1242
    %1409 = vmatprep.subr.mxu0 0.0
    %1410 = vmatpush1.msra.mxu0 %v1243
    %1411 = vmatprep.subr.mxu0 0.0
    %1412 = vmatpush1.msra.mxu0 %v1244
    %1413 = vmatprep.subr.mxu0 0.0
    %1414 = vmatpush1.msra.mxu0 %v1245
    %1415 = vmatprep.subr.mxu0 0.0
    %1416 = vmatpush1.msra.mxu0 %v1246
    %1417 = vmatprep.subr.mxu0 0.0
    %1418 = vmatpush1.msra.mxu0 %v1247
    %1419 = vmatprep.subr.mxu0 0.0
    %1420 = vmatpush1.msra.mxu0 %v1248
    %1421 = vmatprep.subr.mxu0 0.0
    %1422 = vmatpush1.msra.mxu0 %v1249
    %1423 = vmatprep.subr.mxu0 0.0
    %1424 = vmatpush1.msra.mxu0 %v1250
    %1425 = vmatprep.subr.mxu0 0.0
    %1426 = vmatpush1.msra.mxu0 %v1251
    %1427 = vmatprep.subr.mxu0 0.0
    %1428 = vmatpush1.msra.mxu0 %v1252
    %1429 = vmatprep.subr.mxu0 0.0
    %1430 = vmatpush1.msra.mxu0 %v1253
    %1431 = vmatprep.subr.mxu0 0.0
    %1432 = vmatpush1.msra.mxu0 %v1254
    %1433 = vmatprep.subr.mxu0 0.0
    %1434 = vmatpush1.msra.mxu0 %v1255
    %1435 = vmatprep.subr.mxu0 0.0
    %1436 = vmatpush1.msra.mxu0 %v1256
    %1437 = vmatprep.subr.mxu0 0.0
    %1438 = vmatpush1.msra.mxu0 %v1257
    %1439 = vmatprep.subr.mxu0 0.0
    %1440 = vmatpush1.msra.mxu0 %v1258
    %1441 = vmatprep.subr.mxu0 0.0
    %1442 = vmatpush1.msra.mxu0 0.0
    %1443 = vmatprep.subr.mxu0 0.0
    %1444 = vmatpush1.msra.mxu0 0.0
    %1445 = vmatprep.subr.mxu0 0.0
    %1446 = vmatpush1.msra.mxu0 0.0
    %1447 = vmatprep.subr.mxu0 0.0
    %1448 = vmatpush1.msra.mxu0 0.0
    %1449 = vmatprep.subr.mxu0 0.0
    %1450 = vmatpush1.msra.mxu0 0.0
    %1451 = vmatprep.subr.mxu0 0.0
    %1452 = vmatpush1.msra.mxu0 0.0
    %1453 = vmatprep.subr.mxu0 0.0
    %1454 = vmatpush1.msra.mxu0 0.0
    %1455 = vmatprep.subr.mxu0 0.0
    %1456 = vmatpush1.msra.mxu0 0.0
    %1457 = vmatprep.subr.mxu0 0.0
    %1458 = vmatpush1.msra.mxu0 0.0
    %1459 = vmatprep.subr.mxu0 0.0
    %1460 = vmatpush1.msra.mxu0 0.0
    %1461 = vmatprep.subr.mxu0 0.0
    %1462 = vmatpush1.msra.mxu0 0.0
    %1463 = vmatprep.subr.mxu0 0.0
    %1464 = vmatpush1.msra.mxu0 0.0
    %1465 = vmatprep.mubr.f32.mxu0 %v1369
    %1466 = vmatmul.mubr.f32.gmra.mrb[0].mxu0 %v1293
    %v1467 = vpop.f32.mrb[0].mxu0
    %v1468 = vadd.f32 0.0, %v1467
    %v1469 = vpop.f32.mrb[0].mxu0
    %1470 = vmatprep.mubr.f32.mxu0 %v1371
    %1471 = vmatmul.mubr.f32.gmra.mrb[0].mxu0 %v1298
    %v1472 = vpop.f32.mrb[0].mxu0
    %v1473 = vadd.f32 0.0, %v1472
    %v1474 = vpop.f32.mrb[0].mxu0
    %1475 = vmatprep.mubr.f32.mxu0 %v1373
    %1476 = vmatmul.mubr.f32.gmra.mrb[0].mxu0 %v1302
    %v1477 = vpop.f32.mrb[0].mxu0
    %v1478 = vadd.f32 0.0, %v1477
    %v1479 = vpop.f32.mrb[0].mxu0
    %1480 = vmatprep.mubr.f32.mxu0 %v1375
    %1481 = vmatmul.mubr.f32.gmra.mrb[0].mxu0 %v1306
    %v1482 = vpop.f32.mrb[0].mxu0
    %v1483 = vadd.f32 0.0, %v1482
    %v1484 = vpop.f32.mrb[0].mxu0
    %1485 = vmatprep.mubr.f32.mxu0 %v1377
    %1486 = vmatmul.mubr.f32.gmra.mrb[0].mxu0 %v1310
    %v1487 = vpop.f32.mrb[0].mxu0
    %v1488 = vadd.f32 0.0, %v1487
    %v1489 = vpop.f32.mrb[0].mxu0
    %1490 = vmatprep.mubr.f32.mxu0 %v1379
    %1491 = vmatmul.mubr.f32.gmra.mrb[0].mxu0 %v1314
    %v1492 = vpop.f32.mrb[0].mxu0
    %v1493 = vadd.f32 0.0, %v1492
    %v1494 = vpop.f32.mrb[0].mxu0
    %1495 = vmatprep.mubr.f32.mxu0 %v1381
    %1496 = vmatmul.mubr.f32.gmra.mrb[0].mxu0 %v1318
    %v1497 = vpop.f32.mrb[0].mxu0
    %v1498 = vadd.f32 0.0, %v1497
    %v1499 = vpop.f32.mrb[0].mxu0
    %1500 = vmatprep.mubr.f32.mxu0 %v1383
    %1501 = vmatmul.mubr.f32.gmra.mrb[0].mxu0 %v1322
    %v1502 = vpop.f32.mrb[0].mxu0
    %v1503 = vadd.f32 0.0, %v1502
    %v1504 = vpop.f32.mrb[0].mxu0
    %1505 = vmatprep.mubr.f32.mxu0 %v1385
    %1506 = vmatmul.mubr.f32.gmra.mrb[0].mxu0 %v1326
    %v1507 = vpop.f32.mrb[0].mxu0
    %v1508 = vadd.f32 0.0, %v1507
    %v1509 = vpop.f32.mrb[0].mxu0
    %1510 = vmatprep.mubr.f32.mxu0 %v1387
    %1511 = vmatmul.mubr.f32.gmra.mrb[0].mxu0 %v1330
    %v1512 = vpop.f32.mrb[0].mxu0
    %v1513 = vadd.f32 0.0, %v1512
    %v1514 = vpop.f32.mrb[0].mxu0
    %1515 = vmatprep.mubr.f32.mxu0 %v1389
    %1516 = vmatmul.mubr.f32.gmra.mrb[0].mxu0 %v1334
    %v1517 = vpop.f32.mrb[0].mxu0
    %v1518 = vpop.f32.mrb[0].mxu0
    %1519 = vmatprep.mubr.f32.mxu0 %v1391
    %1520 = vmatmul.mubr.f32.gmra.mrb[0].mxu0 %v1338
    %v1521 = vpop.f32.mrb[0].mxu0
    %v1522 = vadd.f32 0.0, %v1521
    %v1523 = vpop.f32.mrb[0].mxu0
    %1524 = vmatprep.mubr.f32.mxu0 %v1393
    %1525 = vmatmul.mubr.f32.gmra.mrb[0].mxu0 %v1342
    %v1526 = vpop.f32.mrb[0].mxu0
    %v1527 = vadd.f32 0.0, %v1526
    %v1528 = vpop.f32.mrb[0].mxu0
    %1529 = vmatprep.mubr.f32.mxu0 %v1395
    %1530 = vmatmul.mubr.f32.gmra.mrb[0].mxu0 %v1346
    %v1531 = vpop.f32.mrb[0].mxu0
    %v1532 = vadd.f32 0.0, %v1531
    %v1533 = vpop.f32.mrb[0].mxu0
    %1534 = vmatprep.mubr.f32.mxu0 %v1397
    %1535 = vmatmul.mubr.f32.gmra.mrb[0].mxu0 %v1350
    %v1536 = vpop.f32.mrb[0].mxu0
    %v1537 = vadd.f32 0.0, %v1536
    %v1538 = vpop.f32.mrb[0].mxu0
    %1539 = vmatprep.mubr.f32.mxu0 %v1399
    %1540 = vmatmul.mubr.f32.gmra.mrb[0].mxu0 %v1349
    %v1541 = vpop.f32.mrb[0].mxu0
    %v1542 = vadd.f32 0.0, %v1541
    %v1543 = vpop.f32.mrb[0].mxu0
    %1544 = vdwg.mxu0
    %v1545 = vadd.f32 %v1109, %v1468
    %v1546 = vadd.f32 %v1114, %v1473
    %v1547 = vadd.f32 %v1119, %v1478
    %v1548 = vadd.f32 %v1124, %v1483
    %v1549 = vadd.f32 %v1129, %v1488
    %v1550 = vadd.f32 %v1134, %v1493
    %v1551 = vadd.f32 %v1139, %v1498
    %v1552 = vadd.f32 %v1144, %v1503
    %v1553 = vadd.f32 %v1149, %v1508
    %v1554 = vadd.f32 %v1154, %v1513
    %v1555 = vadd.f32 %v1163, %v1522
    %v1556 = vadd.f32 %v1168, %v1527
    %v1557 = vadd.f32 %v1173, %v1532
    %v1558 = vadd.f32 %v1178, %v1537
    %v1559 = vadd.f32 %v1183, %v1542
    %v1560 = vld [vmem:[#allocation2 + $0x80] sm:$0xfc]
    %v1561 = vld [vmem:[#allocation2 + $0x88] sm:$0xfc]
    %v1562 = vld [vmem:[#allocation2 + $0x90] sm:$0xff]
    %v1563 = vld [vmem:[#allocation2 + $0x98] sm:$0xff]
    %v1564 = vld [vmem:[#allocation2 + $0xa0] sm:$0xff]
    %v1565 = vld [vmem:[#allocation2 + $0xa8] sm:$0xff]
    %v1566 = vld [vmem:[#allocation2 + $0xb0] sm:$0xff]
    %v1567 = vld [vmem:[#allocation2 + $0xb8] sm:$0xff]
    %v1568 = vld [vmem:[#allocation2 + $0xc0] sm:$0xff]
    %v1569 = vld [vmem:[#allocation2 + $0xc8] sm:$0xff]
    %v1570 = vld [vmem:[#allocation2 + $0xd0] sm:$0xff]
    %v1571 = vld [vmem:[#allocation2 + $0xd8] sm:$0xff]
    %v1572 = vld [vmem:[#allocation2 + $0xe0] sm:$0xff]
    %v1573 = vld [vmem:[#allocation2 + $0xe8] sm:$0xff]
    %v1574 = vld [vmem:[#allocation2 + $0xf0] sm:$0xff]
    %v1575 = vld [vmem:[#allocation2 + $0xf8] sm:$0xff]
    %v1576 = vld [vmem:[#allocation2 + $0x100] sm:$0xff]
    %v1577 = vld [vmem:[#allocation2 + $0x108] sm:$0xff]
    %v1578 = vld [vmem:[#allocation2 + $0x110] sm:$0xff]
    %v1579 = vld [vmem:[#allocation2 + $0x118] sm:$0xff]
    %v1580 = vld [vmem:[#allocation2 + $0x120] sm:$0xff]
    %v1581 = vld [vmem:[#allocation2 + $0x128] sm:$0xff]
    %v1582 = vld [vmem:[#allocation2 + $0x130] sm:$0xff]
    %v1583 = vld [vmem:[#allocation2 + $0x138] sm:$0xff]
    %v1584 = vld [vmem:[#allocation2 + $0x140] sm:$0xff]
    %v1585 = vld [vmem:[#allocation2 + $0x148] sm:$0xff]
    %v1586 = vld [vmem:[#allocation2 + $0x150] sm:$0xff]
    %v1587 = vld [vmem:[#allocation2 + $0x158] sm:$0xff]
    %v1588 = vld [vmem:[#allocation2 + $0x160] sm:$0xff]
    %v1589 = vld [vmem:[#allocation2 + $0x168] sm:$0xff]
    %v1590 = vld [vmem:[#allocation2 + $0x170] sm:$0x3f]
    %v1591 = vld [vmem:[#allocation2 + $0x178] sm:$0x3f]
    %s1592 = scalar_lea.vmem %s3, 240
    %v1593 = vld [vmem:[%s1592] sm:$0xf]
    %v1594 = vld [vmem:[%s1592 + $0x4] sm:$0xf]
    %v1595 = vld [vmem:[%s1592 + $0x8] sm:$0xf]
    %v1596 = vld [vmem:[%s1592 + $0xc] sm:$0xf]
    %v1597 = vld [vmem:[%s1592 + $0x10] sm:$0xf]
    %v1598 = vld [vmem:[%s1592 + $0x14] sm:$0xf]
    %v1599 = vld [vmem:[%s1592 + $0x18] sm:$0xf]
    %v1600 = vld [vmem:[%s1592 + $0x1c] sm:$0xf]
    %v1601 = vld [vmem:[%s1592 + $0x20] sm:$0xf]
    %v1602 = vld [vmem:[%s1592 + $0x24] sm:$0xf]
    %v1603 = vld [vmem:[%s1592 + $0x28] sm:$0xf]
    %v1604 = vld [vmem:[%s1592 + $0x2c] sm:$0xf]
    %v1605 = vld [vmem:[%s1592 + $0x30] sm:$0xf]
    %v1606 = vld [vmem:[%s1592 + $0x34] sm:$0xf]
    %v1607 = vld [vmem:[%s1592 + $0x38] sm:$0xf]
    %v1608 = vld [vmem:[%s1592 + $0x3c] sm:$0xf]
    %v1609 = vld [vmem:[%s1592 + $0x40] sm:$0xf]
    %v1610 = vld [vmem:[%s1592 + $0x44] sm:$0xf]
    %v1611 = vld [vmem:[%s1592 + $0x48] sm:$0xf]
    %v1612 = vld [vmem:[%s1592 + $0x4c] sm:$0xf]
    %v1613 = vunpack.c.l.bf16 %v1593
    %v1614 = vunpack.c.l.bf16 %v1594
    %v1615 = vunpack.c.l.bf16 %v1595
    %v1616 = vunpack.c.l.bf16 %v1596
    %v1617 = vunpack.c.l.bf16 %v1597
    %v1618 = vunpack.c.l.bf16 %v1598
    %v1619 = vunpack.c.l.bf16 %v1599
    %v1620 = vunpack.c.l.bf16 %v1600
    %v1621 = vunpack.c.l.bf16 %v1601
    %v1622 = vunpack.c.l.bf16 %v1602
    %v1623 = vunpack.c.l.bf16 %v1603
    %v1624 = vunpack.c.l.bf16 %v1604
    %v1625 = vunpack.c.l.bf16 %v1605
    %v1626 = vunpack.c.l.bf16 %v1606
    %v1627 = vunpack.c.l.bf16 %v1607
    %v1628 = vunpack.c.l.bf16 %v1608
    %v1629 = vunpack.c.l.bf16 %v1609
    %v1630 = vunpack.c.l.bf16 %v1610
    %v1631 = vunpack.c.l.bf16 %v1611
    %v1632 = vunpack.c.l.bf16 %v1612
    %v1665 = vrot.slane %v1560, 2
    %v1666 = vrot.slane %v1562, 2
    %v1667 = vsel %vm303, %v1665, %v1666
    %v1668 = vrot.slane %v1561, 2
    %v1669 = vrot.slane %v1563, 2
    %v1670 = vsel %vm303, %v1668, %v1669
    %v1671 = vrot.slane %v1564, 2
    %v1672 = vsel %vm303, %v1666, %v1671
    %v1673 = vrot.slane %v1565, 2
    %v1674 = vsel %vm303, %v1669, %v1673
    %v1675 = vrot.slane %v1566, 2
    %v1676 = vsel %vm303, %v1671, %v1675
    %v1677 = vrot.slane %v1567, 2
    %v1678 = vsel %vm303, %v1673, %v1677
    %v1679 = vrot.slane %v1568, 2
    %v1680 = vsel %vm303, %v1675, %v1679
    %v1681 = vrot.slane %v1569, 2
    %v1682 = vsel %vm303, %v1677, %v1681
    %v1683 = vrot.slane %v1570, 2
    %v1684 = vsel %vm303, %v1679, %v1683
    %v1685 = vrot.slane %v1571, 2
    %v1686 = vsel %vm303, %v1681, %v1685
    %v1687 = vrot.slane %v1572, 2
    %v1688 = vsel %vm303, %v1683, %v1687
    %v1689 = vrot.slane %v1573, 2
    %v1690 = vsel %vm303, %v1685, %v1689
    %v1691 = vrot.slane %v1574, 2
    %v1692 = vsel %vm303, %v1687, %v1691
    %v1693 = vrot.slane %v1575, 2
    %v1694 = vsel %vm303, %v1689, %v1693
    %v1695 = vrot.slane %v1576, 2
    %v1696 = vsel %vm303, %v1691, %v1695
    %v1697 = vrot.slane %v1577, 2
    %v1698 = vsel %vm303, %v1693, %v1697
    %v1699 = vrot.slane %v1578, 2
    %v1700 = vsel %vm303, %v1695, %v1699
    %v1701 = vrot.slane %v1579, 2
    %v1702 = vsel %vm303, %v1697, %v1701
    %v1703 = vrot.slane %v1580, 2
    %v1704 = vsel %vm303, %v1699, %v1703
    %v1705 = vrot.slane %v1581, 2
    %v1706 = vsel %vm303, %v1701, %v1705
    %v1707 = vrot.slane %v1582, 2
    %v1708 = vsel %vm303, %v1703, %v1707
    %v1709 = vrot.slane %v1583, 2
    %v1710 = vsel %vm303, %v1705, %v1709
    %v1711 = vrot.slane %v1584, 2
    %v1712 = vsel %vm303, %v1707, %v1711
    %v1713 = vrot.slane %v1585, 2
    %v1714 = vsel %vm303, %v1709, %v1713
    %v1715 = vrot.slane %v1586, 2
    %v1716 = vsel %vm303, %v1711, %v1715
    %v1717 = vrot.slane %v1587, 2
    %v1718 = vsel %vm303, %v1713, %v1717
    %v1719 = vrot.slane %v1588, 2
    %v1720 = vsel %vm303, %v1715, %v1719
    %v1721 = vrot.slane %v1589, 2
    %v1722 = vsel %vm303, %v1717, %v1721
    %v1723 = vrot.slane %v1590, 2
    %v1724 = vsel %vm303, %v1719, %v1723
    %v1725 = vrot.slane %v1591, 2
    %v1726 = vsel %vm303, %v1721, %v1725
    %v1743 = vsel %vm61, %v1670, 0
    %v1745 = vsel %vm61, %v1674, 0
    %v1747 = vsel %vm61, %v1678, 0
    %v1749 = vsel %vm61, %v1682, 0
    %v1751 = vsel %vm61, %v1686, 0
    %v1753 = vsel %vm61, %v1690, 0
    %v1755 = vsel %vm61, %v1694, 0
    %v1757 = vsel %vm61, %v1698, 0
    %v1759 = vsel %vm61, %v1702, 0
    %v1761 = vsel %vm61, %v1706, 0
    %v1763 = vsel %vm61, %v1710, 0
    %v1765 = vsel %vm61, %v1714, 0
    %v1767 = vsel %vm61, %v1718, 0
    %v1769 = vsel %vm61, %v1722, 0
    %v1771 = vsel %vm61, %v1726, 0
    %v1773 = vsel %vm61, %v1725, 0
    %1775 = vmatprep.subr.mxu0 0.0
    %1776 = vmatpush1.msra.mxu0 %v1613
    %1777 = vmatprep.subr.mxu0 0.0
    %1778 = vmatpush1.msra.mxu0 %v1614
    %1779 = vmatprep.subr.mxu0 0.0
    %1780 = vmatpush1.msra.mxu0 %v1615
    %1781 = vmatprep.subr.mxu0 0.0
    %1782 = vmatpush1.msra.mxu0 %v1616
    %1783 = vmatprep.subr.mxu0 0.0
    %1784 = vmatpush1.msra.mxu0 %v1617
    %1785 = vmatprep.subr.mxu0 0.0
    %1786 = vmatpush1.msra.mxu0 %v1618
    %1787 = vmatprep.subr.mxu0 0.0
    %1788 = vmatpush1.msra.mxu0 %v1619
    %1789 = vmatprep.subr.mxu0 0.0
    %1790 = vmatpush1.msra.mxu0 %v1620
    %1791 = vmatprep.subr.mxu0 0.0
    %1792 = vmatpush1.msra.mxu0 %v1621
    %1793 = vmatprep.subr.mxu0 0.0
    %1794 = vmatpush1.msra.mxu0 %v1622
    %1795 = vmatprep.subr.mxu0 0.0
    %1796 = vmatpush1.msra.mxu0 %v1623
    %1797 = vmatprep.subr.mxu0 0.0
    %1798 = vmatpush1.msra.mxu0 %v1624
    %1799 = vmatprep.subr.mxu0 0.0
    %1800 = vmatpush1.msra.mxu0 %v1625
    %1801 = vmatprep.subr.mxu0 0.0
    %1802 = vmatpush1.msra.mxu0 %v1626
    %1803 = vmatprep.subr.mxu0 0.0
    %1804 = vmatpush1.msra.mxu0 %v1627
    %1805 = vmatprep.subr.mxu0 0.0
    %1806 = vmatpush1.msra.mxu0 %v1628
    %1807 = vmatprep.subr.mxu0 0.0
    %1808 = vmatpush1.msra.mxu0 %v1629
    %1809 = vmatprep.subr.mxu0 0.0
    %1810 = vmatpush1.msra.mxu0 %v1630
    %1811 = vmatprep.subr.mxu0 0.0
    %1812 = vmatpush1.msra.mxu0 %v1631
    %1813 = vmatprep.subr.mxu0 0.0
    %1814 = vmatpush1.msra.mxu0 %v1632
    %1815 = vmatprep.subr.mxu0 0.0
    %1816 = vmatpush1.msra.mxu0 0.0
    %1817 = vmatprep.subr.mxu0 0.0
    %1818 = vmatpush1.msra.mxu0 0.0
    %1819 = vmatprep.subr.mxu0 0.0
    %1820 = vmatpush1.msra.mxu0 0.0
    %1821 = vmatprep.subr.mxu0 0.0
    %1822 = vmatpush1.msra.mxu0 0.0
    %1823 = vmatprep.subr.mxu0 0.0
    %1824 = vmatpush1.msra.mxu0 0.0
    %1825 = vmatprep.subr.mxu0 0.0
    %1826 = vmatpush1.msra.mxu0 0.0
    %1827 = vmatprep.subr.mxu0 0.0
    %1828 = vmatpush1.msra.mxu0 0.0
    %1829 = vmatprep.subr.mxu0 0.0
    %1830 = vmatpush1.msra.mxu0 0.0
    %1831 = vmatprep.subr.mxu0 0.0
    %1832 = vmatpush1.msra.mxu0 0.0
    %1833 = vmatprep.subr.mxu0 0.0
    %1834 = vmatpush1.msra.mxu0 0.0
    %1835 = vmatprep.subr.mxu0 0.0
    %1836 = vmatpush1.msra.mxu0 0.0
    %1837 = vmatprep.subr.mxu0 0.0
    %1838 = vmatpush1.msra.mxu0 0.0
    %1839 = vmatprep.mubr.f32.mxu0 %v1743
    %1840 = vmatmul.mubr.f32.gmra.mrb[0].mxu0 %v1667
    %v1841 = vpop.f32.mrb[0].mxu0
    %v1842 = vadd.f32 0.0, %v1841
    %v1843 = vpop.f32.mrb[0].mxu0
    %1844 = vmatprep.mubr.f32.mxu0 %v1745
    %1845 = vmatmul.mubr.f32.gmra.mrb[0].mxu0 %v1672
    %v1846 = vpop.f32.mrb[0].mxu0
    %v1847 = vadd.f32 0.0, %v1846
    %v1848 = vpop.f32.mrb[0].mxu0
    %1849 = vmatprep.mubr.f32.mxu0 %v1747
    %1850 = vmatmul.mubr.f32.gmra.mrb[0].mxu0 %v1676
    %v1851 = vpop.f32.mrb[0].mxu0
    %v1852 = vadd.f32 0.0, %v1851
    %v1853 = vpop.f32.mrb[0].mxu0
    %1854 = vmatprep.mubr.f32.mxu0 %v1749
    %1855 = vmatmul.mubr.f32.gmra.mrb[0].mxu0 %v1680
    %v1856 = vpop.f32.mrb[0].mxu0
    %v1857 = vadd.f32 0.0, %v1856
    %v1858 = vpop.f32.mrb[0].mxu0
    %1859 = vmatprep.mubr.f32.mxu0 %v1751
    %1860 = vmatmul.mubr.f32.gmra.mrb[0].mxu0 %v1684
    %v1861 = vpop.f32.mrb[0].mxu0
    %v1862 = vadd.f32 0.0, %v1861
    %v1863 = vpop.f32.mrb[0].mxu0
    %1864 = vmatprep.mubr.f32.mxu0 %v1753
    %1865 = vmatmul.mubr.f32.gmra.mrb[0].mxu0 %v1688
    %v1866 = vpop.f32.mrb[0].mxu0
    %v1867 = vadd.f32 0.0, %v1866
    %v1868 = vpop.f32.mrb[0].mxu0
    %1869 = vmatprep.mubr.f32.mxu0 %v1755
    %1870 = vmatmul.mubr.f32.gmra.mrb[0].mxu0 %v1692
    %v1871 = vpop.f32.mrb[0].mxu0
    %v1872 = vadd.f32 0.0, %v1871
    %v1873 = vpop.f32.mrb[0].mxu0
    %1874 = vmatprep.mubr.f32.mxu0 %v1757
    %1875 = vmatmul.mubr.f32.gmra.mrb[0].mxu0 %v1696
    %v1876 = vpop.f32.mrb[0].mxu0
    %v1877 = vadd.f32 0.0, %v1876
    %v1878 = vpop.f32.mrb[0].mxu0
    %1879 = vmatprep.mubr.f32.mxu0 %v1759
    %1880 = vmatmul.mubr.f32.gmra.mrb[0].mxu0 %v1700
    %v1881 = vpop.f32.mrb[0].mxu0
    %v1882 = vadd.f32 0.0, %v1881
    %v1883 = vpop.f32.mrb[0].mxu0
    %1884 = vmatprep.mubr.f32.mxu0 %v1761
    %1885 = vmatmul.mubr.f32.gmra.mrb[0].mxu0 %v1704
    %v1886 = vpop.f32.mrb[0].mxu0
    %v1887 = vadd.f32 0.0, %v1886
    %v1888 = vpop.f32.mrb[0].mxu0
    %1889 = vmatprep.mubr.f32.mxu0 %v1763
    %1890 = vmatmul.mubr.f32.gmra.mrb[0].mxu0 %v1708
    %v1891 = vpop.f32.mrb[0].mxu0
    %v1892 = vpop.f32.mrb[0].mxu0
    %1893 = vmatprep.mubr.f32.mxu0 %v1765
    %1894 = vmatmul.mubr.f32.gmra.mrb[0].mxu0 %v1712
    %v1895 = vpop.f32.mrb[0].mxu0
    %v1896 = vadd.f32 0.0, %v1895
    %v1897 = vpop.f32.mrb[0].mxu0
    %1898 = vmatprep.mubr.f32.mxu0 %v1767
    %1899 = vmatmul.mubr.f32.gmra.mrb[0].mxu0 %v1716
    %v1900 = vpop.f32.mrb[0].mxu0
    %v1901 = vadd.f32 0.0, %v1900
    %v1902 = vpop.f32.mrb[0].mxu0
    %1903 = vmatprep.mubr.f32.mxu0 %v1769
    %1904 = vmatmul.mubr.f32.gmra.mrb[0].mxu0 %v1720
    %v1905 = vpop.f32.mrb[0].mxu0
    %v1906 = vadd.f32 0.0, %v1905
    %v1907 = vpop.f32.mrb[0].mxu0
    %1908 = vmatprep.mubr.f32.mxu0 %v1771
    %1909 = vmatmul.mubr.f32.gmra.mrb[0].mxu0 %v1724
    %v1910 = vpop.f32.mrb[0].mxu0
    %v1911 = vadd.f32 0.0, %v1910
    %v1912 = vpop.f32.mrb[0].mxu0
    %1913 = vmatprep.mubr.f32.mxu0 %v1773
    %1914 = vmatmul.mubr.f32.gmra.mrb[0].mxu0 %v1723
    %v1915 = vpop.f32.mrb[0].mxu0
    %v1916 = vadd.f32 0.0, %v1915
    %v1917 = vpop.f32.mrb[0].mxu0
    %1918 = vdwg.mxu0
    %v1919 = vadd.f32 %v1545, %v1842
    %v1920 = vadd.f32 %v1546, %v1847
    %v1921 = vadd.f32 %v1547, %v1852
    %v1922 = vadd.f32 %v1548, %v1857
    %v1923 = vadd.f32 %v1549, %v1862
    %v1924 = vadd.f32 %v1550, %v1867
    %v1925 = vadd.f32 %v1551, %v1872
    %v1926 = vadd.f32 %v1552, %v1877
    %v1927 = vadd.f32 %v1553, %v1882
    %v1928 = vadd.f32 %v1554, %v1887
    %v1929 = vadd.f32 %v1555, %v1896
    %v1930 = vadd.f32 %v1556, %v1901
    %v1931 = vadd.f32 %v1557, %v1906
    %v1932 = vadd.f32 %v1558, %v1911
    %v1933 = vadd.f32 %v1559, %v1916
    %v1934 = vld [vmem:[#allocation2 + $0xb0] sm:$0xff]
    %v1935 = vld [vmem:[#allocation2 + $0xb8] sm:$0xff]
    %v1936 = vld [vmem:[#allocation2 + $0xc0] sm:$0xff]
    %v1937 = vld [vmem:[#allocation2 + $0xc8] sm:$0xff]
    %v1938 = vld [vmem:[#allocation2 + $0xd0] sm:$0xff]
    %v1939 = vld [vmem:[#allocation2 + $0xd8] sm:$0xff]
    %v1940 = vld [vmem:[#allocation2 + $0xe0] sm:$0xff]
    %v1941 = vld [vmem:[#allocation2 + $0xe8] sm:$0xff]
    %v1942 = vld [vmem:[#allocation2 + $0xf0] sm:$0xff]
    %v1943 = vld [vmem:[#allocation2 + $0xf8] sm:$0xff]
    %v1944 = vld [vmem:[#allocation2 + $0x100] sm:$0xff]
    %v1945 = vld [vmem:[#allocation2 + $0x108] sm:$0xff]
    %v1946 = vld [vmem:[#allocation2 + $0x110] sm:$0xff]
    %v1947 = vld [vmem:[#allocation2 + $0x118] sm:$0xff]
    %v1948 = vld [vmem:[#allocation2 + $0x120] sm:$0xff]
    %v1949 = vld [vmem:[#allocation2 + $0x128] sm:$0xff]
    %v1950 = vld [vmem:[#allocation2 + $0x130] sm:$0xff]
    %v1951 = vld [vmem:[#allocation2 + $0x138] sm:$0xff]
    %v1952 = vld [vmem:[#allocation2 + $0x140] sm:$0xff]
    %v1953 = vld [vmem:[#allocation2 + $0x148] sm:$0xff]
    %v1954 = vld [vmem:[#allocation2 + $0x150] sm:$0xff]
    %v1955 = vld [vmem:[#allocation2 + $0x158] sm:$0xff]
    %v1956 = vld [vmem:[#allocation2 + $0x160] sm:$0xff]
    %v1957 = vld [vmem:[#allocation2 + $0x168] sm:$0xff]
    %v1958 = vld [vmem:[#allocation2 + $0x170] sm:$0xff]
    %v1959 = vld [vmem:[#allocation2 + $0x178] sm:$0xff]
    %v1960 = vld [vmem:[#allocation2 + $0x180] sm:$0xff]
    %v1961 = vld [vmem:[#allocation2 + $0x188] sm:$0xff]
    %v1962 = vld [vmem:[#allocation2 + $0x190] sm:$0xff]
    %v1963 = vld [vmem:[#allocation2 + $0x198] sm:$0xff]
    %v1964 = vld [vmem:[#allocation2 + $0x1a0] sm:$0xf]
    %v1965 = vld [vmem:[#allocation2 + $0x1a8] sm:$0xf]
    %s1966 = scalar_lea.vmem %s3, 320
    %v1967 = vld [vmem:[%s1966] sm:$0xf]
    %v1968 = vld [vmem:[%s1966 + $0x4] sm:$0xf]
    %v1969 = vld [vmem:[%s1966 + $0x8] sm:$0xf]
    %v1970 = vld [vmem:[%s1966 + $0xc] sm:$0xf]
    %v1971 = vld [vmem:[%s1966 + $0x10] sm:$0xf]
    %v1972 = vld [vmem:[%s1966 + $0x14] sm:$0xf]
    %v1973 = vld [vmem:[%s1966 + $0x18] sm:$0xf]
    %v1974 = vld [vmem:[%s1966 + $0x1c] sm:$0xf]
    %v1975 = vld [vmem:[%s1966 + $0x20] sm:$0xf]
    %v1976 = vld [vmem:[%s1966 + $0x24] sm:$0xf]
    %v1977 = vld [vmem:[%s1966 + $0x28] sm:$0xf]
    %v1978 = vld [vmem:[%s1966 + $0x2c] sm:$0xf]
    %v1979 = vld [vmem:[%s1966 + $0x30] sm:$0xf]
    %v1980 = vld [vmem:[%s1966 + $0x34] sm:$0xf]
    %v1981 = vld [vmem:[%s1966 + $0x38] sm:$0xf]
    %v1982 = vld [vmem:[%s1966 + $0x3c] sm:$0xf]
    %v1983 = vld [vmem:[%s1966 + $0x40] sm:$0xf]
    %v1984 = vld [vmem:[%s1966 + $0x44] sm:$0xf]
    %v1985 = vld [vmem:[%s1966 + $0x48] sm:$0xf]
    %v1986 = vld [vmem:[%s1966 + $0x4c] sm:$0xf]
    %v1987 = vunpack.c.l.bf16 %v1967
    %v1988 = vunpack.c.l.bf16 %v1968
    %v1989 = vunpack.c.l.bf16 %v1969
    %v1990 = vunpack.c.l.bf16 %v1970
    %v1991 = vunpack.c.l.bf16 %v1971
    %v1992 = vunpack.c.l.bf16 %v1972
    %v1993 = vunpack.c.l.bf16 %v1973
    %v1994 = vunpack.c.l.bf16 %v1974
    %v1995 = vunpack.c.l.bf16 %v1975
    %v1996 = vunpack.c.l.bf16 %v1976
    %v1997 = vunpack.c.l.bf16 %v1977
    %v1998 = vunpack.c.l.bf16 %v1978
    %v1999 = vunpack.c.l.bf16 %v1979
    %v2000 = vunpack.c.l.bf16 %v1980
    %v2001 = vunpack.c.l.bf16 %v1981
    %v2002 = vunpack.c.l.bf16 %v1982
    %v2003 = vunpack.c.l.bf16 %v1983
    %v2004 = vunpack.c.l.bf16 %v1984
    %v2005 = vunpack.c.l.bf16 %v1985
    %v2006 = vunpack.c.l.bf16 %v1986
    %v2008 = vsel %vm61, %v1935, 0
    %v2011 = vsel %vm61, %v1937, 0
    %v2014 = vsel %vm61, %v1939, 0
    %v2017 = vsel %vm61, %v1941, 0
    %v2020 = vsel %vm61, %v1943, 0
    %v2023 = vsel %vm61, %v1945, 0
    %v2026 = vsel %vm61, %v1947, 0
    %v2029 = vsel %vm61, %v1949, 0
    %v2032 = vsel %vm61, %v1951, 0
    %v2035 = vsel %vm61, %v1953, 0
    %v2038 = vsel %vm61, %v1955, 0
    %v2041 = vsel %vm61, %v1957, 0
    %v2044 = vsel %vm61, %v1959, 0
    %v2047 = vsel %vm61, %v1961, 0
    %v2050 = vsel %vm61, %v1963, 0
    %v2053 = vsel %vm61, %v1965, 0
    %2055 = vmatprep.subr.mxu0 0.0
    %2056 = vmatpush1.msra.mxu0 %v1987
    %2057 = vmatprep.subr.mxu0 0.0
    %2058 = vmatpush1.msra.mxu0 %v1988
    %2059 = vmatprep.subr.mxu0 0.0
    %2060 = vmatpush1.msra.mxu0 %v1989
    %2061 = vmatprep.subr.mxu0 0.0
    %2062 = vmatpush1.msra.mxu0 %v1990
    %2063 = vmatprep.subr.mxu0 0.0
    %2064 = vmatpush1.msra.mxu0 %v1991
    %2065 = vmatprep.subr.mxu0 0.0
    %2066 = vmatpush1.msra.mxu0 %v1992
    %2067 = vmatprep.subr.mxu0 0.0
    %2068 = vmatpush1.msra.mxu0 %v1993
    %2069 = vmatprep.subr.mxu0 0.0
    %2070 = vmatpush1.msra.mxu0 %v1994
    %2071 = vmatprep.subr.mxu0 0.0
    %2072 = vmatpush1.msra.mxu0 %v1995
    %2073 = vmatprep.subr.mxu0 0.0
    %2074 = vmatpush1.msra.mxu0 %v1996
    %2075 = vmatprep.subr.mxu0 0.0
    %2076 = vmatpush1.msra.mxu0 %v1997
    %2077 = vmatprep.subr.mxu0 0.0
    %2078 = vmatpush1.msra.mxu0 %v1998
    %2079 = vmatprep.subr.mxu0 0.0
    %2080 = vmatpush1.msra.mxu0 %v1999
    %2081 = vmatprep.subr.mxu0 0.0
    %2082 = vmatpush1.msra.mxu0 %v2000
    %2083 = vmatprep.subr.mxu0 0.0
    %2084 = vmatpush1.msra.mxu0 %v2001
    %2085 = vmatprep.subr.mxu0 0.0
    %2086 = vmatpush1.msra.mxu0 %v2002
    %2087 = vmatprep.subr.mxu0 0.0
    %2088 = vmatpush1.msra.mxu0 %v2003
    %2089 = vmatprep.subr.mxu0 0.0
    %2090 = vmatpush1.msra.mxu0 %v2004
    %2091 = vmatprep.subr.mxu0 0.0
    %2092 = vmatpush1.msra.mxu0 %v2005
    %2093 = vmatprep.subr.mxu0 0.0
    %2094 = vmatpush1.msra.mxu0 %v2006
    %2095 = vmatprep.subr.mxu0 0.0
    %2096 = vmatpush1.msra.mxu0 0.0
    %2097 = vmatprep.subr.mxu0 0.0
    %2098 = vmatpush1.msra.mxu0 0.0
    %2099 = vmatprep.subr.mxu0 0.0
    %2100 = vmatpush1.msra.mxu0 0.0
    %2101 = vmatprep.subr.mxu0 0.0
    %2102 = vmatpush1.msra.mxu0 0.0
    %2103 = vmatprep.subr.mxu0 0.0
    %2104 = vmatpush1.msra.mxu0 0.0
    %2105 = vmatprep.subr.mxu0 0.0
    %2106 = vmatpush1.msra.mxu0 0.0
    %2107 = vmatprep.subr.mxu0 0.0
    %2108 = vmatpush1.msra.mxu0 0.0
    %2109 = vmatprep.subr.mxu0 0.0
    %2110 = vmatpush1.msra.mxu0 0.0
    %2111 = vmatprep.subr.mxu0 0.0
    %2112 = vmatpush1.msra.mxu0 0.0
    %2113 = vmatprep.subr.mxu0 0.0
    %2114 = vmatpush1.msra.mxu0 0.0
    %2115 = vmatprep.subr.mxu0 0.0
    %2116 = vmatpush1.msra.mxu0 0.0
    %2117 = vmatprep.subr.mxu0 0.0
    %2118 = vmatpush1.msra.mxu0 0.0
    %2119 = vmatprep.mubr.f32.mxu0 %v2008
    %2120 = vmatmul.mubr.f32.gmra.mrb[0].mxu0 %v1934
    %v2121 = vpop.f32.mrb[0].mxu0
    %v2122 = vadd.f32 0.0, %v2121
    %v2123 = vpop.f32.mrb[0].mxu0
    %2124 = vmatprep.mubr.f32.mxu0 %v2011
    %2125 = vmatmul.mubr.f32.gmra.mrb[0].mxu0 %v1936
    %v2126 = vpop.f32.mrb[0].mxu0
    %v2127 = vadd.f32 0.0, %v2126
    %v2128 = vpop.f32.mrb[0].mxu0
    %2129 = vmatprep.mubr.f32.mxu0 %v2014
    %2130 = vmatmul.mubr.f32.gmra.mrb[0].mxu0 %v1938
    %v2131 = vpop.f32.mrb[0].mxu0
    %v2132 = vadd.f32 0.0, %v2131
    %v2133 = vpop.f32.mrb[0].mxu0
    %2134 = vmatprep.mubr.f32.mxu0 %v2017
    %2135 = vmatmul.mubr.f32.gmra.mrb[0].mxu0 %v1940
    %v2136 = vpop.f32.mrb[0].mxu0
    %v2137 = vadd.f32 0.0, %v2136
    %v2138 = vpop.f32.mrb[0].mxu0
    %2139 = vmatprep.mubr.f32.mxu0 %v2020
    %2140 = vmatmul.mubr.f32.gmra.mrb[0].mxu0 %v1942
    %v2141 = vpop.f32.mrb[0].mxu0
    %v2142 = vadd.f32 0.0, %v2141
    %v2143 = vpop.f32.mrb[0].mxu0
    %2144 = vmatprep.mubr.f32.mxu0 %v2023
    %2145 = vmatmul.mubr.f32.gmra.mrb[0].mxu0 %v1944
    %v2146 = vpop.f32.mrb[0].mxu0
    %v2147 = vadd.f32 0.0, %v2146
    %v2148 = vpop.f32.mrb[0].mxu0
    %2149 = vmatprep.mubr.f32.mxu0 %v2026
    %2150 = vmatmul.mubr.f32.gmra.mrb[0].mxu0 %v1946
    %v2151 = vpop.f32.mrb[0].mxu0
    %v2152 = vadd.f32 0.0, %v2151
    %v2153 = vpop.f32.mrb[0].mxu0
    %2154 = vmatprep.mubr.f32.mxu0 %v2029
    %2155 = vmatmul.mubr.f32.gmra.mrb[0].mxu0 %v1948
    %v2156 = vpop.f32.mrb[0].mxu0
    %v2157 = vadd.f32 0.0, %v2156
    %v2158 = vpop.f32.mrb[0].mxu0
    %2159 = vmatprep.mubr.f32.mxu0 %v2032
    %2160 = vmatmul.mubr.f32.gmra.mrb[0].mxu0 %v1950
    %v2161 = vpop.f32.mrb[0].mxu0
    %v2162 = vadd.f32 0.0, %v2161
    %v2163 = vpop.f32.mrb[0].mxu0
    %2164 = vmatprep.mubr.f32.mxu0 %v2035
    %2165 = vmatmul.mubr.f32.gmra.mrb[0].mxu0 %v1952
    %v2166 = vpop.f32.mrb[0].mxu0
    %v2167 = vadd.f32 0.0, %v2166
    %v2168 = vpop.f32.mrb[0].mxu0
    %2169 = vmatprep.mubr.f32.mxu0 %v2038
    %2170 = vmatmul.mubr.f32.gmra.mrb[0].mxu0 %v1954
    %v2171 = vpop.f32.mrb[0].mxu0
    %v2172 = vpop.f32.mrb[0].mxu0
    %2173 = vmatprep.mubr.f32.mxu0 %v2041
    %2174 = vmatmul.mubr.f32.gmra.mrb[0].mxu0 %v1956
    %v2175 = vpop.f32.mrb[0].mxu0
    %v2176 = vadd.f32 0.0, %v2175
    %v2177 = vpop.f32.mrb[0].mxu0
    %2178 = vmatprep.mubr.f32.mxu0 %v2044
    %2179 = vmatmul.mubr.f32.gmra.mrb[0].mxu0 %v1958
    %v2180 = vpop.f32.mrb[0].mxu0
    %v2181 = vadd.f32 0.0, %v2180
    %v2182 = vpop.f32.mrb[0].mxu0
    %2183 = vmatprep.mubr.f32.mxu0 %v2047
    %2184 = vmatmul.mubr.f32.gmra.mrb[0].mxu0 %v1960
    %v2185 = vpop.f32.mrb[0].mxu0
    %v2186 = vadd.f32 0.0, %v2185
    %v2187 = vpop.f32.mrb[0].mxu0
    %2188 = vmatprep.mubr.f32.mxu0 %v2050
    %2189 = vmatmul.mubr.f32.gmra.mrb[0].mxu0 %v1962
    %v2190 = vpop.f32.mrb[0].mxu0
    %v2191 = vadd.f32 0.0, %v2190
    %v2192 = vpop.f32.mrb[0].mxu0
    %2193 = vmatprep.mubr.f32.mxu0 %v2053
    %2194 = vmatmul.mubr.f32.gmra.mrb[0].mxu0 %v1964
    %v2195 = vpop.f32.mrb[0].mxu0
    %v2196 = vadd.f32 0.0, %v2195
    %v2197 = vpop.f32.mrb[0].mxu0
    %2198 = vdwg.mxu0
    %v2199 = vadd.f32 %v1919, %v2122
    %v2200 = vadd.f32 %v1920, %v2127
    %v2201 = vadd.f32 %v1921, %v2132
    %v2202 = vadd.f32 %v1922, %v2137
    %v2203 = vadd.f32 %v1923, %v2142
    %v2204 = vadd.f32 %v1924, %v2147
    %v2205 = vadd.f32 %v1925, %v2152
    %v2206 = vadd.f32 %v1926, %v2157
    %v2207 = vadd.f32 %v1927, %v2162
    %v2208 = vadd.f32 %v1928, %v2167
    %v2209 = vadd.f32 %v1929, %v2176
    %v2210 = vadd.f32 %v1930, %v2181
    %v2211 = vadd.f32 %v1931, %v2186
    %v2212 = vadd.f32 %v1932, %v2191
    %v2213 = vadd.f32 %v1933, %v2196
    %v2214 = vld [vmem:[%s4] sm:$0x1]
    %v2216 = vlaneseq
    %v2217 = vshrl.u32 %v2216, 7
    %v2218 = vsub.s32 0, %v2217
    %v2219 = vrot.slane %v2214, %v2218
    %v2221 = vadd.f32 %v2199, %v2219
    %v2222 = vadd.f32 %v2200, %v2219
    %v2223 = vadd.f32 %v2201, %v2219
    %v2224 = vadd.f32 %v2202, %v2219
    %v2225 = vadd.f32 %v2203, %v2219
    %v2226 = vadd.f32 %v2204, %v2219
    %v2227 = vadd.f32 %v2205, %v2219
    %v2228 = vadd.f32 %v2206, %v2219
    %v2229 = vadd.f32 %v2207, %v2219
    %v2230 = vadd.f32 %v2208, %v2219
    %v2231 = vadd.f32 %v2209, %v2219
    %v2232 = vadd.f32 %v2210, %v2219
    %v2233 = vadd.f32 %v2211, %v2219
    %v2234 = vadd.f32 %v2212, %v2219
    %v2235 = vadd.f32 %v2213, %v2219
    %v2236 = vmax.f32 %v2221, 0.0
    %v2237 = vmax.f32 %v2222, 0.0
    %v2238 = vmax.f32 %v2223, 0.0
    %v2239 = vmax.f32 %v2224, 0.0
    %v2240 = vmax.f32 %v2225, 0.0
    %v2241 = vmax.f32 %v2226, 0.0
    %v2242 = vmax.f32 %v2227, 0.0
    %v2243 = vmax.f32 %v2228, 0.0
    %v2244 = vmax.f32 %v2229, 0.0
    %v2245 = vmax.f32 %v2230, 0.0
    %v2246 = vmax.f32 %v2231, 0.0
    %v2247 = vmax.f32 %v2232, 0.0
    %v2248 = vmax.f32 %v2233, 0.0
    %v2249 = vmax.f32 %v2234, 0.0
    %v2250 = vmax.f32 %v2235, 0.0
    %2251 = vst.msk [vmem:[#allocation3] sm:$0x3] %vm291, %v2236
    %v2254 = vunpack.c.l.s4 1983009808
    %v2255 = vunpack.c.0.s8 %v2254
    %v2256 = vlaneseq
    %v2257 = vshrl.u32 %v2256, 7
    %v2258 = vsub.s32 %v2255, %v2257
    %v2259 = vrot.slane %v2236, %v2258
    %v2260 = vcombine.high %v2259, %v2259
    %2261 = vrot.lane.b32.xlu0 %v2260, 32
    %v2262 = vpop.permute.xlu0 %2261
    %2264 = vst.msk [vmem:[#allocation3] sm:$0x3] %vm340, %v2262
    %v2265 = vcombine.high %v2236, %v2236
    %v2267 = vunpack.c.l.s4 1983009808
    %v2268 = vunpack.c.0.s8 %v2267
    %v2269 = vlaneseq
    %v2270 = vshrl.u32 %v2269, 7
    %v2271 = vsub.s32 %v2268, %v2270
    %v2272 = vrot.slane %v2265, %v2271
    %2273 = vrot.lane.b32.xlu0 %v2272, 64
    %v2274 = vpop.permute.xlu0 %2273
    %2276 = vst.msk [vmem:[#allocation3] sm:$0x3] %vm421, %v2274
    %v2277 = vcombine.high %v2272, %v2272
    %2278 = vrot.lane.b32.xlu0 %v2277, 96
    %v2279 = vpop.permute.xlu0 %2278
    %2281 = vst.msk [vmem:[#allocation3] sm:$0x3] %vm551, %v2279
    %2282 = vst.msk [vmem:[#allocation3 + $0x2] sm:$0x3] %vm291, %v2237
    %v2285 = vunpack.c.l.s4 1983009808
    %v2286 = vunpack.c.0.s8 %v2285
    %v2287 = vlaneseq
    %v2288 = vshrl.u32 %v2287, 7
    %v2289 = vsub.s32 %v2286, %v2288
    %v2290 = vrot.slane %v2237, %v2289
    %v2291 = vcombine.high %v2290, %v2290
    %2292 = vrot.lane.b32.xlu0 %v2291, 32
    %v2293 = vpop.permute.xlu0 %2292
    %2295 = vst.msk [vmem:[#allocation3 + $0x2] sm:$0x3] %vm340, %v2293
    %v2296 = vcombine.high %v2237, %v2237
    %v2298 = vunpack.c.l.s4 1983009808
    %v2299 = vunpack.c.0.s8 %v2298
    %v2300 = vlaneseq
    %v2301 = vshrl.u32 %v2300, 7
    %v2302 = vsub.s32 %v2299, %v2301
    %v2303 = vrot.slane %v2296, %v2302
    %2304 = vrot.lane.b32.xlu0 %v2303, 64
    %v2305 = vpop.permute.xlu0 %2304
    %2307 = vst.msk [vmem:[#allocation3 + $0x2] sm:$0x3] %vm421, %v2305
    %v2309 = vcombine.high %v2238, %v2238
    %v2311 = vunpack.c.l.s4 1983009808
    %v2312 = vunpack.c.0.s8 %v2311
    %v2313 = vlaneseq
    %v2314 = vshrl.u32 %v2313, 7
    %v2315 = vsub.s32 %v2312, %v2314
    %v2316 = vrot.slane %v2309, %v2315
    %v2317 = vcombine.high %v2316, %v2316
    %2318 = vrot.lane.b32.xlu0 %v2317, 96
    %v2319 = vpop.permute.xlu0 %2318
    %2321 = vst.msk [vmem:[#allocation3 + $0x2] sm:$0x3] %vm551, %v2319
    %2322 = vst.msk [vmem:[#allocation3 + $0x4] sm:$0x3] %vm291, %v2239
    %v2325 = vunpack.c.l.s4 1983009808
    %v2326 = vunpack.c.0.s8 %v2325
    %v2327 = vlaneseq
    %v2328 = vshrl.u32 %v2327, 7
    %v2329 = vsub.s32 %v2326, %v2328
    %v2330 = vrot.slane %v2239, %v2329
    %v2331 = vcombine.high %v2330, %v2330
    %2332 = vrot.lane.b32.xlu0 %v2331, 32
    %v2333 = vpop.permute.xlu0 %2332
    %2335 = vst.msk [vmem:[#allocation3 + $0x4] sm:$0x3] %vm340, %v2333
    %v2336 = vcombine.high %v2239, %v2239
    %v2338 = vunpack.c.l.s4 1983009808
    %v2339 = vunpack.c.0.s8 %v2338
    %v2340 = vlaneseq
    %v2341 = vshrl.u32 %v2340, 7
    %v2342 = vsub.s32 %v2339, %v2341
    %v2343 = vrot.slane %v2336, %v2342
    %2344 = vrot.lane.b32.xlu0 %v2343, 64
    %v2345 = vpop.permute.xlu0 %2344
    %2347 = vst.msk [vmem:[#allocation3 + $0x4] sm:$0x3] %vm421, %v2345
    %v2348 = vcombine.high %v2343, %v2343
    %2349 = vrot.lane.b32.xlu0 %v2348, 96
    %v2350 = vpop.permute.xlu0 %2349
    %2352 = vst.msk [vmem:[#allocation3 + $0x4] sm:$0x3] %vm551, %v2350
    %2353 = vst.msk [vmem:[#allocation3 + $0x6] sm:$0x3] %vm291, %v2240
    %v2356 = vunpack.c.l.s4 1983009808
    %v2357 = vunpack.c.0.s8 %v2356
    %v2358 = vlaneseq
    %v2359 = vshrl.u32 %v2358, 7
    %v2360 = vsub.s32 %v2357, %v2359
    %v2361 = vrot.slane %v2240, %v2360
    %v2362 = vcombine.high %v2361, %v2361
    %2363 = vrot.lane.b32.xlu0 %v2362, 32
    %v2364 = vpop.permute.xlu0 %2363
    %2366 = vst.msk [vmem:[#allocation3 + $0x6] sm:$0x3] %vm340, %v2364
    %v2368 = vcombine.high %v2241, %v2241
    %v2370 = vunpack.c.l.s4 1983009808
    %v2371 = vunpack.c.0.s8 %v2370
    %v2372 = vlaneseq
    %v2373 = vshrl.u32 %v2372, 7
    %v2374 = vsub.s32 %v2371, %v2373
    %v2375 = vrot.slane %v2368, %v2374
    %2376 = vrot.lane.b32.xlu0 %v2375, 64
    %v2377 = vpop.permute.xlu0 %2376
    %2379 = vst.msk [vmem:[#allocation3 + $0x6] sm:$0x3] %vm421, %v2377
    %v2380 = vcombine.high %v2375, %v2375
    %2381 = vrot.lane.b32.xlu0 %v2380, 96
    %v2382 = vpop.permute.xlu0 %2381
    %2384 = vst.msk [vmem:[#allocation3 + $0x6] sm:$0x3] %vm551, %v2382
    %2385 = vst.msk [vmem:[#allocation3 + $0x8] sm:$0x3] %vm291, %v2242
    %v2388 = vunpack.c.l.s4 1983009808
    %v2389 = vunpack.c.0.s8 %v2388
    %v2390 = vlaneseq
    %v2391 = vshrl.u32 %v2390, 7
    %v2392 = vsub.s32 %v2389, %v2391
    %v2393 = vrot.slane %v2242, %v2392
    %v2394 = vcombine.high %v2393, %v2393
    %2395 = vrot.lane.b32.xlu0 %v2394, 32
    %v2396 = vpop.permute.xlu0 %2395
    %2398 = vst.msk [vmem:[#allocation3 + $0x8] sm:$0x3] %vm340, %v2396
    %v2399 = vcombine.high %v2242, %v2242
    %v2401 = vunpack.c.l.s4 1983009808
    %v2402 = vunpack.c.0.s8 %v2401
    %v2403 = vlaneseq
    %v2404 = vshrl.u32 %v2403, 7
    %v2405 = vsub.s32 %v2402, %v2404
    %v2406 = vrot.slane %v2399, %v2405
    %2407 = vrot.lane.b32.xlu0 %v2406, 64
    %v2408 = vpop.permute.xlu0 %2407
    %2410 = vst.msk [vmem:[#allocation3 + $0x8] sm:$0x3] %vm421, %v2408
    %v2411 = vcombine.high %v2406, %v2406
    %2412 = vrot.lane.b32.xlu0 %v2411, 96
    %v2413 = vpop.permute.xlu0 %2412
    %2415 = vst.msk [vmem:[#allocation3 + $0x8] sm:$0x3] %vm551, %v2413
    %2416 = vst.msk [vmem:[#allocation3 + $0xa] sm:$0x3] %vm291, %v2243
    %v2419 = vunpack.c.l.s4 1983009808
    %v2420 = vunpack.c.0.s8 %v2419
    %v2421 = vlaneseq
    %v2422 = vshrl.u32 %v2421, 7
    %v2423 = vsub.s32 %v2420, %v2422
    %v2424 = vrot.slane %v2244, %v2423
    %v2425 = vcombine.high %v2424, %v2424
    %2426 = vrot.lane.b32.xlu0 %v2425, 32
    %v2427 = vpop.permute.xlu0 %2426
    %2429 = vst.msk [vmem:[#allocation3 + $0xa] sm:$0x3] %vm340, %v2427
    %v2430 = vcombine.high %v2244, %v2244
    %v2432 = vunpack.c.l.s4 1983009808
    %v2433 = vunpack.c.0.s8 %v2432
    %v2434 = vlaneseq
    %v2435 = vshrl.u32 %v2434, 7
    %v2436 = vsub.s32 %v2433, %v2435
    %v2437 = vrot.slane %v2430, %v2436
    %2438 = vrot.lane.b32.xlu0 %v2437, 64
    %v2439 = vpop.permute.xlu0 %2438
    %2441 = vst.msk [vmem:[#allocation3 + $0xa] sm:$0x3] %vm421, %v2439
    %v2442 = vcombine.high %v2437, %v2437
    %2443 = vrot.lane.b32.xlu0 %v2442, 96
    %v2444 = vpop.permute.xlu0 %2443
    %2446 = vst.msk [vmem:[#allocation3 + $0xa] sm:$0x3] %vm551, %v2444
    %2447 = vst.msk [vmem:[#allocation3 + $0xc] sm:$0x3] %vm291, %v2245
    %v2450 = vunpack.c.l.s4 1983009808
    %v2451 = vunpack.c.0.s8 %v2450
    %v2452 = vlaneseq
    %v2453 = vshrl.u32 %v2452, 7
    %v2454 = vsub.s32 %v2451, %v2453
    %v2455 = vrot.slane %v2245, %v2454
    %v2456 = vcombine.high %v2455, %v2455
    %2457 = vrot.lane.b32.xlu0 %v2456, 32
    %v2458 = vpop.permute.xlu0 %2457
    %2460 = vst.msk [vmem:[#allocation3 + $0xc] sm:$0x3] %vm340, %v2458
    %v2461 = vcombine.high %v2245, %v2245
    %v2463 = vunpack.c.l.s4 1983009808
    %v2464 = vunpack.c.0.s8 %v2463
    %v2465 = vlaneseq
    %v2466 = vshrl.u32 %v2465, 7
    %v2467 = vsub.s32 %v2464, %v2466
    %v2468 = vrot.slane %v2461, %v2467
    %2469 = vrot.lane.b32.xlu0 %v2468, 64
    %v2470 = vpop.permute.xlu0 %2469
    %2472 = vst.msk [vmem:[#allocation3 + $0xc] sm:$0x3] %vm421, %v2470
    %v2473 = vcombine.high %v2468, %v2468
    %2474 = vrot.lane.b32.xlu0 %v2473, 96
    %v2475 = vpop.permute.xlu0 %2474
    %2477 = vst.msk [vmem:[#allocation3 + $0xc] sm:$0x3] %vm551, %v2475
    %2478 = vst.msk [vmem:[#allocation3 + $0xe] sm:$0x3] %vm291, %v2246
    %v2481 = vunpack.c.l.s4 1983009808
    %v2482 = vunpack.c.0.s8 %v2481
    %v2483 = vlaneseq
    %v2484 = vshrl.u32 %v2483, 7
    %v2485 = vsub.s32 %v2482, %v2484
    %v2486 = vrot.slane %v2246, %v2485
    %v2487 = vcombine.high %v2486, %v2486
    %2488 = vrot.lane.b32.xlu0 %v2487, 32
    %v2489 = vpop.permute.xlu0 %2488
    %2491 = vst.msk [vmem:[#allocation3 + $0xe] sm:$0x3] %vm340, %v2489
    %v2492 = vcombine.high %v2246, %v2246
    %v2494 = vunpack.c.l.s4 1983009808
    %v2495 = vunpack.c.0.s8 %v2494
    %v2496 = vlaneseq
    %v2497 = vshrl.u32 %v2496, 7
    %v2498 = vsub.s32 %v2495, %v2497
    %v2499 = vrot.slane %v2492, %v2498
    %2500 = vrot.lane.b32.xlu0 %v2499, 64
    %v2501 = vpop.permute.xlu0 %2500
    %2503 = vst.msk [vmem:[#allocation3 + $0xe] sm:$0x3] %vm421, %v2501
    %v2504 = vcombine.high %v2499, %v2499
    %2505 = vrot.lane.b32.xlu0 %v2504, 96
    %v2506 = vpop.permute.xlu0 %2505
    %2508 = vst.msk [vmem:[#allocation3 + $0xe] sm:$0x3] %vm551, %v2506
    %2509 = vst.msk [vmem:[#allocation3 + $0x10] sm:$0x3] %vm291, %v2247
    %v2512 = vunpack.c.l.s4 1983009808
    %v2513 = vunpack.c.0.s8 %v2512
    %v2514 = vlaneseq
    %v2515 = vshrl.u32 %v2514, 7
    %v2516 = vsub.s32 %v2513, %v2515
    %v2517 = vrot.slane %v2247, %v2516
    %v2518 = vcombine.high %v2517, %v2517
    %2519 = vrot.lane.b32.xlu0 %v2518, 32
    %v2520 = vpop.permute.xlu0 %2519
    %2522 = vst.msk [vmem:[#allocation3 + $0x10] sm:$0x3] %vm340, %v2520
    %v2523 = vcombine.high %v2247, %v2247
    %v2525 = vunpack.c.l.s4 1983009808
    %v2526 = vunpack.c.0.s8 %v2525
    %v2527 = vlaneseq
    %v2528 = vshrl.u32 %v2527, 7
    %v2529 = vsub.s32 %v2526, %v2528
    %v2530 = vrot.slane %v2523, %v2529
    %2531 = vrot.lane.b32.xlu0 %v2530, 64
    %v2532 = vpop.permute.xlu0 %2531
    %2534 = vst.msk [vmem:[#allocation3 + $0x10] sm:$0x3] %vm421, %v2532
    %v2536 = vcombine.high %v2248, %v2248
    %v2538 = vunpack.c.l.s4 1983009808
    %v2539 = vunpack.c.0.s8 %v2538
    %v2540 = vlaneseq
    %v2541 = vshrl.u32 %v2540, 7
    %v2542 = vsub.s32 %v2539, %v2541
    %v2543 = vrot.slane %v2536, %v2542
    %v2544 = vcombine.high %v2543, %v2543
    %2545 = vrot.lane.b32.xlu0 %v2544, 96
    %v2546 = vpop.permute.xlu0 %2545
    %2548 = vst.msk [vmem:[#allocation3 + $0x10] sm:$0x3] %vm551, %v2546
    %2549 = vst.msk [vmem:[#allocation3 + $0x12] sm:$0x3] %vm291, %v2249
    %v2552 = vunpack.c.l.s4 1983009808
    %v2553 = vunpack.c.0.s8 %v2552
    %v2554 = vlaneseq
    %v2555 = vshrl.u32 %v2554, 7
    %v2556 = vsub.s32 %v2553, %v2555
    %v2557 = vrot.slane %v2249, %v2556
    %v2558 = vcombine.high %v2557, %v2557
    %2559 = vrot.lane.b32.xlu0 %v2558, 32
    %v2560 = vpop.permute.xlu0 %2559
    %2562 = vst.msk [vmem:[#allocation3 + $0x12] sm:$0x3] %vm340, %v2560
    %v2563 = vcombine.high %v2249, %v2249
    %v2565 = vunpack.c.l.s4 1983009808
    %v2566 = vunpack.c.0.s8 %v2565
    %v2567 = vlaneseq
    %v2568 = vshrl.u32 %v2567, 7
    %v2569 = vsub.s32 %v2566, %v2568
    %v2570 = vrot.slane %v2563, %v2569
    %2571 = vrot.lane.b32.xlu0 %v2570, 64
    %v2572 = vpop.permute.xlu0 %2571
    %2574 = vst.msk [vmem:[#allocation3 + $0x12] sm:$0x3] %vm421, %v2572
    %v2575 = vcombine.high %v2570, %v2570
    %2576 = vrot.lane.b32.xlu0 %v2575, 96
    %v2577 = vpop.permute.xlu0 %2576
    %2579 = vst.msk [vmem:[#allocation3 + $0x12] sm:$0x3] %vm551, %v2577
    %2580 = vst.msk [vmem:[#allocation3 + $0x14] sm:$0x3] %vm291, %v2250
    %v2583 = vunpack.c.l.s4 1983009808
    %v2584 = vunpack.c.0.s8 %v2583
    %v2585 = vlaneseq
    %v2586 = vshrl.u32 %v2585, 7
    %v2587 = vsub.s32 %v2584, %v2586
    %v2588 = vrot.slane %v2250, %v2587
    %v2589 = vcombine.high %v2588, %v2588
    %2590 = vrot.lane.b32.xlu0 %v2589, 32
    %v2591 = vpop.permute.xlu0 %2590
    %2593 = vst.msk [vmem:[#allocation3 + $0x14] sm:$0x3] %vm340, %v2591
    %v2594 = vld [vmem:[#allocation3] sm:$0xff]
    %v2595 = vld [vmem:[#allocation3 + $0x8] sm:$0xff]
    %v2596 = vld [vmem:[#allocation3 + $0x10] sm:$0x3f]
    %v2597 = vld [vmem:[%s5] sm:$0xf]
    %v2598 = vld [vmem:[%s5 + $0x4] sm:$0xf]
    %v2599 = vld [vmem:[%s5 + $0x8] sm:$0xf]
    %v2600 = vld [vmem:[%s5 + $0xc] sm:$0xf]
    %v2601 = vld [vmem:[%s5 + $0x10] sm:$0xf]
    %v2602 = vld [vmem:[%s5 + $0x14] sm:$0xf]
    %v2603 = vld [vmem:[%s5 + $0x18] sm:$0xf]
    %v2604 = vld [vmem:[%s5 + $0x1c] sm:$0xf]
    %v2605 = vld [vmem:[%s5 + $0x20] sm:$0xf]
    %v2606 = vld [vmem:[%s5 + $0x24] sm:$0xf]
    %v2607 = vld [vmem:[%s5 + $0x28] sm:$0xf]
    %v2608 = vld [vmem:[%s5 + $0x2c] sm:$0xf]
    %v2609 = vld [vmem:[%s5 + $0x30] sm:$0xf]
    %v2610 = vld [vmem:[%s5 + $0x34] sm:$0xf]
    %v2611 = vld [vmem:[%s5 + $0x38] sm:$0xf]
    %v2612 = vld [vmem:[%s5 + $0x3c] sm:$0xf]
    %v2613 = vld [vmem:[%s5 + $0x40] sm:$0xf]
    %v2614 = vld [vmem:[%s5 + $0x44] sm:$0xf]
    %v2615 = vld [vmem:[%s5 + $0x48] sm:$0xf]
    %v2616 = vld [vmem:[%s5 + $0x4c] sm:$0xf]
    %v2617 = vld [vmem:[%s5 + $0x50] sm:$0xf]
    %v2618 = vld [vmem:[%s5 + $0x54] sm:$0xf]
    %v2619 = vld [vmem:[%s5 + $0x58] sm:$0xf]
    %v2620 = vld [vmem:[%s5 + $0x5c] sm:$0xf]
    %v2621 = vld [vmem:[%s5 + $0x60] sm:$0xf]
    %v2622 = vld [vmem:[%s5 + $0x64] sm:$0xf]
    %v2623 = vld [vmem:[%s5 + $0x68] sm:$0xf]
    %v2624 = vld [vmem:[%s5 + $0x6c] sm:$0xf]
    %v2625 = vld [vmem:[%s5 + $0x70] sm:$0xf]
    %v2626 = vld [vmem:[%s5 + $0x74] sm:$0xf]
    %v2627 = vld [vmem:[%s5 + $0x78] sm:$0xf]
    %v2628 = vld [vmem:[%s5 + $0x7c] sm:$0xf]
    %v2629 = vld [vmem:[%s5 + $0x80] sm:$0xf]
    %v2630 = vld [vmem:[%s5 + $0x84] sm:$0xf]
    %v2631 = vld [vmem:[%s5 + $0x88] sm:$0xf]
    %v2632 = vld [vmem:[%s5 + $0x8c] sm:$0xf]
    %v2633 = vld [vmem:[%s5 + $0x90] sm:$0xf]
    %v2634 = vld [vmem:[%s5 + $0x94] sm:$0xf]
    %v2635 = vld [vmem:[%s5 + $0x98] sm:$0xf]
    %v2636 = vld [vmem:[%s5 + $0x9c] sm:$0xf]
    %v2637 = vld [vmem:[%s5 + $0xa0] sm:$0xf]
    %v2638 = vld [vmem:[%s5 + $0xa4] sm:$0xf]
    %v2639 = vld [vmem:[%s5 + $0xa8] sm:$0xf]
    %v2640 = vld [vmem:[%s5 + $0xac] sm:$0xf]
    %v2641 = vld [vmem:[%s5 + $0xb0] sm:$0xf]
    %v2642 = vld [vmem:[%s5 + $0xb4] sm:$0xf]
    %v2643 = vld [vmem:[%s5 + $0xb8] sm:$0xf]
    %v2644 = vld [vmem:[%s5 + $0xbc] sm:$0xf]
    %v2645 = vld [vmem:[%s5 + $0xc0] sm:$0xf]
    %v2646 = vld [vmem:[%s5 + $0xc4] sm:$0xf]
    %v2647 = vld [vmem:[%s5 + $0xc8] sm:$0xf]
    %v2648 = vld [vmem:[%s5 + $0xcc] sm:$0xf]
    %v2649 = vld [vmem:[%s5 + $0xd0] sm:$0xf]
    %v2650 = vld [vmem:[%s5 + $0xd4] sm:$0xf]
    %v2651 = vld [vmem:[%s5 + $0xd8] sm:$0xf]
    %v2652 = vld [vmem:[%s5 + $0xdc] sm:$0xf]
    %v2653 = vld [vmem:[%s5 + $0xe0] sm:$0xf]
    %v2654 = vld [vmem:[%s5 + $0xe4] sm:$0xf]
    %v2655 = vld [vmem:[%s5 + $0xe8] sm:$0xf]
    %v2656 = vld [vmem:[%s5 + $0xec] sm:$0xf]
    %v2657 = vld [vmem:[%s5 + $0xf0] sm:$0xf]
    %v2658 = vld [vmem:[%s5 + $0xf4] sm:$0xf]
    %v2659 = vld [vmem:[%s5 + $0xf8] sm:$0xf]
    %v2660 = vld [vmem:[%s5 + $0xfc] sm:$0xf]
    %v2661 = vld [vmem:[%s5 + $0x100] sm:$0xf]
    %v2662 = vld [vmem:[%s5 + $0x104] sm:$0xf]
    %v2663 = vld [vmem:[%s5 + $0x108] sm:$0xf]
    %v2664 = vld [vmem:[%s5 + $0x10c] sm:$0xf]
    %v2665 = vld [vmem:[%s5 + $0x110] sm:$0xf]
    %v2666 = vld [vmem:[%s5 + $0x114] sm:$0xf]
    %v2667 = vld [vmem:[%s5 + $0x118] sm:$0xf]
    %v2668 = vld [vmem:[%s5 + $0x11c] sm:$0xf]
    %v2669 = vld [vmem:[%s5 + $0x120] sm:$0xf]
    %v2670 = vld [vmem:[%s5 + $0x124] sm:$0xf]
    %v2671 = vld [vmem:[%s5 + $0x128] sm:$0xf]
    %v2672 = vld [vmem:[%s5 + $0x12c] sm:$0xf]
    %v2673 = vld [vmem:[%s5 + $0x130] sm:$0xf]
    %v2674 = vld [vmem:[%s5 + $0x134] sm:$0xf]
    %v2675 = vld [vmem:[%s5 + $0x138] sm:$0xf]
    %v2676 = vld [vmem:[%s5 + $0x13c] sm:$0xf]
    %v2677 = vld [vmem:[%s5 + $0x140] sm:$0xf]
    %v2678 = vld [vmem:[%s5 + $0x144] sm:$0xf]
    %v2679 = vld [vmem:[%s5 + $0x148] sm:$0xf]
    %v2680 = vld [vmem:[%s5 + $0x14c] sm:$0xf]
    %v2681 = vld [vmem:[%s5 + $0x150] sm:$0xf]
    %v2682 = vld [vmem:[%s5 + $0x154] sm:$0xf]
    %v2683 = vld [vmem:[%s5 + $0x158] sm:$0xf]
    %v2684 = vld [vmem:[%s5 + $0x15c] sm:$0xf]
    %v2685 = vld [vmem:[%s5 + $0x160] sm:$0xf]
    %v2686 = vld [vmem:[%s5 + $0x164] sm:$0xf]
    %v2687 = vld [vmem:[%s5 + $0x168] sm:$0xf]
    %v2688 = vld [vmem:[%s5 + $0x16c] sm:$0xf]
    %v2689 = vld [vmem:[%s5 + $0x170] sm:$0xf]
    %v2690 = vld [vmem:[%s5 + $0x174] sm:$0xf]
    %v2691 = vld [vmem:[%s5 + $0x178] sm:$0xf]
    %v2692 = vld [vmem:[%s5 + $0x17c] sm:$0xf]
    %v2693 = vld [vmem:[%s5 + $0x180] sm:$0xf]
    %v2694 = vld [vmem:[%s5 + $0x184] sm:$0xf]
    %v2695 = vld [vmem:[%s5 + $0x188] sm:$0xf]
    %v2696 = vld [vmem:[%s5 + $0x18c] sm:$0xf]
    %v2697 = vld [vmem:[%s5 + $0x190] sm:$0xf]
    %v2698 = vld [vmem:[%s5 + $0x194] sm:$0xf]
    %v2699 = vld [vmem:[%s5 + $0x198] sm:$0xf]
    %v2700 = vld [vmem:[%s5 + $0x19c] sm:$0xf]
    %v2701 = vld [vmem:[%s5 + $0x1a0] sm:$0xf]
    %v2702 = vld [vmem:[%s5 + $0x1a4] sm:$0xf]
    %v2703 = vld [vmem:[%s5 + $0x1a8] sm:$0xf]
    %v2704 = vld [vmem:[%s5 + $0x1ac] sm:$0xf]
    %v2705 = vld [vmem:[%s5 + $0x1b0] sm:$0xf]
    %v2706 = vld [vmem:[%s5 + $0x1b4] sm:$0xf]
    %v2707 = vld [vmem:[%s5 + $0x1b8] sm:$0xf]
    %v2708 = vld [vmem:[%s5 + $0x1bc] sm:$0xf]
    %v2709 = vld [vmem:[%s5 + $0x1c0] sm:$0xf]
    %v2710 = vld [vmem:[%s5 + $0x1c4] sm:$0xf]
    %v2711 = vld [vmem:[%s5 + $0x1c8] sm:$0xf]
    %v2712 = vld [vmem:[%s5 + $0x1cc] sm:$0xf]
    %v2713 = vld [vmem:[%s5 + $0x1d0] sm:$0xf]
    %v2714 = vld [vmem:[%s5 + $0x1d4] sm:$0xf]
    %v2715 = vld [vmem:[%s5 + $0x1d8] sm:$0xf]
    %v2716 = vld [vmem:[%s5 + $0x1dc] sm:$0xf]
    %v2717 = vld [vmem:[%s5 + $0x1e0] sm:$0xf]
    %v2718 = vld [vmem:[%s5 + $0x1e4] sm:$0xf]
    %v2719 = vld [vmem:[%s5 + $0x1e8] sm:$0xf]
    %v2720 = vld [vmem:[%s5 + $0x1ec] sm:$0xf]
    %v2721 = vld [vmem:[%s5 + $0x1f0] sm:$0xf]
    %v2722 = vld [vmem:[%s5 + $0x1f4] sm:$0xf]
    %v2723 = vld [vmem:[%s5 + $0x1f8] sm:$0xf]
    %v2724 = vld [vmem:[%s5 + $0x1fc] sm:$0xf]
    %v2725 = vld [vmem:[%s5 + $0x200] sm:$0xf]
    %v2726 = vld [vmem:[%s5 + $0x204] sm:$0xf]
    %v2727 = vld [vmem:[%s5 + $0x208] sm:$0xf]
    %v2728 = vld [vmem:[%s5 + $0x20c] sm:$0xf]
    %v2729 = vld [vmem:[%s5 + $0x210] sm:$0xf]
    %v2730 = vld [vmem:[%s5 + $0x214] sm:$0xf]
    %v2731 = vld [vmem:[%s5 + $0x218] sm:$0xf]
    %v2732 = vld [vmem:[%s5 + $0x21c] sm:$0xf]
    %v2733 = vld [vmem:[%s5 + $0x220] sm:$0xf]
    %v2734 = vld [vmem:[%s5 + $0x224] sm:$0xf]
    %v2735 = vld [vmem:[%s5 + $0x228] sm:$0xf]
    %v2736 = vld [vmem:[%s5 + $0x22c] sm:$0xf]
    %v2737 = vld [vmem:[%s5 + $0x230] sm:$0xf]
    %v2738 = vld [vmem:[%s5 + $0x234] sm:$0xf]
    %v2739 = vld [vmem:[%s5 + $0x238] sm:$0xf]
    %v2740 = vld [vmem:[%s5 + $0x23c] sm:$0xf]
    %v2741 = vld [vmem:[%s5 + $0x240] sm:$0xf]
    %v2742 = vld [vmem:[%s5 + $0x244] sm:$0xf]
    %v2743 = vld [vmem:[%s5 + $0x248] sm:$0xf]
    %v2744 = vld [vmem:[%s5 + $0x24c] sm:$0xf]
    %v2745 = vld [vmem:[%s5 + $0x250] sm:$0xf]
    %v2746 = vld [vmem:[%s5 + $0x254] sm:$0xf]
    %v2747 = vld [vmem:[%s5 + $0x258] sm:$0xf]
    %v2748 = vld [vmem:[%s5 + $0x25c] sm:$0xf]
    %v2749 = vld [vmem:[%s5 + $0x260] sm:$0xf]
    %v2750 = vld [vmem:[%s5 + $0x264] sm:$0xf]
    %v2751 = vld [vmem:[%s5 + $0x268] sm:$0xf]
    %v2752 = vld [vmem:[%s5 + $0x26c] sm:$0xf]
    %v2753 = vld [vmem:[%s5 + $0x270] sm:$0xf]
    %v2754 = vld [vmem:[%s5 + $0x274] sm:$0xf]
    %v2755 = vld [vmem:[%s5 + $0x278] sm:$0xf]
    %v2756 = vld [vmem:[%s5 + $0x27c] sm:$0xf]
    %v2757 = vld [vmem:[%s5 + $0x280] sm:$0xf]
    %v2758 = vld [vmem:[%s5 + $0x284] sm:$0xf]
    %v2759 = vld [vmem:[%s5 + $0x288] sm:$0xf]
    %v2760 = vld [vmem:[%s5 + $0x28c] sm:$0xf]
    %v2761 = vld [vmem:[%s5 + $0x290] sm:$0xf]
    %v2762 = vld [vmem:[%s5 + $0x294] sm:$0xf]
    %v2763 = vld [vmem:[%s5 + $0x298] sm:$0xf]
    %v2764 = vld [vmem:[%s5 + $0x29c] sm:$0xf]
    %v2765 = vunpack.c.l.bf16 %v2597
    %v2766 = vunpack.c.l.bf16 %v2598
    %v2767 = vunpack.c.l.bf16 %v2599
    %v2768 = vunpack.c.l.bf16 %v2600
    %v2769 = vunpack.c.l.bf16 %v2601
    %v2770 = vunpack.c.l.bf16 %v2602
    %v2771 = vunpack.c.l.bf16 %v2603
    %v2772 = vunpack.c.l.bf16 %v2604
    %v2773 = vunpack.c.l.bf16 %v2605
    %v2774 = vunpack.c.l.bf16 %v2606
    %v2775 = vunpack.c.l.bf16 %v2607
    %v2776 = vunpack.c.l.bf16 %v2608
    %v2777 = vunpack.c.l.bf16 %v2609
    %v2778 = vunpack.c.l.bf16 %v2610
    %v2779 = vunpack.c.l.bf16 %v2611
    %v2780 = vunpack.c.l.bf16 %v2612
    %v2781 = vunpack.c.l.bf16 %v2613
    %v2782 = vunpack.c.l.bf16 %v2614
    %v2783 = vunpack.c.l.bf16 %v2615
    %v2784 = vunpack.c.l.bf16 %v2616
    %v2785 = vunpack.c.l.bf16 %v2617
    %v2786 = vunpack.c.l.bf16 %v2618
    %v2787 = vunpack.c.l.bf16 %v2619
    %v2788 = vunpack.c.l.bf16 %v2620
    %v2789 = vunpack.c.l.bf16 %v2621
    %v2790 = vunpack.c.l.bf16 %v2622
    %v2791 = vunpack.c.l.bf16 %v2623
    %v2792 = vunpack.c.l.bf16 %v2624
    %v2793 = vunpack.c.l.bf16 %v2625
    %v2794 = vunpack.c.l.bf16 %v2626
    %v2795 = vunpack.c.l.bf16 %v2627
    %v2796 = vunpack.c.l.bf16 %v2628
    %v2797 = vunpack.c.l.bf16 %v2629
    %v2798 = vunpack.c.l.bf16 %v2630
    %v2799 = vunpack.c.l.bf16 %v2631
    %v2800 = vunpack.c.l.bf16 %v2632
    %v2801 = vunpack.c.l.bf16 %v2633
    %v2802 = vunpack.c.l.bf16 %v2634
    %v2803 = vunpack.c.l.bf16 %v2635
    %v2804 = vunpack.c.l.bf16 %v2636
    %v2805 = vunpack.c.l.bf16 %v2637
    %v2806 = vunpack.c.l.bf16 %v2638
    %v2807 = vunpack.c.l.bf16 %v2639
    %v2808 = vunpack.c.l.bf16 %v2640
    %v2809 = vunpack.c.l.bf16 %v2641
    %v2810 = vunpack.c.l.bf16 %v2642
    %v2811 = vunpack.c.l.bf16 %v2643
    %v2812 = vunpack.c.l.bf16 %v2644
    %v2813 = vunpack.c.l.bf16 %v2645
    %v2814 = vunpack.c.l.bf16 %v2646
    %v2815 = vunpack.c.l.bf16 %v2647
    %v2816 = vunpack.c.l.bf16 %v2648
    %v2817 = vunpack.c.l.bf16 %v2649
    %v2818 = vunpack.c.l.bf16 %v2650
    %v2819 = vunpack.c.l.bf16 %v2651
    %v2820 = vunpack.c.l.bf16 %v2652
    %v2821 = vunpack.c.l.bf16 %v2653
    %v2822 = vunpack.c.l.bf16 %v2654
    %v2823 = vunpack.c.l.bf16 %v2655
    %v2824 = vunpack.c.l.bf16 %v2656
    %v2825 = vunpack.c.l.bf16 %v2657
    %v2826 = vunpack.c.l.bf16 %v2658
    %v2827 = vunpack.c.l.bf16 %v2659
    %v2828 = vunpack.c.l.bf16 %v2660
    %v2829 = vunpack.c.l.bf16 %v2661
    %v2830 = vunpack.c.l.bf16 %v2662
    %v2831 = vunpack.c.l.bf16 %v2663
    %v2832 = vunpack.c.l.bf16 %v2664
    %v2833 = vunpack.c.l.bf16 %v2665
    %v2834 = vunpack.c.l.bf16 %v2666
    %v2835 = vunpack.c.l.bf16 %v2667
    %v2836 = vunpack.c.l.bf16 %v2668
    %v2837 = vunpack.c.l.bf16 %v2669
    %v2838 = vunpack.c.l.bf16 %v2670
    %v2839 = vunpack.c.l.bf16 %v2671
    %v2840 = vunpack.c.l.bf16 %v2672
    %v2841 = vunpack.c.l.bf16 %v2673
    %v2842 = vunpack.c.l.bf16 %v2674
    %v2843 = vunpack.c.l.bf16 %v2675
    %v2844 = vunpack.c.l.bf16 %v2676
    %v2845 = vunpack.c.l.bf16 %v2677
    %v2846 = vunpack.c.l.bf16 %v2678
    %v2847 = vunpack.c.l.bf16 %v2679
    %v2848 = vunpack.c.l.bf16 %v2680
    %v2849 = vunpack.c.l.bf16 %v2681
    %v2850 = vunpack.c.l.bf16 %v2682
    %v2851 = vunpack.c.l.bf16 %v2683
    %v2852 = vunpack.c.l.bf16 %v2684
    %v2853 = vunpack.c.l.bf16 %v2685
    %v2854 = vunpack.c.l.bf16 %v2686
    %v2855 = vunpack.c.l.bf16 %v2687
    %v2856 = vunpack.c.l.bf16 %v2688
    %v2857 = vunpack.c.l.bf16 %v2689
    %v2858 = vunpack.c.l.bf16 %v2690
    %v2859 = vunpack.c.l.bf16 %v2691
    %v2860 = vunpack.c.l.bf16 %v2692
    %v2861 = vunpack.c.l.bf16 %v2693
    %v2862 = vunpack.c.l.bf16 %v2694
    %v2863 = vunpack.c.l.bf16 %v2695
    %v2864 = vunpack.c.l.bf16 %v2696
    %v2865 = vunpack.c.l.bf16 %v2697
    %v2866 = vunpack.c.l.bf16 %v2698
    %v2867 = vunpack.c.l.bf16 %v2699
    %v2868 = vunpack.c.l.bf16 %v2700
    %v2869 = vunpack.c.l.bf16 %v2701
    %v2870 = vunpack.c.l.bf16 %v2702
    %v2871 = vunpack.c.l.bf16 %v2703
    %v2872 = vunpack.c.l.bf16 %v2704
    %v2873 = vunpack.c.l.bf16 %v2705
    %v2874 = vunpack.c.l.bf16 %v2706
    %v2875 = vunpack.c.l.bf16 %v2707
    %v2876 = vunpack.c.l.bf16 %v2708
    %v2877 = vunpack.c.l.bf16 %v2709
    %v2878 = vunpack.c.l.bf16 %v2710
    %v2879 = vunpack.c.l.bf16 %v2711
    %v2880 = vunpack.c.l.bf16 %v2712
    %v2881 = vunpack.c.l.bf16 %v2713
    %v2882 = vunpack.c.l.bf16 %v2714
    %v2883 = vunpack.c.l.bf16 %v2715
    %v2884 = vunpack.c.l.bf16 %v2716
    %v2885 = vunpack.c.l.bf16 %v2717
    %v2886 = vunpack.c.l.bf16 %v2718
    %v2887 = vunpack.c.l.bf16 %v2719
    %v2888 = vunpack.c.l.bf16 %v2720
    %v2889 = vunpack.c.l.bf16 %v2721
    %v2890 = vunpack.c.l.bf16 %v2722
    %v2891 = vunpack.c.l.bf16 %v2723
    %v2892 = vunpack.c.l.bf16 %v2724
    %v2893 = vunpack.c.l.bf16 %v2725
    %v2894 = vunpack.c.l.bf16 %v2726
    %v2895 = vunpack.c.l.bf16 %v2727
    %v2896 = vunpack.c.l.bf16 %v2728
    %v2897 = vunpack.c.l.bf16 %v2729
    %v2898 = vunpack.c.l.bf16 %v2730
    %v2899 = vunpack.c.l.bf16 %v2731
    %v2900 = vunpack.c.l.bf16 %v2732
    %v2901 = vunpack.c.l.bf16 %v2733
    %v2902 = vunpack.c.l.bf16 %v2734
    %v2903 = vunpack.c.l.bf16 %v2735
    %v2904 = vunpack.c.l.bf16 %v2736
    %v2905 = vunpack.c.l.bf16 %v2737
    %v2906 = vunpack.c.l.bf16 %v2738
    %v2907 = vunpack.c.l.bf16 %v2739
    %v2908 = vunpack.c.l.bf16 %v2740
    %v2909 = vunpack.c.l.bf16 %v2741
    %v2910 = vunpack.c.l.bf16 %v2742
    %v2911 = vunpack.c.l.bf16 %v2743
    %v2912 = vunpack.c.l.bf16 %v2744
    %v2913 = vunpack.c.l.bf16 %v2745
    %v2914 = vunpack.c.l.bf16 %v2746
    %v2915 = vunpack.c.l.bf16 %v2747
    %v2916 = vunpack.c.l.bf16 %v2748
    %v2917 = vunpack.c.l.bf16 %v2749
    %v2918 = vunpack.c.l.bf16 %v2750
    %v2919 = vunpack.c.l.bf16 %v2751
    %v2920 = vunpack.c.l.bf16 %v2752
    %v2921 = vunpack.c.l.bf16 %v2753
    %v2922 = vunpack.c.l.bf16 %v2754
    %v2923 = vunpack.c.l.bf16 %v2755
    %v2924 = vunpack.c.l.bf16 %v2756
    %v2925 = vunpack.c.l.bf16 %v2757
    %v2926 = vunpack.c.l.bf16 %v2758
    %v2927 = vunpack.c.l.bf16 %v2759
    %v2928 = vunpack.c.l.bf16 %v2760
    %v2929 = vunpack.c.l.bf16 %v2761
    %v2930 = vunpack.c.l.bf16 %v2762
    %v2931 = vunpack.c.l.bf16 %v2763
    %v2932 = vunpack.c.l.bf16 %v2764
    %v2933 = vld [vmem:[%s6] sm:$0x1]
    %v2935 = vlaneseq
    %v2936 = vshrl.u32 %v2935, 7
    %v2937 = vsub.s32 0, %v2936
    %v2938 = vrot.slane %v2933, %v2937
    %v2943 = vcombine.high %v2594, %v2594
    %v2945 = vunpack.c.l.s4 1983009808
    %v2946 = vunpack.c.0.s8 %v2945
    %v2947 = vlaneseq
    %v2948 = vshrl.u32 %v2947, 7
    %v2949 = vsub.s32 %v2946, %v2948
    %v2950 = vrot.slane %v2594, %v2949
    %v2952 = vunpack.c.l.s4 1983009808
    %v2953 = vunpack.c.0.s8 %v2952
    %v2954 = vlaneseq
    %v2955 = vshrl.u32 %v2954, 7
    %v2956 = vsub.s32 %v2953, %v2955
    %v2957 = vrot.slane %v2943, %v2956
    %v2958 = vcombine.high %v2950, %v2950
    %v2959 = vcombine.high %v2957, %v2957
    %v2960 = vcombine.high %v2595, %v2595
    %v2962 = vunpack.c.l.s4 1983009808
    %v2963 = vunpack.c.0.s8 %v2962
    %v2964 = vlaneseq
    %v2965 = vshrl.u32 %v2964, 7
    %v2966 = vsub.s32 %v2963, %v2965
    %v2967 = vrot.slane %v2595, %v2966
    %v2969 = vunpack.c.l.s4 1983009808
    %v2970 = vunpack.c.0.s8 %v2969
    %v2971 = vlaneseq
    %v2972 = vshrl.u32 %v2971, 7
    %v2973 = vsub.s32 %v2970, %v2972
    %v2974 = vrot.slane %v2960, %v2973
    %v2975 = vcombine.high %v2967, %v2967
    %v2976 = vcombine.high %v2974, %v2974
    %v2977 = vcombine.high %v2596, %v2596
    %v2979 = vunpack.c.l.s4 1983009808
    %v2980 = vunpack.c.0.s8 %v2979
    %v2981 = vlaneseq
    %v2982 = vshrl.u32 %v2981, 7
    %v2983 = vsub.s32 %v2980, %v2982
    %v2984 = vrot.slane %v2596, %v2983
    %v2986 = vunpack.c.l.s4 1983009808
    %v2987 = vunpack.c.0.s8 %v2986
    %v2988 = vlaneseq
    %v2989 = vshrl.u32 %v2988, 7
    %v2990 = vsub.s32 %v2987, %v2989
    %v2991 = vrot.slane %v2977, %v2990
    %v2992 = vcombine.high %v2984, %v2984
    %vm3003 = vcmask 523264
    %v3004 = vsel %vm3003, %v2991, 0
    %3006 = vmatprep.subr.mxu0 0.0
    %3007 = vmatpush1.msra.mxu0 %v2765
    %3008 = vmatprep.subr.mxu0 0.0
    %3009 = vmatpush1.msra.mxu0 %v2766
    %3010 = vmatprep.subr.mxu0 0.0
    %3011 = vmatpush1.msra.mxu0 %v2767
    %3012 = vmatprep.subr.mxu0 0.0
    %3013 = vmatpush1.msra.mxu0 %v2768
    %3014 = vmatprep.subr.mxu0 0.0
    %3015 = vmatpush1.msra.mxu0 %v2769
    %3016 = vmatprep.subr.mxu0 0.0
    %3017 = vmatpush1.msra.mxu0 %v2770
    %3018 = vmatprep.subr.mxu0 0.0
    %3019 = vmatpush1.msra.mxu0 %v2771
    %3020 = vmatprep.subr.mxu0 0.0
    %3021 = vmatpush1.msra.mxu0 %v2772
    %3022 = vmatprep.subr.mxu0 0.0
    %3023 = vmatpush1.msra.mxu0 %v2773
    %3024 = vmatprep.subr.mxu0 0.0
    %3025 = vmatpush1.msra.mxu0 %v2774
    %3026 = vmatprep.subr.mxu0 0.0
    %3027 = vmatpush1.msra.mxu0 %v2775
    %3028 = vmatprep.subr.mxu0 0.0
    %3029 = vmatpush1.msra.mxu0 %v2776
    %3030 = vmatprep.subr.mxu0 0.0
    %3031 = vmatpush1.msra.mxu0 %v2777
    %3032 = vmatprep.subr.mxu0 0.0
    %3033 = vmatpush1.msra.mxu0 %v2778
    %3034 = vmatprep.subr.mxu0 0.0
    %3035 = vmatpush1.msra.mxu0 %v2779
    %3036 = vmatprep.subr.mxu0 0.0
    %3037 = vmatpush1.msra.mxu0 %v2780
    %3038 = vmatprep.subr.mxu0 0.0
    %3039 = vmatpush1.msra.mxu0 %v2781
    %3040 = vmatprep.subr.mxu0 0.0
    %3041 = vmatpush1.msra.mxu0 %v2782
    %3042 = vmatprep.subr.mxu0 0.0
    %3043 = vmatpush1.msra.mxu0 %v2783
    %3044 = vmatprep.subr.mxu0 0.0
    %3045 = vmatpush1.msra.mxu0 %v2784
    %3046 = vmatprep.subr.mxu0 0.0
    %3047 = vmatpush1.msra.mxu0 %v2785
    %3048 = vmatprep.subr.mxu0 0.0
    %3049 = vmatpush1.msra.mxu0 %v2786
    %3050 = vmatprep.subr.mxu0 0.0
    %3051 = vmatpush1.msra.mxu0 %v2787
    %3052 = vmatprep.subr.mxu0 0.0
    %3053 = vmatpush1.msra.mxu0 %v2788
    %3054 = vmatprep.subr.mxu0 0.0
    %3055 = vmatpush1.msra.mxu0 %v2789
    %3056 = vmatprep.subr.mxu0 0.0
    %3057 = vmatpush1.msra.mxu0 %v2790
    %3058 = vmatprep.subr.mxu0 0.0
    %3059 = vmatpush1.msra.mxu0 %v2791
    %3060 = vmatprep.subr.mxu0 0.0
    %3061 = vmatpush1.msra.mxu0 %v2792
    %3062 = vmatprep.subr.mxu0 0.0
    %3063 = vmatpush1.msra.mxu0 %v2793
    %3064 = vmatprep.subr.mxu0 0.0
    %3065 = vmatpush1.msra.mxu0 %v2794
    %3066 = vmatprep.subr.mxu0 0.0
    %3067 = vmatpush1.msra.mxu0 %v2795
    %3068 = vmatprep.subr.mxu0 0.0
    %3069 = vmatpush1.msra.mxu0 %v2796
    %3070 = vmatprep.mubr.f32.mxu0 %v2958
    %3071 = vmatmul.mubr.f32.gmra.mrb[0].mxu0 %v2950
    %v3072 = vpop.f32.mrb[0].mxu0
    %v3073 = vadd.f32 %v2938, %v3072
    %v3074 = vpop.f32.mrb[0].mxu0
    %3075 = vdwg.mxu0
    %3076 = vmatprep.subr.mxu0 0.0
    %3077 = vmatpush1.msra.mxu0 %v2797
    %3078 = vmatprep.subr.mxu0 0.0
    %3079 = vmatpush1.msra.mxu0 %v2798
    %3080 = vmatprep.subr.mxu0 0.0
    %3081 = vmatpush1.msra.mxu0 %v2799
    %3082 = vmatprep.subr.mxu0 0.0
    %3083 = vmatpush1.msra.mxu0 %v2800
    %3084 = vmatprep.subr.mxu0 0.0
    %3085 = vmatpush1.msra.mxu0 %v2801
    %3086 = vmatprep.subr.mxu0 0.0
    %3087 = vmatpush1.msra.mxu0 %v2802
    %3088 = vmatprep.subr.mxu0 0.0
    %3089 = vmatpush1.msra.mxu0 %v2803
    %3090 = vmatprep.subr.mxu0 0.0
    %3091 = vmatpush1.msra.mxu0 %v2804
    %3092 = vmatprep.subr.mxu0 0.0
    %3093 = vmatpush1.msra.mxu0 %v2805
    %3094 = vmatprep.subr.mxu0 0.0
    %3095 = vmatpush1.msra.mxu0 %v2806
    %3096 = vmatprep.subr.mxu0 0.0
    %3097 = vmatpush1.msra.mxu0 %v2807
    %3098 = vmatprep.subr.mxu0 0.0
    %3099 = vmatpush1.msra.mxu0 %v2808
    %3100 = vmatprep.subr.mxu0 0.0
    %3101 = vmatpush1.msra.mxu0 %v2809
    %3102 = vmatprep.subr.mxu0 0.0
    %3103 = vmatpush1.msra.mxu0 %v2810
    %3104 = vmatprep.subr.mxu0 0.0
    %3105 = vmatpush1.msra.mxu0 %v2811
    %3106 = vmatprep.subr.mxu0 0.0
    %3107 = vmatpush1.msra.mxu0 %v2812
    %3108 = vmatprep.subr.mxu0 0.0
    %3109 = vmatpush1.msra.mxu0 %v2813
    %3110 = vmatprep.subr.mxu0 0.0
    %3111 = vmatpush1.msra.mxu0 %v2814
    %3112 = vmatprep.subr.mxu0 0.0
    %3113 = vmatpush1.msra.mxu0 %v2815
    %3114 = vmatprep.subr.mxu0 0.0
    %3115 = vmatpush1.msra.mxu0 %v2816
    %3116 = vmatprep.subr.mxu0 0.0
    %3117 = vmatpush1.msra.mxu0 %v2817
    %3118 = vmatprep.subr.mxu0 0.0
    %3119 = vmatpush1.msra.mxu0 %v2818
    %3120 = vmatprep.subr.mxu0 0.0
    %3121 = vmatpush1.msra.mxu0 %v2819
    %3122 = vmatprep.subr.mxu0 0.0
    %3123 = vmatpush1.msra.mxu0 %v2820
    %3124 = vmatprep.subr.mxu0 0.0
    %3125 = vmatpush1.msra.mxu0 %v2821
    %3126 = vmatprep.subr.mxu0 0.0
    %3127 = vmatpush1.msra.mxu0 %v2822
    %3128 = vmatprep.subr.mxu0 0.0
    %3129 = vmatpush1.msra.mxu0 %v2823
    %3130 = vmatprep.subr.mxu0 0.0
    %3131 = vmatpush1.msra.mxu0 %v2824
    %3132 = vmatprep.subr.mxu0 0.0
    %3133 = vmatpush1.msra.mxu0 %v2825
    %3134 = vmatprep.subr.mxu0 0.0
    %3135 = vmatpush1.msra.mxu0 %v2826
    %3136 = vmatprep.subr.mxu0 0.0
    %3137 = vmatpush1.msra.mxu0 %v2827
    %3138 = vmatprep.subr.mxu0 0.0
    %3139 = vmatpush1.msra.mxu0 %v2828
    %3140 = vmatprep.mubr.f32.mxu0 %v2959
    %3141 = vmatmul.mubr.f32.gmra.mrb[0].mxu0 %v2957
    %v3142 = vpop.f32.mrb[0].mxu0
    %v3143 = vadd.f32 %v3073, %v3142
    %v3144 = vpop.f32.mrb[0].mxu0
    %3145 = vdwg.mxu0
    %3146 = vmatprep.subr.mxu0 0.0
    %3147 = vmatpush1.msra.mxu0 %v2829
    %3148 = vmatprep.subr.mxu0 0.0
    %3149 = vmatpush1.msra.mxu0 %v2830
    %3150 = vmatprep.subr.mxu0 0.0
    %3151 = vmatpush1.msra.mxu0 %v2831
    %3152 = vmatprep.subr.mxu0 0.0
    %3153 = vmatpush1.msra.mxu0 %v2832
    %3154 = vmatprep.subr.mxu0 0.0
    %3155 = vmatpush1.msra.mxu0 %v2833
    %3156 = vmatprep.subr.mxu0 0.0
    %3157 = vmatpush1.msra.mxu0 %v2834
    %3158 = vmatprep.subr.mxu0 0.0
    %3159 = vmatpush1.msra.mxu0 %v2835
    %3160 = vmatprep.subr.mxu0 0.0
    %3161 = vmatpush1.msra.mxu0 %v2836
    %3162 = vmatprep.subr.mxu0 0.0
    %3163 = vmatpush1.msra.mxu0 %v2837
    %3164 = vmatprep.subr.mxu0 0.0
    %3165 = vmatpush1.msra.mxu0 %v2838
    %3166 = vmatprep.subr.mxu0 0.0
    %3167 = vmatpush1.msra.mxu0 %v2839
    %3168 = vmatprep.subr.mxu0 0.0
    %3169 = vmatpush1.msra.mxu0 %v2840
    %3170 = vmatprep.subr.mxu0 0.0
    %3171 = vmatpush1.msra.mxu0 %v2841
    %3172 = vmatprep.subr.mxu0 0.0
    %3173 = vmatpush1.msra.mxu0 %v2842
    %3174 = vmatprep.subr.mxu0 0.0
    %3175 = vmatpush1.msra.mxu0 %v2843
    %3176 = vmatprep.subr.mxu0 0.0
    %3177 = vmatpush1.msra.mxu0 %v2844
    %3178 = vmatprep.subr.mxu0 0.0
    %3179 = vmatpush1.msra.mxu0 %v2845
    %3180 = vmatprep.subr.mxu0 0.0
    %3181 = vmatpush1.msra.mxu0 %v2846
    %3182 = vmatprep.subr.mxu0 0.0
    %3183 = vmatpush1.msra.mxu0 %v2847
    %3184 = vmatprep.subr.mxu0 0.0
    %3185 = vmatpush1.msra.mxu0 %v2848
    %3186 = vmatprep.subr.mxu0 0.0
    %3187 = vmatpush1.msra.mxu0 %v2849
    %3188 = vmatprep.subr.mxu0 0.0
    %3189 = vmatpush1.msra.mxu0 %v2850
    %3190 = vmatprep.subr.mxu0 0.0
    %3191 = vmatpush1.msra.mxu0 %v2851
    %3192 = vmatprep.subr.mxu0 0.0
    %3193 = vmatpush1.msra.mxu0 %v2852
    %3194 = vmatprep.subr.mxu0 0.0
    %3195 = vmatpush1.msra.mxu0 %v2853
    %3196 = vmatprep.subr.mxu0 0.0
    %3197 = vmatpush1.msra.mxu0 %v2854
    %3198 = vmatprep.subr.mxu0 0.0
    %3199 = vmatpush1.msra.mxu0 %v2855
    %3200 = vmatprep.subr.mxu0 0.0
    %3201 = vmatpush1.msra.mxu0 %v2856
    %3202 = vmatprep.subr.mxu0 0.0
    %3203 = vmatpush1.msra.mxu0 %v2857
    %3204 = vmatprep.subr.mxu0 0.0
    %3205 = vmatpush1.msra.mxu0 %v2858
    %3206 = vmatprep.subr.mxu0 0.0
    %3207 = vmatpush1.msra.mxu0 %v2859
    %3208 = vmatprep.subr.mxu0 0.0
    %3209 = vmatpush1.msra.mxu0 %v2860
    %3210 = vmatprep.mubr.f32.mxu0 %v2975
    %3211 = vmatmul.mubr.f32.gmra.mrb[0].mxu0 %v2967
    %v3212 = vpop.f32.mrb[0].mxu0
    %v3213 = vadd.f32 %v3143, %v3212
    %v3214 = vpop.f32.mrb[0].mxu0
    %3215 = vdwg.mxu0
    %3216 = vmatprep.subr.mxu0 0.0
    %3217 = vmatpush1.msra.mxu0 %v2861
    %3218 = vmatprep.subr.mxu0 0.0
    %3219 = vmatpush1.msra.mxu0 %v2862
    %3220 = vmatprep.subr.mxu0 0.0
    %3221 = vmatpush1.msra.mxu0 %v2863
    %3222 = vmatprep.subr.mxu0 0.0
    %3223 = vmatpush1.msra.mxu0 %v2864
    %3224 = vmatprep.subr.mxu0 0.0
    %3225 = vmatpush1.msra.mxu0 %v2865
    %3226 = vmatprep.subr.mxu0 0.0
    %3227 = vmatpush1.msra.mxu0 %v2866
    %3228 = vmatprep.subr.mxu0 0.0
    %3229 = vmatpush1.msra.mxu0 %v2867
    %3230 = vmatprep.subr.mxu0 0.0
    %3231 = vmatpush1.msra.mxu0 %v2868
    %3232 = vmatprep.subr.mxu0 0.0
    %3233 = vmatpush1.msra.mxu0 %v2869
    %3234 = vmatprep.subr.mxu0 0.0
    %3235 = vmatpush1.msra.mxu0 %v2870
    %3236 = vmatprep.subr.mxu0 0.0
    %3237 = vmatpush1.msra.mxu0 %v2871
    %3238 = vmatprep.subr.mxu0 0.0
    %3239 = vmatpush1.msra.mxu0 %v2872
    %3240 = vmatprep.subr.mxu0 0.0
    %3241 = vmatpush1.msra.mxu0 %v2873
    %3242 = vmatprep.subr.mxu0 0.0
    %3243 = vmatpush1.msra.mxu0 %v2874
    %3244 = vmatprep.subr.mxu0 0.0
    %3245 = vmatpush1.msra.mxu0 %v2875
    %3246 = vmatprep.subr.mxu0 0.0
    %3247 = vmatpush1.msra.mxu0 %v2876
    %3248 = vmatprep.subr.mxu0 0.0
    %3249 = vmatpush1.msra.mxu0 %v2877
    %3250 = vmatprep.subr.mxu0 0.0
    %3251 = vmatpush1.msra.mxu0 %v2878
    %3252 = vmatprep.subr.mxu0 0.0
    %3253 = vmatpush1.msra.mxu0 %v2879
    %3254 = vmatprep.subr.mxu0 0.0
    %3255 = vmatpush1.msra.mxu0 %v2880
    %3256 = vmatprep.subr.mxu0 0.0
    %3257 = vmatpush1.msra.mxu0 %v2881
    %3258 = vmatprep.subr.mxu0 0.0
    %3259 = vmatpush1.msra.mxu0 %v2882
    %3260 = vmatprep.subr.mxu0 0.0
    %3261 = vmatpush1.msra.mxu0 %v2883
    %3262 = vmatprep.subr.mxu0 0.0
    %3263 = vmatpush1.msra.mxu0 %v2884
    %3264 = vmatprep.subr.mxu0 0.0
    %3265 = vmatpush1.msra.mxu0 %v2885
    %3266 = vmatprep.subr.mxu0 0.0
    %3267 = vmatpush1.msra.mxu0 %v2886
    %3268 = vmatprep.subr.mxu0 0.0
    %3269 = vmatpush1.msra.mxu0 %v2887
    %3270 = vmatprep.subr.mxu0 0.0
    %3271 = vmatpush1.msra.mxu0 %v2888
    %3272 = vmatprep.subr.mxu0 0.0
    %3273 = vmatpush1.msra.mxu0 %v2889
    %3274 = vmatprep.subr.mxu0 0.0
    %3275 = vmatpush1.msra.mxu0 %v2890
    %3276 = vmatprep.subr.mxu0 0.0
    %3277 = vmatpush1.msra.mxu0 %v2891
    %3278 = vmatprep.subr.mxu0 0.0
    %3279 = vmatpush1.msra.mxu0 %v2892
    %3280 = vmatprep.mubr.f32.mxu0 %v2976
    %3281 = vmatmul.mubr.f32.gmra.mrb[0].mxu0 %v2974
    %v3282 = vpop.f32.mrb[0].mxu0
    %v3283 = vadd.f32 %v3213, %v3282
    %v3284 = vpop.f32.mrb[0].mxu0
    %3285 = vdwg.mxu0
    %3286 = vmatprep.subr.mxu0 0.0
    %3287 = vmatpush1.msra.mxu0 %v2893
    %3288 = vmatprep.subr.mxu0 0.0
    %3289 = vmatpush1.msra.mxu0 %v2894
    %3290 = vmatprep.subr.mxu0 0.0
    %3291 = vmatpush1.msra.mxu0 %v2895
    %3292 = vmatprep.subr.mxu0 0.0
    %3293 = vmatpush1.msra.mxu0 %v2896
    %3294 = vmatprep.subr.mxu0 0.0
    %3295 = vmatpush1.msra.mxu0 %v2897
    %3296 = vmatprep.subr.mxu0 0.0
    %3297 = vmatpush1.msra.mxu0 %v2898
    %3298 = vmatprep.subr.mxu0 0.0
    %3299 = vmatpush1.msra.mxu0 %v2899
    %3300 = vmatprep.subr.mxu0 0.0
    %3301 = vmatpush1.msra.mxu0 %v2900
    %3302 = vmatprep.subr.mxu0 0.0
    %3303 = vmatpush1.msra.mxu0 %v2901
    %3304 = vmatprep.subr.mxu0 0.0
    %3305 = vmatpush1.msra.mxu0 %v2902
    %3306 = vmatprep.subr.mxu0 0.0
    %3307 = vmatpush1.msra.mxu0 %v2903
    %3308 = vmatprep.subr.mxu0 0.0
    %3309 = vmatpush1.msra.mxu0 %v2904
    %3310 = vmatprep.subr.mxu0 0.0
    %3311 = vmatpush1.msra.mxu0 %v2905
    %3312 = vmatprep.subr.mxu0 0.0
    %3313 = vmatpush1.msra.mxu0 %v2906
    %3314 = vmatprep.subr.mxu0 0.0
    %3315 = vmatpush1.msra.mxu0 %v2907
    %3316 = vmatprep.subr.mxu0 0.0
    %3317 = vmatpush1.msra.mxu0 %v2908
    %3318 = vmatprep.subr.mxu0 0.0
    %3319 = vmatpush1.msra.mxu0 %v2909
    %3320 = vmatprep.subr.mxu0 0.0
    %3321 = vmatpush1.msra.mxu0 %v2910
    %3322 = vmatprep.subr.mxu0 0.0
    %3323 = vmatpush1.msra.mxu0 %v2911
    %3324 = vmatprep.subr.mxu0 0.0
    %3325 = vmatpush1.msra.mxu0 %v2912
    %3326 = vmatprep.subr.mxu0 0.0
    %3327 = vmatpush1.msra.mxu0 %v2913
    %3328 = vmatprep.subr.mxu0 0.0
    %3329 = vmatpush1.msra.mxu0 %v2914
    %3330 = vmatprep.subr.mxu0 0.0
    %3331 = vmatpush1.msra.mxu0 %v2915
    %3332 = vmatprep.subr.mxu0 0.0
    %3333 = vmatpush1.msra.mxu0 %v2916
    %3334 = vmatprep.subr.mxu0 0.0
    %3335 = vmatpush1.msra.mxu0 %v2917
    %3336 = vmatprep.subr.mxu0 0.0
    %3337 = vmatpush1.msra.mxu0 %v2918
    %3338 = vmatprep.subr.mxu0 0.0
    %3339 = vmatpush1.msra.mxu0 %v2919
    %3340 = vmatprep.subr.mxu0 0.0
    %3341 = vmatpush1.msra.mxu0 %v2920
    %3342 = vmatprep.subr.mxu0 0.0
    %3343 = vmatpush1.msra.mxu0 %v2921
    %3344 = vmatprep.subr.mxu0 0.0
    %3345 = vmatpush1.msra.mxu0 %v2922
    %3346 = vmatprep.subr.mxu0 0.0
    %3347 = vmatpush1.msra.mxu0 %v2923
    %3348 = vmatprep.subr.mxu0 0.0
    %3349 = vmatpush1.msra.mxu0 %v2924
    %3350 = vmatprep.mubr.f32.mxu0 %v2992
    %3351 = vmatmul.mubr.f32.gmra.mrb[0].mxu0 %v2984
    %v3352 = vpop.f32.mrb[0].mxu0
    %v3353 = vadd.f32 %v3283, %v3352
    %v3354 = vpop.f32.mrb[0].mxu0
    %3355 = vdwg.mxu0
    %3356 = vmatprep.subr.mxu0 0.0
    %3357 = vmatpush1.msra.mxu0 %v2925
    %3358 = vmatprep.subr.mxu0 0.0
    %3359 = vmatpush1.msra.mxu0 %v2926
    %3360 = vmatprep.subr.mxu0 0.0
    %3361 = vmatpush1.msra.mxu0 %v2927
    %3362 = vmatprep.subr.mxu0 0.0
    %3363 = vmatpush1.msra.mxu0 %v2928
    %3364 = vmatprep.subr.mxu0 0.0
    %3365 = vmatpush1.msra.mxu0 %v2929
    %3366 = vmatprep.subr.mxu0 0.0
    %3367 = vmatpush1.msra.mxu0 %v2930
    %3368 = vmatprep.subr.mxu0 0.0
    %3369 = vmatpush1.msra.mxu0 %v2931
    %3370 = vmatprep.subr.mxu0 0.0
    %3371 = vmatpush1.msra.mxu0 %v2932
    %3372 = vmatprep.subr.mxu0 0.0
    %3373 = vmatpush1.msra.mxu0 0.0
    %3374 = vmatprep.subr.mxu0 0.0
    %3375 = vmatpush1.msra.mxu0 0.0
    %3376 = vmatprep.subr.mxu0 0.0
    %3377 = vmatpush1.msra.mxu0 0.0
    %3378 = vmatprep.subr.mxu0 0.0
    %3379 = vmatpush1.msra.mxu0 0.0
    %3380 = vmatprep.subr.mxu0 0.0
    %3381 = vmatpush1.msra.mxu0 0.0
    %3382 = vmatprep.subr.mxu0 0.0
    %3383 = vmatpush1.msra.mxu0 0.0
    %3384 = vmatprep.subr.mxu0 0.0
    %3385 = vmatpush1.msra.mxu0 0.0
    %3386 = vmatprep.subr.mxu0 0.0
    %3387 = vmatpush1.msra.mxu0 0.0
    %3388 = vmatprep.subr.mxu0 0.0
    %3389 = vmatpush1.msra.mxu0 0.0
    %3390 = vmatprep.subr.mxu0 0.0
    %3391 = vmatpush1.msra.mxu0 0.0
    %3392 = vmatprep.subr.mxu0 0.0
    %3393 = vmatpush1.msra.mxu0 0.0
    %3394 = vmatprep.subr.mxu0 0.0
    %3395 = vmatpush1.msra.mxu0 0.0
    %3396 = vmatprep.subr.mxu0 0.0
    %3397 = vmatpush1.msra.mxu0 0.0
    %3398 = vmatprep.subr.mxu0 0.0
    %3399 = vmatpush1.msra.mxu0 0.0
    %3400 = vmatprep.subr.mxu0 0.0
    %3401 = vmatpush1.msra.mxu0 0.0
    %3402 = vmatprep.subr.mxu0 0.0
    %3403 = vmatpush1.msra.mxu0 0.0
    %3404 = vmatprep.subr.mxu0 0.0
    %3405 = vmatpush1.msra.mxu0 0.0
    %3406 = vmatprep.subr.mxu0 0.0
    %3407 = vmatpush1.msra.mxu0 0.0
    %3408 = vmatprep.subr.mxu0 0.0
    %3409 = vmatpush1.msra.mxu0 0.0
    %3410 = vmatprep.subr.mxu0 0.0
    %3411 = vmatpush1.msra.mxu0 0.0
    %3412 = vmatprep.subr.mxu0 0.0
    %3413 = vmatpush1.msra.mxu0 0.0
    %3414 = vmatprep.subr.mxu0 0.0
    %3415 = vmatpush1.msra.mxu0 0.0
    %3416 = vmatprep.subr.mxu0 0.0
    %3417 = vmatpush1.msra.mxu0 0.0
    %3418 = vmatprep.subr.mxu0 0.0
    %3419 = vmatpush1.msra.mxu0 0.0
    %3420 = vmatprep.mubr.f32.mxu0 0.0
    %3421 = vmatmul.mubr.f32.gmra.mrb[0].mxu0 %v3004
    %v3422 = vpop.f32.mrb[0].mxu0
    %v3423 = vadd.f32 %v3353, %v3422
    %v3424 = vpop.f32.mrb[0].mxu0
    %3425 = vdwg.mxu0
    %v3426 = vmax.f32 %v3423, 0.0
    %v3427 = vld [vmem:[%s7] sm:$0xf]
    %v3428 = vld [vmem:[%s7 + $0x4] sm:$0xf]
    %v3429 = vld [vmem:[%s7 + $0x8] sm:$0xf]
    %v3430 = vld [vmem:[%s7 + $0xc] sm:$0xf]
    %v3431 = vld [vmem:[%s7 + $0x10] sm:$0xf]
    %v3432 = vld [vmem:[%s7 + $0x14] sm:$0xf]
    %v3433 = vld [vmem:[%s7 + $0x18] sm:$0xf]
    %v3434 = vld [vmem:[%s7 + $0x1c] sm:$0xf]
    %v3435 = vld [vmem:[%s7 + $0x20] sm:$0xf]
    %v3436 = vld [vmem:[%s7 + $0x24] sm:$0xf]
    %v3437 = vld [vmem:[%s7 + $0x28] sm:$0xf]
    %v3438 = vld [vmem:[%s7 + $0x2c] sm:$0xf]
    %v3439 = vld [vmem:[%s7 + $0x30] sm:$0xf]
    %v3440 = vld [vmem:[%s7 + $0x34] sm:$0xf]
    %v3441 = vld [vmem:[%s7 + $0x38] sm:$0xf]
    %v3442 = vld [vmem:[%s7 + $0x3c] sm:$0xf]
    %v3443 = vunpack.c.l.bf16 %v3427
    %v3444 = vunpack.c.l.bf16 %v3428
    %v3445 = vunpack.c.l.bf16 %v3429
    %v3446 = vunpack.c.l.bf16 %v3430
    %v3447 = vunpack.c.l.bf16 %v3431
    %v3448 = vunpack.c.l.bf16 %v3432
    %v3449 = vunpack.c.l.bf16 %v3433
    %v3450 = vunpack.c.l.bf16 %v3434
    %v3451 = vunpack.c.l.bf16 %v3435
    %v3452 = vunpack.c.l.bf16 %v3436
    %v3453 = vunpack.c.l.bf16 %v3437
    %v3454 = vunpack.c.l.bf16 %v3438
    %v3455 = vunpack.c.l.bf16 %v3439
    %v3456 = vunpack.c.l.bf16 %v3440
    %v3457 = vunpack.c.l.bf16 %v3441
    %v3458 = vunpack.c.l.bf16 %v3442
    %v3459 = vld [vmem:[%s8] sm:$0x1]
    %v3461 = vlaneseq
    %v3462 = vshrl.u32 %v3461, 7
    %v3463 = vsub.s32 0, %v3462
    %v3464 = vrot.slane %v3459, %v3463
    %3466 = vmatprep.subr.mxu0 0.0
    %3467 = vmatpush1.msra.mxu0 %v3443
    %3468 = vmatprep.subr.mxu0 0.0
    %3469 = vmatpush1.msra.mxu0 %v3444
    %3470 = vmatprep.subr.mxu0 0.0
    %3471 = vmatpush1.msra.mxu0 %v3445
    %3472 = vmatprep.subr.mxu0 0.0
    %3473 = vmatpush1.msra.mxu0 %v3446
    %3474 = vmatprep.subr.mxu0 0.0
    %3475 = vmatpush1.msra.mxu0 %v3447
    %3476 = vmatprep.subr.mxu0 0.0
    %3477 = vmatpush1.msra.mxu0 %v3448
    %3478 = vmatprep.subr.mxu0 0.0
    %3479 = vmatpush1.msra.mxu0 %v3449
    %3480 = vmatprep.subr.mxu0 0.0
    %3481 = vmatpush1.msra.mxu0 %v3450
    %3482 = vmatprep.subr.mxu0 0.0
    %3483 = vmatpush1.msra.mxu0 %v3451
    %3484 = vmatprep.subr.mxu0 0.0
    %3485 = vmatpush1.msra.mxu0 %v3452
    %3486 = vmatprep.subr.mxu0 0.0
    %3487 = vmatpush1.msra.mxu0 %v3453
    %3488 = vmatprep.subr.mxu0 0.0
    %3489 = vmatpush1.msra.mxu0 %v3454
    %3490 = vmatprep.subr.mxu0 0.0
    %3491 = vmatpush1.msra.mxu0 %v3455
    %3492 = vmatprep.subr.mxu0 0.0
    %3493 = vmatpush1.msra.mxu0 %v3456
    %3494 = vmatprep.subr.mxu0 0.0
    %3495 = vmatpush1.msra.mxu0 %v3457
    %3496 = vmatprep.subr.mxu0 0.0
    %3497 = vmatpush1.msra.mxu0 %v3458
    %3498 = vmatprep.subr.mxu0 0.0
    %3499 = vmatpush1.msra.mxu0 0.0
    %3500 = vmatprep.subr.mxu0 0.0
    %3501 = vmatpush1.msra.mxu0 0.0
    %3502 = vmatprep.subr.mxu0 0.0
    %3503 = vmatpush1.msra.mxu0 0.0
    %3504 = vmatprep.subr.mxu0 0.0
    %3505 = vmatpush1.msra.mxu0 0.0
    %3506 = vmatprep.subr.mxu0 0.0
    %3507 = vmatpush1.msra.mxu0 0.0
    %3508 = vmatprep.subr.mxu0 0.0
    %3509 = vmatpush1.msra.mxu0 0.0
    %3510 = vmatprep.subr.mxu0 0.0
    %3511 = vmatpush1.msra.mxu0 0.0
    %3512 = vmatprep.subr.mxu0 0.0
    %3513 = vmatpush1.msra.mxu0 0.0
    %3514 = vmatprep.subr.mxu0 0.0
    %3515 = vmatpush1.msra.mxu0 0.0
    %3516 = vmatprep.subr.mxu0 0.0
    %3517 = vmatpush1.msra.mxu0 0.0
    %3518 = vmatprep.subr.mxu0 0.0
    %3519 = vmatpush1.msra.mxu0 0.0
    %3520 = vmatprep.subr.mxu0 0.0
    %3521 = vmatpush1.msra.mxu0 0.0
    %3522 = vmatprep.subr.mxu0 0.0
    %3523 = vmatpush1.msra.mxu0 0.0
    %3524 = vmatprep.subr.mxu0 0.0
    %3525 = vmatpush1.msra.mxu0 0.0
    %3526 = vmatprep.subr.mxu0 0.0
    %3527 = vmatpush1.msra.mxu0 0.0
    %3528 = vmatprep.subr.mxu0 0.0
    %3529 = vmatpush1.msra.mxu0 0.0
    %3530 = vmatprep.mubr.f32.mxu0 0.0
    %3531 = vmatmul.mubr.f32.gmra.mrb[0].mxu0 %v3426
    %v3532 = vpop.f32.mrb[0].mxu0
    %v3533 = vadd.f32 %v3464, %v3532
    %v3534 = vpop.f32.mrb[0].mxu0
    %3535 = vdwg.mxu0
    %v3536 = vmax.f32 %v3533, 0.0
    %v3537 = vld [vmem:[%s9] sm:$0xf]
    %v3538 = vld [vmem:[%s9 + $0x4] sm:$0xf]
    %v3539 = vld [vmem:[%s9 + $0x8] sm:$0xf]
    %v3540 = vld [vmem:[%s9 + $0xc] sm:$0xf]
    %v3541 = vld [vmem:[%s9 + $0x10] sm:$0xf]
    %v3542 = vld [vmem:[%s9 + $0x14] sm:$0xf]
    %v3543 = vld [vmem:[%s9 + $0x18] sm:$0xf]
    %v3544 = vld [vmem:[%s9 + $0x1c] sm:$0xf]
    %v3545 = vld [vmem:[%s9 + $0x20] sm:$0xf]
    %v3546 = vld [vmem:[%s9 + $0x24] sm:$0xf]
    %v3547 = vld [vmem:[%s9 + $0x28] sm:$0xf]
    %v3548 = vld [vmem:[%s9 + $0x2c] sm:$0xf]
    %v3549 = vld [vmem:[%s9 + $0x30] sm:$0xf]
    %v3550 = vld [vmem:[%s9 + $0x34] sm:$0xf]
    %v3551 = vld [vmem:[%s9 + $0x38] sm:$0xf]
    %v3552 = vld [vmem:[%s9 + $0x3c] sm:$0xf]
    %v3553 = vunpack.c.l.bf16 %v3537
    %v3554 = vunpack.c.l.bf16 %v3538
    %v3555 = vunpack.c.l.bf16 %v3539
    %v3556 = vunpack.c.l.bf16 %v3540
    %v3557 = vunpack.c.l.bf16 %v3541
    %v3558 = vunpack.c.l.bf16 %v3542
    %v3559 = vunpack.c.l.bf16 %v3543
    %v3560 = vunpack.c.l.bf16 %v3544
    %v3561 = vunpack.c.l.bf16 %v3545
    %v3562 = vunpack.c.l.bf16 %v3546
    %v3563 = vunpack.c.l.bf16 %v3547
    %v3564 = vunpack.c.l.bf16 %v3548
    %v3565 = vunpack.c.l.bf16 %v3549
    %v3566 = vunpack.c.l.bf16 %v3550
    %v3567 = vunpack.c.l.bf16 %v3551
    %v3568 = vunpack.c.l.bf16 %v3552
    %v3569 = vld [vmem:[%s10] sm:$0x1]
    %v3571 = vlaneseq
    %v3572 = vshrl.u32 %v3571, 7
    %v3573 = vsub.s32 0, %v3572
    %v3574 = vrot.slane %v3569, %v3573
    %3576 = vmatprep.subr.mxu0 0.0
    %3577 = vmatpush1.msra.mxu0 %v3553
    %3578 = vmatprep.subr.mxu0 0.0
    %3579 = vmatpush1.msra.mxu0 %v3554
    %3580 = vmatprep.subr.mxu0 0.0
    %3581 = vmatpush1.msra.mxu0 %v3555
    %3582 = vmatprep.subr.mxu0 0.0
    %3583 = vmatpush1.msra.mxu0 %v3556
    %3584 = vmatprep.subr.mxu0 0.0
    %3585 = vmatpush1.msra.mxu0 %v3557
    %3586 = vmatprep.subr.mxu0 0.0
    %3587 = vmatpush1.msra.mxu0 %v3558
    %3588 = vmatprep.subr.mxu0 0.0
    %3589 = vmatpush1.msra.mxu0 %v3559
    %3590 = vmatprep.subr.mxu0 0.0
    %3591 = vmatpush1.msra.mxu0 %v3560
    %3592 = vmatprep.subr.mxu0 0.0
    %3593 = vmatpush1.msra.mxu0 %v3561
    %3594 = vmatprep.subr.mxu0 0.0
    %3595 = vmatpush1.msra.mxu0 %v3562
    %3596 = vmatprep.subr.mxu0 0.0
    %3597 = vmatpush1.msra.mxu0 %v3563
    %3598 = vmatprep.subr.mxu0 0.0
    %3599 = vmatpush1.msra.mxu0 %v3564
    %3600 = vmatprep.subr.mxu0 0.0
    %3601 = vmatpush1.msra.mxu0 %v3565
    %3602 = vmatprep.subr.mxu0 0.0
    %3603 = vmatpush1.msra.mxu0 %v3566
    %3604 = vmatprep.subr.mxu0 0.0
    %3605 = vmatpush1.msra.mxu0 %v3567
    %3606 = vmatprep.subr.mxu0 0.0
    %3607 = vmatpush1.msra.mxu0 %v3568
    %3608 = vmatprep.subr.mxu0 0.0
    %3609 = vmatpush1.msra.mxu0 0.0
    %3610 = vmatprep.subr.mxu0 0.0
    %3611 = vmatpush1.msra.mxu0 0.0
    %3612 = vmatprep.subr.mxu0 0.0
    %3613 = vmatpush1.msra.mxu0 0.0
    %3614 = vmatprep.subr.mxu0 0.0
    %3615 = vmatpush1.msra.mxu0 0.0
    %3616 = vmatprep.subr.mxu0 0.0
    %3617 = vmatpush1.msra.mxu0 0.0
    %3618 = vmatprep.subr.mxu0 0.0
    %3619 = vmatpush1.msra.mxu0 0.0
    %3620 = vmatprep.subr.mxu0 0.0
    %3621 = vmatpush1.msra.mxu0 0.0
    %3622 = vmatprep.subr.mxu0 0.0
    %3623 = vmatpush1.msra.mxu0 0.0
    %3624 = vmatprep.subr.mxu0 0.0
    %3625 = vmatpush1.msra.mxu0 0.0
    %3626 = vmatprep.subr.mxu0 0.0
    %3627 = vmatpush1.msra.mxu0 0.0
    %3628 = vmatprep.subr.mxu0 0.0
    %3629 = vmatpush1.msra.mxu0 0.0
    %3630 = vmatprep.subr.mxu0 0.0
    %3631 = vmatpush1.msra.mxu0 0.0
    %3632 = vmatprep.subr.mxu0 0.0
    %3633 = vmatpush1.msra.mxu0 0.0
    %3634 = vmatprep.subr.mxu0 0.0
    %3635 = vmatpush1.msra.mxu0 0.0
    %3636 = vmatprep.subr.mxu0 0.0
    %3637 = vmatpush1.msra.mxu0 0.0
    %3638 = vmatprep.subr.mxu0 0.0
    %3639 = vmatpush1.msra.mxu0 0.0
    %3640 = vmatprep.mubr.f32.mxu0 0.0
    %3641 = vmatmul.mubr.f32.gmra.mrb[0].mxu0 %v3536
    %v3642 = vpop.f32.mrb[0].mxu0
    %v3643 = vadd.f32 %v3574, %v3642
    %v3644 = vpop.f32.mrb[0].mxu0
    %3645 = vdwg.mxu0
    %3646 = vst [vmem:[#allocation4] sm:$0x3] %v3643
    // Predicated region
    $region46: #{dqn_forward_pallas.1} parent=1 // pred_check
      _
    $region47: #{dqn_forward_pallas.1} parent=1 // pred_check_branch
      %3648 = sbr.rel (0) target = $region49
    $region48: #{dqn_forward_pallas.1} parent=1 // pred_region
      %s3650 = ssub.s32 32, 32
      %3651 = vsyncadd [#allocation5], %s3650
      %s3653 = sshll.u32 [#allocation4], 4
      %s3654 = int_to_ptr.vmem [resolvable:$true] %s3653
      %3656 = dma.vmem_to_hbm [thread:$0]  %s3654, 32, %s11, [#allocation5]
    $region49: #{dqn_forward_pallas.1} parent=1 // pred_fallthru
      _
    // Predicated region
    $region50: #{dqn_forward_pallas.1} parent=1 // pred_check
      _
    $region51: #{dqn_forward_pallas.1} parent=1 // pred_check_branch
      %3658 = sbr.rel (0) target = $region53
    $region52: #{dqn_forward_pallas.1} parent=1 // pred_region
      %3659 = dma.done [#allocation5], 32
    $region53: #{dqn_forward_pallas.1} parent=1 // pred_fallthru
      _
    %3660 = vsyncpa [#allocation5], 1

</llo_original>
